<compile_context>
chip_gen: v7x
topology: tpu7x:2x2x1
jax: 0.10.0
libtpu: 0.0.40
codegen_flags: <defaults>
</compile_context>

<pallas_src>
import functools

import jax
import jax.numpy as jnp
from jax.experimental import pallas as pl
from jax.experimental.pallas import tpu as pltpu


def _round_up(n, m):
    return -(-n // m) * m


def _cnn_kernel(xe_ref, xo_ref, w1_ref, b1_ref, w2_ref, b2_ref, fcw_ref, fcb_ref,
                out_ref, *, lpp, lp_valid):
    """One batch tile (Bt samples, lpp pooled rows each, flattened to rowsp rows).

    xe_ref/xo_ref: (rowsp, E)   even / odd sequence positions.
    w1_ref: (K1p, C)   conv1 taps stacked on the contraction axis (rows [0:3E)), zero pad.
    w2_ref: (3C, C)    conv2 taps stacked on the contraction axis.
    b1_ref/b2_ref: (1, C) f32.  fcw_ref: (C, NCp).  fcb_ref: (1, NCp) f32.
    out_ref: (Bt, NCp) f32 lane-dense padded logits.
    """
    rowsp, E = xe_ref.shape
    K1p, C = w1_ref.shape
    Bt = rowsp // lpp
    cdt = xe_ref.dtype
    f32 = jnp.float32
    # f32 path: request true f32 MXU passes (TPU default dot precision is bf16-based).
    prec = jax.lax.Precision.HIGHEST if cdt == jnp.float32 else None

    xe = xe_ref[...]
    xo = xo_ref[...]

    # ---- hoisted per-sample masks on the pooled-row index (built once) ------
    t = jax.lax.broadcasted_iota(jnp.int32, (rowsp, 1), 0) % lpp
    first = t == 0              # first pooled row of each sample
    last = t == lpp - 1         # last (padded) pooled row of each sample

    # ---- conv1 (k=3, padding=1) on the even/odd streams ----------------------
    # output position 2t   taps: x[2t-1]=xo[t-1], x[2t]  =xe[t],  x[2t+1]=xo[t]
    # output position 2t+1 taps: x[2t]  =xe[t],   x[2t+1]=xo[t],  x[2t+2]=xe[t+1]
    zeros_e = jnp.zeros((rowsp, E), cdt)
    xo_m1 = jnp.where(first, zeros_e, pltpu.roll(xo, shift=1, axis=0))           # x[2t-1]
    xe_p1 = jnp.where(last, zeros_e, pltpu.roll(xe, shift=rowsp - 1, axis=0))    # x[2t+2]

    pieces_e = [xo_m1, xe, xo]
    pieces_o = [xe, xo, xe_p1]
    npad = K1p - 3 * E
    if npad:
        pad = jnp.zeros((rowsp, npad), cdt)        # zero columns hit zero weight rows
        pieces_e.append(pad)
        pieces_o.append(pad)
    cat_e = jnp.concatenate(pieces_e, axis=1)      # (rowsp, K1p), full lane tiles
    cat_o = jnp.concatenate(pieces_o, axis=1)
    w1 = w1_ref[...]
    h1_e = jnp.dot(cat_e, w1, preferred_element_type=f32, precision=prec)
    h1_o = jnp.dot(cat_o, w1, preferred_element_type=f32, precision=prec)

    # ---- bias + ReLU + MaxPool1d(2), fused: elementwise max of the streams ---
    pooled = jnp.maximum(jnp.maximum(h1_e, h1_o) + b1_ref[...], 0.0)             # f32
    if lp_valid < lpp:
        pooled = jnp.where(t < lp_valid, pooled, 0.0)    # zero the padded pooled rows
    pooled = pooled.astype(cdt)

    # ---- conv2 (k=3, padding=1) on the pooled rows ---------------------------
    zeros_c = jnp.zeros((rowsp, C), cdt)
    p_m1 = jnp.where(first, zeros_c, pltpu.roll(pooled, shift=1, axis=0))
    p_p1 = jnp.where(last, zeros_c, pltpu.roll(pooled, shift=rowsp - 1, axis=0))
    cat2 = jnp.concatenate([p_m1, pooled, p_p1], axis=1)                          # (rowsp, 3C)
    h2 = jnp.dot(cat2, w2_ref[...], preferred_element_type=f32, precision=prec)
    h2 = jnp.maximum(h2 + b2_ref[...], 0.0)
    if lp_valid < lpp:
        h2 = jnp.where(t < lp_valid, h2, 0.0)            # padded rows must not win the max

    # ---- global max over the sequence + Linear (lane-dense padded logits) ----
    g = jnp.max(h2.reshape(Bt, lpp, C), axis=1)                                   # (Bt, C) f32
    logits = jnp.dot(g.astype(cdt), fcw_ref[...],
                     preferred_element_type=f32, precision=prec)
    out_ref[...] = (logits + fcb_ref[...]).astype(out_ref.dtype)


def _choose_bt(B, lpp, pooled_row_bytes, *, vmem_budget=10 << 20, max_pooled_rows=1024):
    """Batch tile Bt for the grid over the batch axis.

    * Bt must divide B and keep the (Bt, NCp) output block sublane aligned
      (Bt % 8 == 0) unless the tile spans the whole batch.
    * Hard cap: the per-step live set (Bt * lpp pooled rows) must fit the VMEM budget.
    * Prefer >= 2 grid steps so v7x can shard the batch across its two TensorCores.
    * Take the largest remaining tile up to ~max_pooled_rows pooled rows (~2048
      full-resolution rows) to amortize the ~0.35us/step grid overhead and fill
      MXU sublanes.
    """
    cands = [bt for bt in range(1, B + 1)
             if B % bt == 0 and (bt % 8 == 0 or bt == B)]
    fits = [bt for bt in cands if bt * lpp * pooled_row_bytes <= vmem_budget]
    if not fits:
        # TODO(synk): very long sequences need an extra sequence-tiling grid axis;
        # fall back to the smallest legal batch tile.
        fits = [min(cands)]
    multi = [bt for bt in fits if B // bt >= 2] or fits
    capped = [bt for bt in multi if bt * lpp <= max_pooled_rows]
    return max(capped) if capped else min(multi)


def cnn_classifier_forward(x, w1, b1, w2, b2, fcw, fcb, *, compute_dtype=jnp.bfloat16):
    """x: (B, L, E).  Weights in PyTorch convention:
       w1 (128, E, 3), b1 (128,), w2 (128, 128, 3), b2 (128,), fcw (NC, 128), fcb (NC,).
       compute_dtype feeds the MXU (bf16 default on all generations — the v5e MXU is
       bf16 native); bias adds, ReLU, pooling and matmul accumulation stay in f32."""
    B, L, E = x.shape
    C = w1.shape[0]
    NC = fcw.shape[0]
    assert w1.shape[1] == E and w2.shape == (C, C, 3) and fcw.shape[1] == C
    cb = jnp.dtype(compute_dtype).itemsize

    NCp = _round_up(max(NC, 1), 128)      # lane-dense padded logits
    L_pad = _round_up(max(L, 2), 16)      # Lpp = L_pad // 2 is a multiple of 8
    Lpp = L_pad // 2
    Lp_valid = L // 2                     # MaxPool1d(2) floor semantics (PyTorch)
    K1p = _round_up(3 * E, 128)           # conv1 folded contraction dim, lane aligned

    # Per-pooled-row live-set estimate (bytes) for the VMEM budget.
    row_bytes = (2 * E * cb * 2           # x_even / x_odd blocks (double buffered)
                 + 2 * K1p * cb           # cat_e + cat_o
                 + 2 * C * 4              # h1_even + h1_odd (f32 dot outputs)
                 + C * cb                 # pooled
                 + 3 * C * cb             # cat2
                 + C * 4)                 # h2 (f32)
    Bt = _choose_bt(B, Lpp, row_bytes)
    rowsp = Bt * Lpp

    # --- wrapper-side re-layout (one-time XLA ops): pad L, deinterleave, flatten ---
    xp = jnp.pad(x, ((0, 0), (0, L_pad - L), (0, 0))).reshape(B, Lpp, 2, E)
    x_even = xp[:, :, 0, :].reshape(B * Lpp, E).astype(compute_dtype)
    x_odd = xp[:, :, 1, :].reshape(B * Lpp, E).astype(compute_dtype)

    # --- weights: conv taps folded along the contraction axis, padded lane-dense ---
    w1_k = jnp.zeros((K1p, C), compute_dtype).at[:3 * E, :].set(
        jnp.transpose(w1, (2, 1, 0)).reshape(3 * E, C).astype(compute_dtype))
    w2_k = jnp.transpose(w2, (2, 1, 0)).reshape(3 * C, C).astype(compute_dtype)
    b1_k = b1.reshape(1, C).astype(jnp.float32)
    b2_k = b2.reshape(1, C).astype(jnp.float32)
    fcw_k = jnp.zeros((C, NCp), compute_dtype).at[:, :NC].set(
        jnp.transpose(fcw).astype(compute_dtype))
    fcb_k = jnp.zeros((1, NCp), jnp.float32).at[:, :NC].set(fcb.astype(jnp.float32))

    kernel = functools.partial(_cnn_kernel, lpp=Lpp, lp_valid=Lp_valid)
    out = pl.pallas_call(
        kernel,
        out_shape=jax.ShapeDtypeStruct((B, NCp), jnp.float32),
        grid_spec=pltpu.PrefetchScalarGridSpec(
            num_scalar_prefetch=0,
            grid=(B // Bt,),
            in_specs=[
                pl.BlockSpec((rowsp, E), lambda b: (b, 0)),     # x_even
                pl.BlockSpec((rowsp, E), lambda b: (b, 0)),     # x_odd
                pl.BlockSpec((K1p, C), lambda b: (0, 0)),       # w1 (folded taps)
                pl.BlockSpec((1, C), lambda b: (0, 0)),         # b1
                pl.BlockSpec((3 * C, C), lambda b: (0, 0)),     # w2 (folded taps)
                pl.BlockSpec((1, C), lambda b: (0, 0)),         # b2
                pl.BlockSpec((C, NCp), lambda b: (0, 0)),       # fc weight (padded)
                pl.BlockSpec((1, NCp), lambda b: (0, 0)),       # fc bias (padded)
            ],
            out_specs=pl.BlockSpec((Bt, NCp), lambda b: (b, 0)),
        ),
        compiler_params=pltpu.CompilerParams(
            dimension_semantics=("parallel",),
            vmem_limit_bytes=32 * 1024 * 1024,
        ),
    )(x_even, x_odd, w1_k, b1_k, w2_k, b2_k, fcw_k, fcb_k)
    return out[:, :NC]


def _reference_forward(x, w1, b1, w2, b2, fcw, fcb):
    """Pure-JAX reference matching the PyTorch forward (f32, HIGHEST precision)."""
    xc = jnp.transpose(x, (0, 2, 1))                           # (B, E, L)  NCL
    dn1 = jax.lax.conv_dimension_numbers(xc.shape, w1.shape, ("NCH", "OIH", "NCH"))
    h1 = jax.lax.conv_general_dilated(xc, w1, (1,), [(1, 1)], dimension_numbers=dn1,
                                      precision=jax.lax.Precision.HIGHEST)
    h1 = jax.nn.relu(h1 + b1[None, :, None])
    B, C, L = h1.shape
    Lp = L // 2
    h1p = jnp.max(h1[:, :, :Lp * 2].reshape(B, C, Lp, 2), axis=-1)   # MaxPool1d(2)
    dn2 = jax.lax.conv_dimension_numbers(h1p.shape, w2.shape, ("NCH", "OIH", "NCH"))
    h2 = jax.lax.conv_general_dilated(h1p, w2, (1,), [(1, 1)], dimension_numbers=dn2,
                                      precision=jax.lax.Precision.HIGHEST)
    h2 = jax.nn.relu(h2 + b2[None, :, None])
    g = jnp.max(h2, axis=2)                                    # (B, C)
    return g @ fcw.T + fcb


if __name__ == "__main__":
    def run_case(B, L, E, NC, seed=0):
        C = 128
        key = jax.random.PRNGKey(seed)
        kx, k1, k2, k3, k4, k5, k6 = jax.random.split(key, 7)
        x = jax.random.normal(kx, (B, L, E), jnp.float32)
        w1 = jax.random.normal(k1, (C, E, 3), jnp.float32) * 0.1
        b1 = jax.random.normal(k2, (C,), jnp.float32) * 0.1
        w2 = jax.random.normal(k3, (C, C, 3), jnp.float32) * 0.05
        b2 = jax.random.normal(k4, (C,), jnp.float32) * 0.1
        fcw = jax.random.normal(k5, (NC, C), jnp.float32) * 0.1
        fcb = jax.random.normal(k6, (NC,), jnp.float32) * 0.1

        ref = _reference_forward(x, w1, b1, w2, b2, fcw, fcb)

        # f32 MXU path (HIGHEST precision requested in-kernel) — tight check.
        out_f32 = jax.block_until_ready(
            cnn_classifier_forward(x, w1, b1, w2, b2, fcw, fcb,
                                   compute_dtype=jnp.float32))
        assert out_f32.shape == (B, NC)
        assert jnp.allclose(out_f32, ref, atol=2e-3, rtol=2e-3), (out_f32, ref)

        # bf16 MXU-input default path — accumulation stays f32, loosened tolerance.
        out_bf16 = jax.block_until_ready(
            cnn_classifier_forward(x, w1, b1, w2, b2, fcw, fcb))
        assert out_bf16.shape == (B, NC)
        assert jnp.allclose(out_bf16, ref, atol=2.5e-1, rtol=5e-2), (out_bf16, ref)

    run_case(B=2, L=8, E=32, NC=10)     # tiny shape: grid=1, exercises L padding (Lp 4->8)
    run_case(B=16, L=10, E=32, NC=10)   # grid=2 (both v7x TensorCores), odd pooled length
    print("KERNEL_OK")
</pallas_src>

<mosaic_0001>
module attributes {stable_mosaic.version = 11 : i64} {
  func.func @_cnn_kernel(%arg0: i32, %arg1: memref<16x32xf32, #tpu.memory_space<vmem>>, %arg2: memref<16x32xf32, #tpu.memory_space<vmem>>, %arg3: memref<128x128xf32, #tpu.memory_space<vmem>>, %arg4: memref<1x128xf32, #tpu.memory_space<vmem>>, %arg5: memref<384x128xf32, #tpu.memory_space<vmem>>, %arg6: memref<1x128xf32, #tpu.memory_space<vmem>>, %arg7: memref<128x128xf32, #tpu.memory_space<vmem>>, %arg8: memref<1x128xf32, #tpu.memory_space<vmem>>, %arg9: memref<2x128xf32, #tpu.memory_space<vmem>>) attributes {dimension_semantics = [#tpu.dimension_semantics<parallel>], iteration_bounds = array<i64: 1>, scalar_prefetch = 0 : i64, scratch_operands = 0 : i64, tpu.core_type = #tpu.core_type<tc>, window_params = [{transform_indices = @transform_0, window_bounds = array<i64: 16, 32>}, {transform_indices = @transform_1, window_bounds = array<i64: 16, 32>}, {pipeline_mode = #tpu.pipeline_mode<synchronous>, transform_indices = @transform_2, window_bounds = array<i64: 128, 128>}, {pipeline_mode = #tpu.pipeline_mode<synchronous>, transform_indices = @transform_3, window_bounds = array<i64: 1, 128>}, {pipeline_mode = #tpu.pipeline_mode<synchronous>, transform_indices = @transform_4, window_bounds = array<i64: 384, 128>}, {pipeline_mode = #tpu.pipeline_mode<synchronous>, transform_indices = @transform_5, window_bounds = array<i64: 1, 128>}, {pipeline_mode = #tpu.pipeline_mode<synchronous>, transform_indices = @transform_6, window_bounds = array<i64: 128, 128>}, {pipeline_mode = #tpu.pipeline_mode<synchronous>, transform_indices = @transform_7, window_bounds = array<i64: 1, 128>}, {transform_indices = @transform_8, window_bounds = array<i64: 2, 128>}]} {
    %c0 = arith.constant 0 : index
    %c0_0 = arith.constant 0 : index
    %0 = vector.load %arg1[%c0, %c0_0] : memref<16x32xf32, #tpu.memory_space<vmem>>, vector<16x32xf32>
    %c0_1 = arith.constant 0 : index
    %c0_2 = arith.constant 0 : index
    %1 = vector.load %arg2[%c0_1, %c0_2] : memref<16x32xf32, #tpu.memory_space<vmem>>, vector<16x32xf32>
    %2 = tpu.iota {dimensions = array<i32: 0>} : vector<16x1xi32>
    %c8_i32 = arith.constant 8 : i32
    %c0_i32 = arith.constant 0 : i32
    %3 = arith.cmpi eq, %c8_i32, %c0_i32 : i32
    %c1_i32 = arith.constant 1 : i32
    %4 = arith.select %3, %c1_i32, %c8_i32 : i32
    %5 = vector.broadcast %4 : i32 to vector<16x1xi32>
    %6 = arith.remsi %2, %5 : vector<16x1xi32>
    %c0_i32_3 = arith.constant 0 : i32
    %7 = vector.broadcast %c0_i32_3 : i32 to vector<16x1xi32>
    %8 = arith.cmpi ne, %6, %7 : vector<16x1xi32>
    %c0_i32_4 = arith.constant 0 : i32
    %9 = vector.broadcast %c0_i32_4 : i32 to vector<16x1xi32>
    %10 = arith.cmpi slt, %6, %9 : vector<16x1xi32>
    %c0_i32_5 = arith.constant 0 : i32
    %11 = arith.cmpi slt, %4, %c0_i32_5 : i32
    %12 = vector.broadcast %11 : i1 to vector<16x1xi1>
    %13 = vector.broadcast %12 : vector<16x1xi1> to vector<16x1xi1>
    %14 = arith.xori %10, %13 : vector<16x1xi1>
    %15 = arith.andi %14, %8 : vector<16x1xi1>
    %16 = vector.broadcast %4 : i32 to vector<16x1xi32>
    %17 = arith.addi %6, %16 : vector<16x1xi32>
    %18 = arith.select %15, %17, %6 : vector<16x1xi1>, vector<16x1xi32>
    %c0_i32_6 = arith.constant 0 : i32
    %19 = vector.broadcast %c0_i32_6 : i32 to vector<16x1xi32>
    %20 = arith.cmpi eq, %18, %19 : vector<16x1xi32>
    %c7_i32 = arith.constant 7 : i32
    %21 = vector.broadcast %c7_i32 : i32 to vector<16x1xi32>
    %22 = arith.cmpi eq, %18, %21 : vector<16x1xi32>
    %cst = arith.constant 0.000000e+00 : f32
    %23 = vector.broadcast %cst : f32 to vector<16x32xf32>
    %c1_i32_7 = arith.constant 1 : i32
    %24 = tpu.dynamic_rotate %1 by %c1_i32_7 dim 0 : vector<16x32xf32>, i32 -> vector<16x32xf32>
    %25 = vector.shape_cast %20 : vector<16x1xi1> to vector<16x1xi1>
    %26 = vector.broadcast %25 : vector<16x1xi1> to vector<16x32xi1>
    %27 = arith.select %26, %23, %24 : vector<16x32xi1>, vector<16x32xf32>
    %c15_i32 = arith.constant 15 : i32
    %28 = tpu.dynamic_rotate %0 by %c15_i32 dim 0 : vector<16x32xf32>, i32 -> vector<16x32xf32>
    %29 = vector.shape_cast %22 : vector<16x1xi1> to vector<16x1xi1>
    %30 = vector.broadcast %29 : vector<16x1xi1> to vector<16x32xi1>
    %31 = arith.select %30, %23, %28 : vector<16x32xi1>, vector<16x32xf32>
    %cst_8 = arith.constant 0.000000e+00 : f32
    %32 = vector.broadcast %cst_8 : f32 to vector<16x32xf32>
    %33 = tpu.concatenate %27, %0, %1, %32 in 1 : vector<16x32xf32>, vector<16x32xf32>, vector<16x32xf32>, vector<16x32xf32> -> vector<16x128xf32>
    %34 = tpu.concatenate %0, %1, %31, %32 in 1 : vector<16x32xf32>, vector<16x32xf32>, vector<16x32xf32>, vector<16x32xf32> -> vector<16x128xf32>
    %c0_9 = arith.constant 0 : index
    %c0_10 = arith.constant 0 : index
    %35 = vector.load %arg3[%c0_9, %c0_10] : memref<128x128xf32, #tpu.memory_space<vmem>>, vector<128x128xf32>
    %cst_11 = arith.constant dense<0.000000e+00> : vector<16x128xf32>
    %36 = tpu.matmul %33, %35, %cst_11 {dimension_numbers = #tpu.dot_dimension_numbers<[1], [0], [0], [1], [0, 0, 1, 1], [], []>, precision = #tpu.contract_precision<fp32>} : vector<16x128xf32>, vector<128x128xf32>, vector<16x128xf32> -> vector<16x128xf32>
    %cst_12 = arith.constant dense<0.000000e+00> : vector<16x128xf32>
    %37 = tpu.matmul %34, %35, %cst_12 {dimension_numbers = #tpu.dot_dimension_numbers<[1], [0], [0], [1], [0, 0, 1, 1], [], []>, precision = #tpu.contract_precision<fp32>} : vector<16x128xf32>, vector<128x128xf32>, vector<16x128xf32> -> vector<16x128xf32>
    %38 = arith.maximumf %36, %37 : vector<16x128xf32>
    %c0_13 = arith.constant 0 : index
    %c0_14 = arith.constant 0 : index
    %39 = vector.load %arg4[%c0_13, %c0_14] : memref<1x128xf32, #tpu.memory_space<vmem>>, vector<1x128xf32>
    %40 = vector.broadcast %39 : vector<1x128xf32> to vector<16x128xf32>
    %41 = arith.addf %38, %40 : vector<16x128xf32>
    %cst_15 = arith.constant 0.000000e+00 : f32
    %42 = vector.broadcast %cst_15 : f32 to vector<16x128xf32>
    %43 = arith.maximumf %41, %42 : vector<16x128xf32>
    %c4_i32 = arith.constant 4 : i32
    %44 = vector.broadcast %c4_i32 : i32 to vector<16x1xi32>
    %45 = arith.cmpi slt, %18, %44 : vector<16x1xi32>
    %cst_16 = arith.constant 0.000000e+00 : f32
    %46 = vector.shape_cast %45 : vector<16x1xi1> to vector<16x1xi1>
    %47 = vector.broadcast %46 : vector<16x1xi1> to vector<16x128xi1>
    %48 = vector.broadcast %cst_16 : f32 to vector<16x128xf32>
    %49 = arith.select %47, %43, %48 : vector<16x128xi1>, vector<16x128xf32>
    %cst_17 = arith.constant 0.000000e+00 : f32
    %50 = vector.broadcast %cst_17 : f32 to vector<16x128xf32>
    %c1_i32_18 = arith.constant 1 : i32
    %51 = tpu.dynamic_rotate %49 by %c1_i32_18 dim 0 : vector<16x128xf32>, i32 -> vector<16x128xf32>
    %52 = vector.shape_cast %20 : vector<16x1xi1> to vector<16x1xi1>
    %53 = vector.broadcast %52 : vector<16x1xi1> to vector<16x128xi1>
    %54 = arith.select %53, %50, %51 : vector<16x128xi1>, vector<16x128xf32>
    %c15_i32_19 = arith.constant 15 : i32
    %55 = tpu.dynamic_rotate %49 by %c15_i32_19 dim 0 : vector<16x128xf32>, i32 -> vector<16x128xf32>
    %56 = vector.shape_cast %22 : vector<16x1xi1> to vector<16x1xi1>
    %57 = vector.broadcast %56 : vector<16x1xi1> to vector<16x128xi1>
    %58 = arith.select %57, %50, %55 : vector<16x128xi1>, vector<16x128xf32>
    %59 = tpu.concatenate %54, %49, %58 in 1 : vector<16x128xf32>, vector<16x128xf32>, vector<16x128xf32> -> vector<16x384xf32>
    %c0_20 = arith.constant 0 : index
    %c0_21 = arith.constant 0 : index
    %60 = vector.load %arg5[%c0_20, %c0_21] : memref<384x128xf32, #tpu.memory_space<vmem>>, vector<384x128xf32>
    %cst_22 = arith.constant dense<0.000000e+00> : vector<16x128xf32>
    %61 = tpu.matmul %59, %60, %cst_22 {dimension_numbers = #tpu.dot_dimension_numbers<[1], [0], [0], [1], [0, 0, 1, 1], [], []>, precision = #tpu.contract_precision<fp32>} : vector<16x384xf32>, vector<384x128xf32>, vector<16x128xf32> -> vector<16x128xf32>
    %c0_23 = arith.constant 0 : index
    %c0_24 = arith.constant 0 : index
    %62 = vector.load %arg6[%c0_23, %c0_24] : memref<1x128xf32, #tpu.memory_space<vmem>>, vector<1x128xf32>
    %63 = vector.broadcast %62 : vector<1x128xf32> to vector<16x128xf32>
    %64 = arith.addf %61, %63 : vector<16x128xf32>
    %cst_25 = arith.constant 0.000000e+00 : f32
    %65 = vector.broadcast %cst_25 : f32 to vector<16x128xf32>
    %66 = arith.maximumf %64, %65 : vector<16x128xf32>
    %c4_i32_26 = arith.constant 4 : i32
    %67 = vector.broadcast %c4_i32_26 : i32 to vector<16x1xi32>
    %68 = arith.cmpi slt, %18, %67 : vector<16x1xi32>
    %cst_27 = arith.constant 0.000000e+00 : f32
    %69 = vector.shape_cast %68 : vector<16x1xi1> to vector<16x1xi1>
    %70 = vector.broadcast %69 : vector<16x1xi1> to vector<16x128xi1>
    %71 = vector.broadcast %cst_27 : f32 to vector<16x128xf32>
    %72 = arith.select %70, %66, %71 : vector<16x128xi1>, vector<16x128xf32>
    %73 = vector.shape_cast %72 : vector<16x128xf32> to vector<2x8x128xf32>
    %cst_28 = arith.constant dense<0xFF800000> : vector<2x128xf32>
    %74 = vector.multi_reduction <maximumf>, %73, %cst_28 [1] : vector<2x8x128xf32> to vector<2x128xf32>
    %c0_29 = arith.constant 0 : index
    %c0_30 = arith.constant 0 : index
    %75 = vector.load %arg7[%c0_29, %c0_30] : memref<128x128xf32, #tpu.memory_space<vmem>>, vector<128x128xf32>
    %cst_31 = arith.constant dense<0.000000e+00> : vector<2x128xf32>
    %76 = tpu.matmul %74, %75, %cst_31 {dimension_numbers = #tpu.dot_dimension_numbers<[1], [0], [0], [1], [0, 0, 1, 1], [], []>, precision = #tpu.contract_precision<fp32>} : vector<2x128xf32>, vector<128x128xf32>, vector<2x128xf32> -> vector<2x128xf32>
    %c0_32 = arith.constant 0 : index
    %c0_33 = arith.constant 0 : index
    %77 = vector.load %arg8[%c0_32, %c0_33] : memref<1x128xf32, #tpu.memory_space<vmem>>, vector<1x128xf32>
    %78 = vector.broadcast %77 : vector<1x128xf32> to vector<2x128xf32>
    %79 = arith.addf %76, %78 : vector<2x128xf32>
    %c0_34 = arith.constant 0 : index
    %c0_35 = arith.constant 0 : index
    %80 = vector.load %arg9[%c0_34, %c0_35] : memref<2x128xf32, #tpu.memory_space<vmem>>, vector<2x128xf32>
    tpu.vector_store %arg9[%c0_34, %c0_35], %79 {strides = array<i32>} : memref<2x128xf32, #tpu.memory_space<vmem>>, vector<2x128xf32>,
    return
  }
  func.func @transform_0(%arg0: i32) -> (i32, i32) {
    %c0_i32 = arith.constant 0 : i32
    %c0_i32_0 = arith.constant 0 : i32
    return %arg0, %c0_i32 : i32, i32
  }
  func.func @transform_1(%arg0: i32) -> (i32, i32) {
    %c0_i32 = arith.constant 0 : i32
    %c0_i32_0 = arith.constant 0 : i32
    return %arg0, %c0_i32 : i32, i32
  }
  func.func @transform_2(%arg0: i32) -> (i32, i32) {
    %c0_i32 = arith.constant 0 : i32
    %c0_i32_0 = arith.constant 0 : i32
    %c0_i32_1 = arith.constant 0 : i32
    return %c0_i32, %c0_i32_0 : i32, i32
  }
  func.func @transform_3(%arg0: i32) -> (i32, i32) {
    %c0_i32 = arith.constant 0 : i32
    %c0_i32_0 = arith.constant 0 : i32
    %c0_i32_1 = arith.constant 0 : i32
    return %c0_i32, %c0_i32_0 : i32, i32
  }
  func.func @transform_4(%arg0: i32) -> (i32, i32) {
    %c0_i32 = arith.constant 0 : i32
    %c0_i32_0 = arith.constant 0 : i32
    %c0_i32_1 = arith.constant 0 : i32
    return %c0_i32, %c0_i32_0 : i32, i32
  }
  func.func @transform_5(%arg0: i32) -> (i32, i32) {
    %c0_i32 = arith.constant 0 : i32
    %c0_i32_0 = arith.constant 0 : i32
    %c0_i32_1 = arith.constant 0 : i32
    return %c0_i32, %c0_i32_0 : i32, i32
  }
  func.func @transform_6(%arg0: i32) -> (i32, i32) {
    %c0_i32 = arith.constant 0 : i32
    %c0_i32_0 = arith.constant 0 : i32
    %c0_i32_1 = arith.constant 0 : i32
    return %c0_i32, %c0_i32_0 : i32, i32
  }
  func.func @transform_7(%arg0: i32) -> (i32, i32) {
    %c0_i32 = arith.constant 0 : i32
    %c0_i32_0 = arith.constant 0 : i32
    %c0_i32_1 = arith.constant 0 : i32
    return %c0_i32, %c0_i32_0 : i32, i32
  }
  func.func @transform_8(%arg0: i32) -> (i32, i32) {
    %c0_i32 = arith.constant 0 : i32
    %c0_i32_0 = arith.constant 0 : i32
    return %arg0, %c0_i32 : i32, i32
  }
}

</mosaic_0001>

<llo_original>
// kernel: tpu_custom_call.1
$region0: #{tpu_custom_call.1}
  #allocation0 [shape = 'u32[]', space=smem, size = 0x4, offset = 0x4, fixed_abs, tag = 'smem constant byte address 0x4 - core index']
  #allocation1 [shape = 'u32[144,128]{1,0:T(1,128)}', space=vmem, size = 0x12000, scoped, tag = 'internal scratch']
  %s0 = inlined_call_operand.hbm [shape: f32[16,32], index: 0, kind: input, shape index: {}]
  %s1 = inlined_call_operand.hbm [shape: f32[16,32], index: 1, kind: input, shape index: {}]
  %s2 = inlined_call_operand.hbm [shape: f32[128,128], index: 2, kind: input, shape index: {}]
  %s3 = inlined_call_operand.vmem [shape: f32[1,128], index: 3, kind: input, shape index: {}]
  %s4 = inlined_call_operand.hbm [shape: f32[384,128], index: 4, kind: input, shape index: {}]
  %s5 = inlined_call_operand.vmem [shape: f32[1,128], index: 5, kind: input, shape index: {}]
  %s6 = inlined_call_operand.hbm [shape: f32[128,128], index: 6, kind: input, shape index: {}]
  %s7 = inlined_call_operand.vmem [shape: f32[1,128], index: 7, kind: input, shape index: {}]
  %s8 = inlined_call_operand.hbm [shape: f32[2,128], index: 8, kind: output, shape index: {}]
  %s9 = sld [smem:[#allocation0]]
  $region62: #{tpu_custom_call.1} parent=0
    _
  %s11 = ssub.s32 1, %s9
  %s12 = scalar_select 0, %s11, %s9
  $region1: #{tpu_custom_call.1} parent=0
    #allocation2 [shape = 'u8[8192]{0}', space=vmem, size = 0x2000, scoped, tag = 'input window, operand 0, single buffered']
    #allocation3 [shape = 's32[1]{0}', space=sflag, size = 0x4, scoped, tag = 'scoped memory for tpu_custom_call.1']
    #allocation4 [shape = 's32[1]{0}', space=sflag, size = 0x4, scoped, tag = 'scoped memory for tpu_custom_call.1']
    #allocation5 [shape = 'u8[8192]{0}', space=vmem, size = 0x2000, scoped, tag = 'input window, operand 1, single buffered']
    #allocation6 [shape = 's32[1]{0}', space=sflag, size = 0x4, scoped, tag = 'scoped memory for tpu_custom_call.1']
    #allocation7 [shape = 'u8[65536]{0}', space=vmem, size = 0x10000, scoped, tag = 'input window, operand 2, single buffered']
    #allocation8 [shape = 'u8[196608]{0}', space=vmem, size = 0x30000, scoped, tag = 'input window, operand 4, single buffered']
    #allocation9 [shape = 's32[1]{0}', space=sflag, size = 0x4, scoped, tag = 'scoped memory for tpu_custom_call.1']
    #allocation10 [shape = 'u8[65536]{0}', space=vmem, size = 0x10000, scoped, tag = 'input window, operand 6, single buffered']
    #allocation11 [shape = 'u8[1024]{0}', space=vmem, size = 0x400, scoped, tag = 'output window, operand 0, single buffered']
    %13 = vsyncpa [#allocation3], 0
    %14 = vsyncpa [#allocation6], 0
    %15 = vsyncpa [#allocation9], 0
    %16 = vsyncpa [#allocation4], 0
    // Predicated region
    $region2: #{tpu_custom_call.1} parent=1 // pred_check
      _
    $region3: #{tpu_custom_call.1} parent=1 // pred_check_branch
      %18 = sbr.rel (0) target = $region5
    $region4: #{tpu_custom_call.1} parent=1 // pred_region
      %s20 = ssub.s32 256, 256
      %21 = vsyncadd [#allocation3], %s20
      %s22 = sshll.u32 [#allocation2], 4
      %s23 = int_to_ptr.vmem [resolvable:$true] %s22
      %28 = dma.hbm_to_vmem [thread:$0]  %s0, 256, %s23, [#allocation3], 128, 128, 8
    $region5: #{tpu_custom_call.1} parent=1 // pred_fallthru
      _
    // Predicated region
    $region6: #{tpu_custom_call.1} parent=1 // pred_check
      _
    $region7: #{tpu_custom_call.1} parent=1 // pred_check_branch
      %30 = sbr.rel (0) target = $region9
    $region8: #{tpu_custom_call.1} parent=1 // pred_region
      %s32 = ssub.s32 256, 256
      %33 = vsyncadd [#allocation6], %s32
      %s34 = sshll.u32 [#allocation5], 4
      %s35 = int_to_ptr.vmem [resolvable:$true] %s34
      %40 = dma.hbm_to_vmem [thread:$0]  %s1, 256, %s35, [#allocation6], 128, 128, 8
    $region9: #{tpu_custom_call.1} parent=1 // pred_fallthru
      _
    // Predicated region
    $region10: #{tpu_custom_call.1} parent=1 // pred_check
      _
    $region11: #{tpu_custom_call.1} parent=1 // pred_check_branch
      %42 = sbr.rel (0) target = $region13
    $region12: #{tpu_custom_call.1} parent=1 // pred_region
      %s44 = ssub.s32 2048, 2048
      %45 = vsyncadd [#allocation6], %s44
      %s46 = sshll.u32 [#allocation7], 4
      %s47 = int_to_ptr.vmem [resolvable:$true] %s46
      %52 = dma.hbm_to_vmem [thread:$0]  %s2, 2048, %s47, [#allocation6], 128, 128, 8
    $region13: #{tpu_custom_call.1} parent=1 // pred_fallthru
      _
    // Predicated region
    $region14: #{tpu_custom_call.1} parent=1 // pred_check
      _
    $region15: #{tpu_custom_call.1} parent=1 // pred_check_branch
      %54 = sbr.rel (0) target = $region17
    $region16: #{tpu_custom_call.1} parent=1 // pred_region
      _
    $region17: #{tpu_custom_call.1} parent=1 // pred_fallthru
      _
    // Predicated region
    $region18: #{tpu_custom_call.1} parent=1 // pred_check
      _
    $region19: #{tpu_custom_call.1} parent=1 // pred_check_branch
      %56 = sbr.rel (0) target = $region21
    $region20: #{tpu_custom_call.1} parent=1 // pred_region
      %s58 = ssub.s32 6144, 6144
      %59 = vsyncadd [#allocation9], %s58
      %s60 = sshll.u32 [#allocation8], 4
      %s61 = int_to_ptr.vmem [resolvable:$true] %s60
      %66 = dma.hbm_to_vmem [thread:$0]  %s4, 6144, %s61, [#allocation9], 128, 128, 8
    $region21: #{tpu_custom_call.1} parent=1 // pred_fallthru
      _
    // Predicated region
    $region22: #{tpu_custom_call.1} parent=1 // pred_check
      _
    $region23: #{tpu_custom_call.1} parent=1 // pred_check_branch
      %68 = sbr.rel (0) target = $region25
    $region24: #{tpu_custom_call.1} parent=1 // pred_region
      _
    $region25: #{tpu_custom_call.1} parent=1 // pred_fallthru
      _
    // Predicated region
    $region26: #{tpu_custom_call.1} parent=1 // pred_check
      _
    $region27: #{tpu_custom_call.1} parent=1 // pred_check_branch
      %70 = sbr.rel (0) target = $region29
    $region28: #{tpu_custom_call.1} parent=1 // pred_region
      %s72 = ssub.s32 2048, 2048
      %73 = vsyncadd [#allocation9], %s72
      %s74 = sshll.u32 [#allocation10], 4
      %s75 = int_to_ptr.vmem [resolvable:$true] %s74
      %80 = dma.hbm_to_vmem [thread:$0]  %s6, 2048, %s75, [#allocation9], 128, 128, 8
    $region29: #{tpu_custom_call.1} parent=1 // pred_fallthru
      _
    // Predicated region
    $region30: #{tpu_custom_call.1} parent=1 // pred_check
      _
    $region31: #{tpu_custom_call.1} parent=1 // pred_check_branch
      %82 = sbr.rel (0) target = $region33
    $region32: #{tpu_custom_call.1} parent=1 // pred_region
      _
    $region33: #{tpu_custom_call.1} parent=1 // pred_fallthru
      _
    // Predicated region
    $region34: #{tpu_custom_call.1} parent=1 // pred_check
      _
    $region35: #{tpu_custom_call.1} parent=1 // pred_check_branch
      %84 = sbr.rel (0) target = $region37
    $region36: #{tpu_custom_call.1} parent=1 // pred_region
      %85 = dma.done [#allocation3], 256
    $region37: #{tpu_custom_call.1} parent=1 // pred_fallthru
      _
    // Predicated region
    $region38: #{tpu_custom_call.1} parent=1 // pred_check
      _
    $region39: #{tpu_custom_call.1} parent=1 // pred_check_branch
      %87 = sbr.rel (0) target = $region41
    $region40: #{tpu_custom_call.1} parent=1 // pred_region
      %88 = dma.done [#allocation6], 256
    $region41: #{tpu_custom_call.1} parent=1 // pred_fallthru
      _
    // Predicated region
    $region42: #{tpu_custom_call.1} parent=1 // pred_check
      _
    $region43: #{tpu_custom_call.1} parent=1 // pred_check_branch
      %90 = sbr.rel (0) target = $region45
    $region44: #{tpu_custom_call.1} parent=1 // pred_region
      %91 = dma.done [#allocation6], 2048
    $region45: #{tpu_custom_call.1} parent=1 // pred_fallthru
      _
    // Predicated region
    $region46: #{tpu_custom_call.1} parent=1 // pred_check
      _
    $region47: #{tpu_custom_call.1} parent=1 // pred_check_branch
      %93 = sbr.rel (0) target = $region49
    $region48: #{tpu_custom_call.1} parent=1 // pred_region
      %94 = dma.done [#allocation9], 6144
    $region49: #{tpu_custom_call.1} parent=1 // pred_fallthru
      _
    // Predicated region
    $region50: #{tpu_custom_call.1} parent=1 // pred_check
      _
    $region51: #{tpu_custom_call.1} parent=1 // pred_check_branch
      %96 = sbr.rel (0) target = $region53
    $region52: #{tpu_custom_call.1} parent=1 // pred_region
      %97 = dma.done [#allocation9], 2048
    $region53: #{tpu_custom_call.1} parent=1 // pred_fallthru
      _
    %v98 = vld [vmem:[#allocation2] sm:$0xff]
    %v99 = vld [vmem:[#allocation2 + $0x8] sm:$0xff]
    %v100 = vld [vmem:[#allocation5] sm:$0xff]
    %v101 = vld [vmem:[#allocation5 + $0x8] sm:$0xff]
    %v102 = vlaneseq
    %v103 = vshrl.u32 %v102, 7
    %v104 = vadd.s32 %v103, 8
    %vm105 = vcmp.lt.s32.totalorder %v103, 0
    %v106 = vsub.s32 0, %v103
    %v107 = vsel %vm105, %v106, %v103
    %v108 = vshrl.u32 %v107, 3
    %v109 = vand.u32 %v107, 7
    %v110 = vsub.s32 0, %v109
    %v111 = vsel %vm105, %v110, %v109
    %vm112 = vcmp.lt.s32.totalorder %v104, 0
    %v113 = vsub.s32 0, %v104
    %v114 = vsel %vm112, %v113, %v104
    %v115 = vshrl.u32 %v114, 3
    %v116 = vand.u32 %v114, 7
    %v117 = vsub.s32 0, %v116
    %v118 = vsel %vm112, %v117, %v116
    %vm119 = vcmp.ne.s32.totalorder %v111, 0
    %vm120 = vcmp.ne.s32.totalorder %v118, 0
    %vm121 = vcmp.lt.s32.totalorder %v111, 0
    %vm122 = vcmp.lt.s32.totalorder %v118, 0
    %vm123 = vmand %vm121, %vm119
    %vm124 = vmand %vm122, %vm120
    %v125 = vadd.s32 %v111, 8
    %v126 = vadd.s32 %v118, 8
    %v127 = vsel %vm123, %v125, %v111
    %v128 = vsel %vm124, %v126, %v118
    %vm129 = vcmp.eq.s32.totalorder %v127, 0
    %vm130 = vcmp.eq.s32.totalorder %v128, 0
    %vm131 = vcmp.eq.s32.totalorder %v127, 7
    %vm132 = vcmp.eq.s32.totalorder %v128, 7
    %v133 = vrot.slane %v100, 7
    %v134 = vrot.slane %v101, 7
    %vm135 = vcmp.lt.s32.totalorder %v103, 1
    %v136 = vsel %vm135, %v133, %v134
    %v137 = vsel %vm135, %v134, %v133
    %v138 = vsel %vm129, 1, 0
    %v139 = vsel %vm130, 1, 0
    %vm140 = vcmp.eq.s32.totalorder %v138, 1
    %vm141 = vcmp.eq.s32.totalorder %v139, 1
    %v142 = vsel %vm140, 0.0, %v137
    %v143 = vsel %vm141, 0.0, %v136
    %v144 = vrot.slane %v98, 1
    %v145 = vrot.slane %v99, 1
    %vm146 = vcmp.lt.s32.totalorder %v103, 7
    %v147 = vsel %vm146, %v144, %v145
    %v148 = vsel %vm146, %v145, %v144
    %v149 = vsel %vm131, 1, 0
    %v150 = vsel %vm132, 1, 0
    %vm151 = vcmp.eq.s32.totalorder %v149, 1
    %vm152 = vcmp.eq.s32.totalorder %v150, 1
    %v153 = vsel %vm151, 0.0, %v147
    %v154 = vsel %vm152, 0.0, %v148
    %157 = vrot.lane.b32.xlu0 %v98, 32
    %v158 = vpop.permute.xlu0 %157
    %159 = vrot.lane.b32.xlu0 %v99, 32
    %v160 = vpop.permute.xlu0 %159
    %165 = vrot.lane.b32.xlu0 %v100, 64
    %v166 = vpop.permute.xlu0 %165
    %167 = vrot.lane.b32.xlu0 %v101, 64
    %v168 = vpop.permute.xlu0 %167
    %vm171 = vcmask 261120
    %v172 = vsel %vm171, %v142, %v158
    %v173 = vsel %vm171, %v143, %v160
    %vm174 = vcmask 523264
    %v175 = vsel %vm174, %v172, %v166
    %v176 = vsel %vm174, %v173, %v168
    %vm177 = vcmask 785408
    %v178 = vsel %vm177, %v175, 0.0
    %v179 = vsel %vm177, %v176, 0.0
    %180 = vrot.lane.b32.xlu0 %v100, 32
    %v181 = vpop.permute.xlu0 %180
    %182 = vrot.lane.b32.xlu0 %v101, 32
    %v183 = vpop.permute.xlu0 %182
    %188 = vrot.lane.b32.xlu0 %v153, 64
    %v189 = vpop.permute.xlu0 %188
    %190 = vrot.lane.b32.xlu0 %v154, 64
    %v191 = vpop.permute.xlu0 %190
    %v194 = vsel %vm171, %v98, %v181
    %v195 = vsel %vm171, %v99, %v183
    %v196 = vsel %vm174, %v194, %v189
    %v197 = vsel %vm174, %v195, %v191
    %v198 = vsel %vm177, %v196, 0.0
    %v199 = vsel %vm177, %v197, 0.0
    %v200 = vld [vmem:[#allocation7] sm:$0xff]
    %v201 = vld [vmem:[#allocation7 + $0x8] sm:$0xff]
    %v202 = vld [vmem:[#allocation7 + $0x10] sm:$0xff]
    %v203 = vld [vmem:[#allocation7 + $0x18] sm:$0xff]
    %v204 = vld [vmem:[#allocation7 + $0x20] sm:$0xff]
    %v205 = vld [vmem:[#allocation7 + $0x28] sm:$0xff]
    %v206 = vld [vmem:[#allocation7 + $0x30] sm:$0xff]
    %v207 = vld [vmem:[#allocation7 + $0x38] sm:$0xff]
    %v208 = vld [vmem:[#allocation7 + $0x40] sm:$0xff]
    %v209 = vld [vmem:[#allocation7 + $0x48] sm:$0xff]
    %v210 = vld [vmem:[#allocation7 + $0x50] sm:$0xff]
    %v211 = vld [vmem:[#allocation7 + $0x58] sm:$0xff]
    %v212 = vld [vmem:[#allocation7 + $0x60] sm:$0xff]
    %v213 = vld [vmem:[#allocation7 + $0x68] sm:$0xff]
    %v214 = vld [vmem:[#allocation7 + $0x70] sm:$0xff]
    %v215 = vld [vmem:[#allocation7 + $0x78] sm:$0xff]
    %216 = vmatprep.subr.mxu0 0.0
    %v217 = vand.u32 %v200, 4294901760
    %218 = vmatpush1.msra.mxu0 %v217
    %219 = vmatprep.subr.mxu0 0.0
    %v220 = vand.u32 %v201, 4294901760
    %221 = vmatpush1.msra.mxu0 %v220
    %222 = vmatprep.subr.mxu0 0.0
    %v223 = vand.u32 %v202, 4294901760
    %224 = vmatpush1.msra.mxu0 %v223
    %225 = vmatprep.subr.mxu0 0.0
    %v226 = vand.u32 %v203, 4294901760
    %227 = vmatpush1.msra.mxu0 %v226
    %228 = vmatprep.subr.mxu0 0.0
    %v229 = vand.u32 %v204, 4294901760
    %230 = vmatpush1.msra.mxu0 %v229
    %231 = vmatprep.subr.mxu0 0.0
    %v232 = vand.u32 %v205, 4294901760
    %233 = vmatpush1.msra.mxu0 %v232
    %234 = vmatprep.subr.mxu0 0.0
    %v235 = vand.u32 %v206, 4294901760
    %236 = vmatpush1.msra.mxu0 %v235
    %237 = vmatprep.subr.mxu0 0.0
    %v238 = vand.u32 %v207, 4294901760
    %239 = vmatpush1.msra.mxu0 %v238
    %240 = vmatprep.subr.mxu0 0.0
    %v241 = vand.u32 %v208, 4294901760
    %242 = vmatpush1.msra.mxu0 %v241
    %243 = vmatprep.subr.mxu0 0.0
    %v244 = vand.u32 %v209, 4294901760
    %245 = vmatpush1.msra.mxu0 %v244
    %246 = vmatprep.subr.mxu0 0.0
    %v247 = vand.u32 %v210, 4294901760
    %248 = vmatpush1.msra.mxu0 %v247
    %249 = vmatprep.subr.mxu0 0.0
    %v250 = vand.u32 %v211, 4294901760
    %251 = vmatpush1.msra.mxu0 %v250
    %252 = vmatprep.subr.mxu0 0.0
    %v253 = vand.u32 %v212, 4294901760
    %254 = vmatpush1.msra.mxu0 %v253
    %255 = vmatprep.subr.mxu0 0.0
    %v256 = vand.u32 %v213, 4294901760
    %257 = vmatpush1.msra.mxu0 %v256
    %258 = vmatprep.subr.mxu0 0.0
    %v259 = vand.u32 %v214, 4294901760
    %260 = vmatpush1.msra.mxu0 %v259
    %261 = vmatprep.subr.mxu0 0.0
    %v262 = vand.u32 %v215, 4294901760
    %263 = vmatpush1.msra.mxu0 %v262
    %264 = vmatprep.subr.mxu0 0.0
    %265 = vmatpush1.msra.mxu0 0.0
    %266 = vmatprep.subr.mxu0 0.0
    %267 = vmatpush1.msra.mxu0 0.0
    %268 = vmatprep.subr.mxu0 0.0
    %269 = vmatpush1.msra.mxu0 0.0
    %270 = vmatprep.subr.mxu0 0.0
    %271 = vmatpush1.msra.mxu0 0.0
    %272 = vmatprep.subr.mxu0 0.0
    %273 = vmatpush1.msra.mxu0 0.0
    %274 = vmatprep.subr.mxu0 0.0
    %275 = vmatpush1.msra.mxu0 0.0
    %276 = vmatprep.subr.mxu0 0.0
    %277 = vmatpush1.msra.mxu0 0.0
    %278 = vmatprep.subr.mxu0 0.0
    %279 = vmatpush1.msra.mxu0 0.0
    %280 = vmatprep.subr.mxu0 0.0
    %281 = vmatpush1.msra.mxu0 0.0
    %282 = vmatprep.subr.mxu0 0.0
    %283 = vmatpush1.msra.mxu0 0.0
    %284 = vmatprep.subr.mxu0 0.0
    %285 = vmatpush1.msra.mxu0 0.0
    %286 = vmatprep.subr.mxu0 0.0
    %287 = vmatpush1.msra.mxu0 0.0
    %288 = vmatprep.subr.mxu0 0.0
    %289 = vmatpush1.msra.mxu0 0.0
    %290 = vmatprep.subr.mxu0 0.0
    %291 = vmatpush1.msra.mxu0 0.0
    %292 = vmatprep.subr.mxu0 0.0
    %293 = vmatpush1.msra.mxu0 0.0
    %294 = vmatprep.subr.mxu0 0.0
    %295 = vmatpush1.msra.mxu0 0.0
    %296 = vmatprep.mubr.f32.mxu0 0.0
    %v297 = vand.u32 %v178, 4294901760
    %v298 = vsub.f32 %v178, %v297
    %v299 = vand.u32 %v298, 4294901760
    %v300 = vsub.f32 %v298, %v299
    %v301 = vand.u32 %v300, 4294901760
    %302 = vmatmul.mubr.f32.gmra.mrb[0].mxu0 %v301
    %v303 = vpop.f32.mrb[0].mxu0
    %v304 = vadd.f32 0.0, %v303
    %v305 = vpop.f32.mrb[0].mxu0
    %306 = vmatprep.mubr.f32.mxu0 0.0
    %v307 = vand.u32 %v179, 4294901760
    %v308 = vsub.f32 %v179, %v307
    %v309 = vand.u32 %v308, 4294901760
    %v310 = vsub.f32 %v308, %v309
    %v311 = vand.u32 %v310, 4294901760
    %312 = vmatmul.mubr.f32.gmra.mrb[0].mxu0 %v311
    %v313 = vpop.f32.mrb[0].mxu0
    %v314 = vadd.f32 0.0, %v313
    %v315 = vpop.f32.mrb[0].mxu0
    %316 = vdwg.mxu0
    %317 = vmatprep.subr.mxu0 0.0
    %v318 = vand.u32 %v200, 4294901760
    %v319 = vsub.f32 %v200, %v318
    %v320 = vand.u32 %v319, 4294901760
    %v321 = vsub.f32 %v319, %v320
    %v322 = vand.u32 %v321, 4294901760
    %323 = vmatpush1.msra.mxu0 %v322
    %324 = vmatprep.subr.mxu0 0.0
    %v325 = vand.u32 %v201, 4294901760
    %v326 = vsub.f32 %v201, %v325
    %v327 = vand.u32 %v326, 4294901760
    %v328 = vsub.f32 %v326, %v327
    %v329 = vand.u32 %v328, 4294901760
    %330 = vmatpush1.msra.mxu0 %v329
    %331 = vmatprep.subr.mxu0 0.0
    %v332 = vand.u32 %v202, 4294901760
    %v333 = vsub.f32 %v202, %v332
    %v334 = vand.u32 %v333, 4294901760
    %v335 = vsub.f32 %v333, %v334
    %v336 = vand.u32 %v335, 4294901760
    %337 = vmatpush1.msra.mxu0 %v336
    %338 = vmatprep.subr.mxu0 0.0
    %v339 = vand.u32 %v203, 4294901760
    %v340 = vsub.f32 %v203, %v339
    %v341 = vand.u32 %v340, 4294901760
    %v342 = vsub.f32 %v340, %v341
    %v343 = vand.u32 %v342, 4294901760
    %344 = vmatpush1.msra.mxu0 %v343
    %345 = vmatprep.subr.mxu0 0.0
    %v346 = vand.u32 %v204, 4294901760
    %v347 = vsub.f32 %v204, %v346
    %v348 = vand.u32 %v347, 4294901760
    %v349 = vsub.f32 %v347, %v348
    %v350 = vand.u32 %v349, 4294901760
    %351 = vmatpush1.msra.mxu0 %v350
    %352 = vmatprep.subr.mxu0 0.0
    %v353 = vand.u32 %v205, 4294901760
    %v354 = vsub.f32 %v205, %v353
    %v355 = vand.u32 %v354, 4294901760
    %v356 = vsub.f32 %v354, %v355
    %v357 = vand.u32 %v356, 4294901760
    %358 = vmatpush1.msra.mxu0 %v357
    %359 = vmatprep.subr.mxu0 0.0
    %v360 = vand.u32 %v206, 4294901760
    %v361 = vsub.f32 %v206, %v360
    %v362 = vand.u32 %v361, 4294901760
    %v363 = vsub.f32 %v361, %v362
    %v364 = vand.u32 %v363, 4294901760
    %365 = vmatpush1.msra.mxu0 %v364
    %366 = vmatprep.subr.mxu0 0.0
    %v367 = vand.u32 %v207, 4294901760
    %v368 = vsub.f32 %v207, %v367
    %v369 = vand.u32 %v368, 4294901760
    %v370 = vsub.f32 %v368, %v369
    %v371 = vand.u32 %v370, 4294901760
    %372 = vmatpush1.msra.mxu0 %v371
    %373 = vmatprep.subr.mxu0 0.0
    %v374 = vand.u32 %v208, 4294901760
    %v375 = vsub.f32 %v208, %v374
    %v376 = vand.u32 %v375, 4294901760
    %v377 = vsub.f32 %v375, %v376
    %v378 = vand.u32 %v377, 4294901760
    %379 = vmatpush1.msra.mxu0 %v378
    %380 = vmatprep.subr.mxu0 0.0
    %v381 = vand.u32 %v209, 4294901760
    %v382 = vsub.f32 %v209, %v381
    %v383 = vand.u32 %v382, 4294901760
    %v384 = vsub.f32 %v382, %v383
    %v385 = vand.u32 %v384, 4294901760
    %386 = vmatpush1.msra.mxu0 %v385
    %387 = vmatprep.subr.mxu0 0.0
    %v388 = vand.u32 %v210, 4294901760
    %v389 = vsub.f32 %v210, %v388
    %v390 = vand.u32 %v389, 4294901760
    %v391 = vsub.f32 %v389, %v390
    %v392 = vand.u32 %v391, 4294901760
    %393 = vmatpush1.msra.mxu0 %v392
    %394 = vmatprep.subr.mxu0 0.0
    %v395 = vand.u32 %v211, 4294901760
    %v396 = vsub.f32 %v211, %v395
    %v397 = vand.u32 %v396, 4294901760
    %v398 = vsub.f32 %v396, %v397
    %v399 = vand.u32 %v398, 4294901760
    %400 = vmatpush1.msra.mxu0 %v399
    %401 = vmatprep.subr.mxu0 0.0
    %v402 = vand.u32 %v212, 4294901760
    %v403 = vsub.f32 %v212, %v402
    %v404 = vand.u32 %v403, 4294901760
    %v405 = vsub.f32 %v403, %v404
    %v406 = vand.u32 %v405, 4294901760
    %407 = vmatpush1.msra.mxu0 %v406
    %408 = vmatprep.subr.mxu0 0.0
    %v409 = vand.u32 %v213, 4294901760
    %v410 = vsub.f32 %v213, %v409
    %v411 = vand.u32 %v410, 4294901760
    %v412 = vsub.f32 %v410, %v411
    %v413 = vand.u32 %v412, 4294901760
    %414 = vmatpush1.msra.mxu0 %v413
    %415 = vmatprep.subr.mxu0 0.0
    %v416 = vand.u32 %v214, 4294901760
    %v417 = vsub.f32 %v214, %v416
    %v418 = vand.u32 %v417, 4294901760
    %v419 = vsub.f32 %v417, %v418
    %v420 = vand.u32 %v419, 4294901760
    %421 = vmatpush1.msra.mxu0 %v420
    %422 = vmatprep.subr.mxu0 0.0
    %v423 = vand.u32 %v215, 4294901760
    %v424 = vsub.f32 %v215, %v423
    %v425 = vand.u32 %v424, 4294901760
    %v426 = vsub.f32 %v424, %v425
    %v427 = vand.u32 %v426, 4294901760
    %428 = vmatpush1.msra.mxu0 %v427
    %429 = vmatprep.subr.mxu0 0.0
    %430 = vmatpush1.msra.mxu0 0.0
    %431 = vmatprep.subr.mxu0 0.0
    %432 = vmatpush1.msra.mxu0 0.0
    %433 = vmatprep.subr.mxu0 0.0
    %434 = vmatpush1.msra.mxu0 0.0
    %435 = vmatprep.subr.mxu0 0.0
    %436 = vmatpush1.msra.mxu0 0.0
    %437 = vmatprep.subr.mxu0 0.0
    %438 = vmatpush1.msra.mxu0 0.0
    %439 = vmatprep.subr.mxu0 0.0
    %440 = vmatpush1.msra.mxu0 0.0
    %441 = vmatprep.subr.mxu0 0.0
    %442 = vmatpush1.msra.mxu0 0.0
    %443 = vmatprep.subr.mxu0 0.0
    %444 = vmatpush1.msra.mxu0 0.0
    %445 = vmatprep.subr.mxu0 0.0
    %446 = vmatpush1.msra.mxu0 0.0
    %447 = vmatprep.subr.mxu0 0.0
    %448 = vmatpush1.msra.mxu0 0.0
    %449 = vmatprep.subr.mxu0 0.0
    %450 = vmatpush1.msra.mxu0 0.0
    %451 = vmatprep.subr.mxu0 0.0
    %452 = vmatpush1.msra.mxu0 0.0
    %453 = vmatprep.subr.mxu0 0.0
    %454 = vmatpush1.msra.mxu0 0.0
    %455 = vmatprep.subr.mxu0 0.0
    %456 = vmatpush1.msra.mxu0 0.0
    %457 = vmatprep.subr.mxu0 0.0
    %458 = vmatpush1.msra.mxu0 0.0
    %459 = vmatprep.subr.mxu0 0.0
    %460 = vmatpush1.msra.mxu0 0.0
    %461 = vmatprep.mubr.f32.mxu0 0.0
    %v462 = vand.u32 %v178, 4294901760
    %463 = vmatmul.mubr.f32.gmra.mrb[0].mxu0 %v462
    %v464 = vpop.f32.mrb[0].mxu0
    %v465 = vadd.f32 %v304, %v464
    %v466 = vpop.f32.mrb[0].mxu0
    %467 = vmatprep.mubr.f32.mxu0 0.0
    %v468 = vand.u32 %v179, 4294901760
    %469 = vmatmul.mubr.f32.gmra.mrb[0].mxu0 %v468
    %v470 = vpop.f32.mrb[0].mxu0
    %v471 = vadd.f32 %v314, %v470
    %v472 = vpop.f32.mrb[0].mxu0
    %473 = vdwg.mxu0
    %474 = vmatprep.subr.mxu0 0.0
    %v475 = vand.u32 %v200, 4294901760
    %v476 = vsub.f32 %v200, %v475
    %477 = vmatpush1.msra.mxu0 %v476
    %478 = vmatprep.subr.mxu0 0.0
    %v479 = vand.u32 %v201, 4294901760
    %v480 = vsub.f32 %v201, %v479
    %481 = vmatpush1.msra.mxu0 %v480
    %482 = vmatprep.subr.mxu0 0.0
    %v483 = vand.u32 %v202, 4294901760
    %v484 = vsub.f32 %v202, %v483
    %485 = vmatpush1.msra.mxu0 %v484
    %486 = vmatprep.subr.mxu0 0.0
    %v487 = vand.u32 %v203, 4294901760
    %v488 = vsub.f32 %v203, %v487
    %489 = vmatpush1.msra.mxu0 %v488
    %490 = vmatprep.subr.mxu0 0.0
    %v491 = vand.u32 %v204, 4294901760
    %v492 = vsub.f32 %v204, %v491
    %493 = vmatpush1.msra.mxu0 %v492
    %494 = vmatprep.subr.mxu0 0.0
    %v495 = vand.u32 %v205, 4294901760
    %v496 = vsub.f32 %v205, %v495
    %497 = vmatpush1.msra.mxu0 %v496
    %498 = vmatprep.subr.mxu0 0.0
    %v499 = vand.u32 %v206, 4294901760
    %v500 = vsub.f32 %v206, %v499
    %501 = vmatpush1.msra.mxu0 %v500
    %502 = vmatprep.subr.mxu0 0.0
    %v503 = vand.u32 %v207, 4294901760
    %v504 = vsub.f32 %v207, %v503
    %505 = vmatpush1.msra.mxu0 %v504
    %506 = vmatprep.subr.mxu0 0.0
    %v507 = vand.u32 %v208, 4294901760
    %v508 = vsub.f32 %v208, %v507
    %509 = vmatpush1.msra.mxu0 %v508
    %510 = vmatprep.subr.mxu0 0.0
    %v511 = vand.u32 %v209, 4294901760
    %v512 = vsub.f32 %v209, %v511
    %513 = vmatpush1.msra.mxu0 %v512
    %514 = vmatprep.subr.mxu0 0.0
    %v515 = vand.u32 %v210, 4294901760
    %v516 = vsub.f32 %v210, %v515
    %517 = vmatpush1.msra.mxu0 %v516
    %518 = vmatprep.subr.mxu0 0.0
    %v519 = vand.u32 %v211, 4294901760
    %v520 = vsub.f32 %v211, %v519
    %521 = vmatpush1.msra.mxu0 %v520
    %522 = vmatprep.subr.mxu0 0.0
    %v523 = vand.u32 %v212, 4294901760
    %v524 = vsub.f32 %v212, %v523
    %525 = vmatpush1.msra.mxu0 %v524
    %526 = vmatprep.subr.mxu0 0.0
    %v527 = vand.u32 %v213, 4294901760
    %v528 = vsub.f32 %v213, %v527
    %529 = vmatpush1.msra.mxu0 %v528
    %530 = vmatprep.subr.mxu0 0.0
    %v531 = vand.u32 %v214, 4294901760
    %v532 = vsub.f32 %v214, %v531
    %533 = vmatpush1.msra.mxu0 %v532
    %534 = vmatprep.subr.mxu0 0.0
    %v535 = vand.u32 %v215, 4294901760
    %v536 = vsub.f32 %v215, %v535
    %537 = vmatpush1.msra.mxu0 %v536
    %538 = vmatprep.subr.mxu0 0.0
    %539 = vmatpush1.msra.mxu0 0.0
    %540 = vmatprep.subr.mxu0 0.0
    %541 = vmatpush1.msra.mxu0 0.0
    %542 = vmatprep.subr.mxu0 0.0
    %543 = vmatpush1.msra.mxu0 0.0
    %544 = vmatprep.subr.mxu0 0.0
    %545 = vmatpush1.msra.mxu0 0.0
    %546 = vmatprep.subr.mxu0 0.0
    %547 = vmatpush1.msra.mxu0 0.0
    %548 = vmatprep.subr.mxu0 0.0
    %549 = vmatpush1.msra.mxu0 0.0
    %550 = vmatprep.subr.mxu0 0.0
    %551 = vmatpush1.msra.mxu0 0.0
    %552 = vmatprep.subr.mxu0 0.0
    %553 = vmatpush1.msra.mxu0 0.0
    %554 = vmatprep.subr.mxu0 0.0
    %555 = vmatpush1.msra.mxu0 0.0
    %556 = vmatprep.subr.mxu0 0.0
    %557 = vmatpush1.msra.mxu0 0.0
    %558 = vmatprep.subr.mxu0 0.0
    %559 = vmatpush1.msra.mxu0 0.0
    %560 = vmatprep.subr.mxu0 0.0
    %561 = vmatpush1.msra.mxu0 0.0
    %562 = vmatprep.subr.mxu0 0.0
    %563 = vmatpush1.msra.mxu0 0.0
    %564 = vmatprep.subr.mxu0 0.0
    %565 = vmatpush1.msra.mxu0 0.0
    %566 = vmatprep.subr.mxu0 0.0
    %567 = vmatpush1.msra.mxu0 0.0
    %568 = vmatprep.subr.mxu0 0.0
    %569 = vmatpush1.msra.mxu0 0.0
    %570 = vmatprep.mubr.f32.mxu0 0.0
    %v571 = vand.u32 %v178, 4294901760
    %v572 = vsub.f32 %v178, %v571
    %573 = vmatmul.mubr.f32.gmra.mrb[0].mxu0 %v572
    %v574 = vpop.f32.mrb[0].mxu0
    %v575 = vadd.f32 %v465, %v574
    %v576 = vpop.f32.mrb[0].mxu0
    %577 = vmatprep.mubr.f32.mxu0 0.0
    %v578 = vand.u32 %v179, 4294901760
    %v579 = vsub.f32 %v179, %v578
    %580 = vmatmul.mubr.f32.gmra.mrb[0].mxu0 %v579
    %v581 = vpop.f32.mrb[0].mxu0
    %v582 = vadd.f32 %v471, %v581
    %v583 = vpop.f32.mrb[0].mxu0
    %584 = vdwg.mxu0
    %585 = vmatprep.subr.mxu0 0.0
    %v586 = vand.u32 %v200, 4294901760
    %587 = vmatpush1.msra.mxu0 %v586
    %588 = vmatprep.subr.mxu0 0.0
    %v589 = vand.u32 %v201, 4294901760
    %590 = vmatpush1.msra.mxu0 %v589
    %591 = vmatprep.subr.mxu0 0.0
    %v592 = vand.u32 %v202, 4294901760
    %593 = vmatpush1.msra.mxu0 %v592
    %594 = vmatprep.subr.mxu0 0.0
    %v595 = vand.u32 %v203, 4294901760
    %596 = vmatpush1.msra.mxu0 %v595
    %597 = vmatprep.subr.mxu0 0.0
    %v598 = vand.u32 %v204, 4294901760
    %599 = vmatpush1.msra.mxu0 %v598
    %600 = vmatprep.subr.mxu0 0.0
    %v601 = vand.u32 %v205, 4294901760
    %602 = vmatpush1.msra.mxu0 %v601
    %603 = vmatprep.subr.mxu0 0.0
    %v604 = vand.u32 %v206, 4294901760
    %605 = vmatpush1.msra.mxu0 %v604
    %606 = vmatprep.subr.mxu0 0.0
    %v607 = vand.u32 %v207, 4294901760
    %608 = vmatpush1.msra.mxu0 %v607
    %609 = vmatprep.subr.mxu0 0.0
    %v610 = vand.u32 %v208, 4294901760
    %611 = vmatpush1.msra.mxu0 %v610
    %612 = vmatprep.subr.mxu0 0.0
    %v613 = vand.u32 %v209, 4294901760
    %614 = vmatpush1.msra.mxu0 %v613
    %615 = vmatprep.subr.mxu0 0.0
    %v616 = vand.u32 %v210, 4294901760
    %617 = vmatpush1.msra.mxu0 %v616
    %618 = vmatprep.subr.mxu0 0.0
    %v619 = vand.u32 %v211, 4294901760
    %620 = vmatpush1.msra.mxu0 %v619
    %621 = vmatprep.subr.mxu0 0.0
    %v622 = vand.u32 %v212, 4294901760
    %623 = vmatpush1.msra.mxu0 %v622
    %624 = vmatprep.subr.mxu0 0.0
    %v625 = vand.u32 %v213, 4294901760
    %626 = vmatpush1.msra.mxu0 %v625
    %627 = vmatprep.subr.mxu0 0.0
    %v628 = vand.u32 %v214, 4294901760
    %629 = vmatpush1.msra.mxu0 %v628
    %630 = vmatprep.subr.mxu0 0.0
    %v631 = vand.u32 %v215, 4294901760
    %632 = vmatpush1.msra.mxu0 %v631
    %633 = vmatprep.subr.mxu0 0.0
    %634 = vmatpush1.msra.mxu0 0.0
    %635 = vmatprep.subr.mxu0 0.0
    %636 = vmatpush1.msra.mxu0 0.0
    %637 = vmatprep.subr.mxu0 0.0
    %638 = vmatpush1.msra.mxu0 0.0
    %639 = vmatprep.subr.mxu0 0.0
    %640 = vmatpush1.msra.mxu0 0.0
    %641 = vmatprep.subr.mxu0 0.0
    %642 = vmatpush1.msra.mxu0 0.0
    %643 = vmatprep.subr.mxu0 0.0
    %644 = vmatpush1.msra.mxu0 0.0
    %645 = vmatprep.subr.mxu0 0.0
    %646 = vmatpush1.msra.mxu0 0.0
    %647 = vmatprep.subr.mxu0 0.0
    %648 = vmatpush1.msra.mxu0 0.0
    %649 = vmatprep.subr.mxu0 0.0
    %650 = vmatpush1.msra.mxu0 0.0
    %651 = vmatprep.subr.mxu0 0.0
    %652 = vmatpush1.msra.mxu0 0.0
    %653 = vmatprep.subr.mxu0 0.0
    %654 = vmatpush1.msra.mxu0 0.0
    %655 = vmatprep.subr.mxu0 0.0
    %656 = vmatpush1.msra.mxu0 0.0
    %657 = vmatprep.subr.mxu0 0.0
    %658 = vmatpush1.msra.mxu0 0.0
    %659 = vmatprep.subr.mxu0 0.0
    %660 = vmatpush1.msra.mxu0 0.0
    %661 = vmatprep.subr.mxu0 0.0
    %662 = vmatpush1.msra.mxu0 0.0
    %663 = vmatprep.subr.mxu0 0.0
    %664 = vmatpush1.msra.mxu0 0.0
    %665 = vmatprep.mubr.f32.mxu0 0.0
    %v666 = vand.u32 %v178, 4294901760
    %v667 = vsub.f32 %v178, %v666
    %v668 = vand.u32 %v667, 4294901760
    %669 = vmatmul.mubr.f32.gmra.mrb[0].mxu0 %v668
    %v670 = vpop.f32.mrb[0].mxu0
    %v671 = vadd.f32 %v575, %v670
    %v672 = vpop.f32.mrb[0].mxu0
    %673 = vmatprep.mubr.f32.mxu0 0.0
    %v674 = vand.u32 %v179, 4294901760
    %v675 = vsub.f32 %v179, %v674
    %v676 = vand.u32 %v675, 4294901760
    %677 = vmatmul.mubr.f32.gmra.mrb[0].mxu0 %v676
    %v678 = vpop.f32.mrb[0].mxu0
    %v679 = vadd.f32 %v582, %v678
    %v680 = vpop.f32.mrb[0].mxu0
    %681 = vdwg.mxu0
    %682 = vmatprep.subr.mxu0 0.0
    %v683 = vand.u32 %v200, 4294901760
    %v684 = vsub.f32 %v200, %v683
    %v685 = vand.u32 %v684, 4294901760
    %686 = vmatpush1.msra.mxu0 %v685
    %687 = vmatprep.subr.mxu0 0.0
    %v688 = vand.u32 %v201, 4294901760
    %v689 = vsub.f32 %v201, %v688
    %v690 = vand.u32 %v689, 4294901760
    %691 = vmatpush1.msra.mxu0 %v690
    %692 = vmatprep.subr.mxu0 0.0
    %v693 = vand.u32 %v202, 4294901760
    %v694 = vsub.f32 %v202, %v693
    %v695 = vand.u32 %v694, 4294901760
    %696 = vmatpush1.msra.mxu0 %v695
    %697 = vmatprep.subr.mxu0 0.0
    %v698 = vand.u32 %v203, 4294901760
    %v699 = vsub.f32 %v203, %v698
    %v700 = vand.u32 %v699, 4294901760
    %701 = vmatpush1.msra.mxu0 %v700
    %702 = vmatprep.subr.mxu0 0.0
    %v703 = vand.u32 %v204, 4294901760
    %v704 = vsub.f32 %v204, %v703
    %v705 = vand.u32 %v704, 4294901760
    %706 = vmatpush1.msra.mxu0 %v705
    %707 = vmatprep.subr.mxu0 0.0
    %v708 = vand.u32 %v205, 4294901760
    %v709 = vsub.f32 %v205, %v708
    %v710 = vand.u32 %v709, 4294901760
    %711 = vmatpush1.msra.mxu0 %v710
    %712 = vmatprep.subr.mxu0 0.0
    %v713 = vand.u32 %v206, 4294901760
    %v714 = vsub.f32 %v206, %v713
    %v715 = vand.u32 %v714, 4294901760
    %716 = vmatpush1.msra.mxu0 %v715
    %717 = vmatprep.subr.mxu0 0.0
    %v718 = vand.u32 %v207, 4294901760
    %v719 = vsub.f32 %v207, %v718
    %v720 = vand.u32 %v719, 4294901760
    %721 = vmatpush1.msra.mxu0 %v720
    %722 = vmatprep.subr.mxu0 0.0
    %v723 = vand.u32 %v208, 4294901760
    %v724 = vsub.f32 %v208, %v723
    %v725 = vand.u32 %v724, 4294901760
    %726 = vmatpush1.msra.mxu0 %v725
    %727 = vmatprep.subr.mxu0 0.0
    %v728 = vand.u32 %v209, 4294901760
    %v729 = vsub.f32 %v209, %v728
    %v730 = vand.u32 %v729, 4294901760
    %731 = vmatpush1.msra.mxu0 %v730
    %732 = vmatprep.subr.mxu0 0.0
    %v733 = vand.u32 %v210, 4294901760
    %v734 = vsub.f32 %v210, %v733
    %v735 = vand.u32 %v734, 4294901760
    %736 = vmatpush1.msra.mxu0 %v735
    %737 = vmatprep.subr.mxu0 0.0
    %v738 = vand.u32 %v211, 4294901760
    %v739 = vsub.f32 %v211, %v738
    %v740 = vand.u32 %v739, 4294901760
    %741 = vmatpush1.msra.mxu0 %v740
    %742 = vmatprep.subr.mxu0 0.0
    %v743 = vand.u32 %v212, 4294901760
    %v744 = vsub.f32 %v212, %v743
    %v745 = vand.u32 %v744, 4294901760
    %746 = vmatpush1.msra.mxu0 %v745
    %747 = vmatprep.subr.mxu0 0.0
    %v748 = vand.u32 %v213, 4294901760
    %v749 = vsub.f32 %v213, %v748
    %v750 = vand.u32 %v749, 4294901760
    %751 = vmatpush1.msra.mxu0 %v750
    %752 = vmatprep.subr.mxu0 0.0
    %v753 = vand.u32 %v214, 4294901760
    %v754 = vsub.f32 %v214, %v753
    %v755 = vand.u32 %v754, 4294901760
    %756 = vmatpush1.msra.mxu0 %v755
    %757 = vmatprep.subr.mxu0 0.0
    %v758 = vand.u32 %v215, 4294901760
    %v759 = vsub.f32 %v215, %v758
    %v760 = vand.u32 %v759, 4294901760
    %761 = vmatpush1.msra.mxu0 %v760
    %762 = vmatprep.subr.mxu0 0.0
    %763 = vmatpush1.msra.mxu0 0.0
    %764 = vmatprep.subr.mxu0 0.0
    %765 = vmatpush1.msra.mxu0 0.0
    %766 = vmatprep.subr.mxu0 0.0
    %767 = vmatpush1.msra.mxu0 0.0
    %768 = vmatprep.subr.mxu0 0.0
    %769 = vmatpush1.msra.mxu0 0.0
    %770 = vmatprep.subr.mxu0 0.0
    %771 = vmatpush1.msra.mxu0 0.0
    %772 = vmatprep.subr.mxu0 0.0
    %773 = vmatpush1.msra.mxu0 0.0
    %774 = vmatprep.subr.mxu0 0.0
    %775 = vmatpush1.msra.mxu0 0.0
    %776 = vmatprep.subr.mxu0 0.0
    %777 = vmatpush1.msra.mxu0 0.0
    %778 = vmatprep.subr.mxu0 0.0
    %779 = vmatpush1.msra.mxu0 0.0
    %780 = vmatprep.subr.mxu0 0.0
    %781 = vmatpush1.msra.mxu0 0.0
    %782 = vmatprep.subr.mxu0 0.0
    %783 = vmatpush1.msra.mxu0 0.0
    %784 = vmatprep.subr.mxu0 0.0
    %785 = vmatpush1.msra.mxu0 0.0
    %786 = vmatprep.subr.mxu0 0.0
    %787 = vmatpush1.msra.mxu0 0.0
    %788 = vmatprep.subr.mxu0 0.0
    %789 = vmatpush1.msra.mxu0 0.0
    %790 = vmatprep.subr.mxu0 0.0
    %791 = vmatpush1.msra.mxu0 0.0
    %792 = vmatprep.subr.mxu0 0.0
    %793 = vmatpush1.msra.mxu0 0.0
    %794 = vmatprep.mubr.f32.mxu0 0.0
    %v795 = vand.u32 %v178, 4294901760
    %796 = vmatmul.mubr.f32.gmra.mrb[0].mxu0 %v795
    %v797 = vpop.f32.mrb[0].mxu0
    %v798 = vadd.f32 %v671, %v797
    %v799 = vpop.f32.mrb[0].mxu0
    %800 = vmatprep.mubr.f32.mxu0 0.0
    %v801 = vand.u32 %v179, 4294901760
    %802 = vmatmul.mubr.f32.gmra.mrb[0].mxu0 %v801
    %v803 = vpop.f32.mrb[0].mxu0
    %v804 = vadd.f32 %v679, %v803
    %v805 = vpop.f32.mrb[0].mxu0
    %806 = vdwg.mxu0
    %807 = vmatprep.subr.mxu0 0.0
    %v808 = vand.u32 %v200, 4294901760
    %809 = vmatpush1.msra.mxu0 %v808
    %810 = vmatprep.subr.mxu0 0.0
    %v811 = vand.u32 %v201, 4294901760
    %812 = vmatpush1.msra.mxu0 %v811
    %813 = vmatprep.subr.mxu0 0.0
    %v814 = vand.u32 %v202, 4294901760
    %815 = vmatpush1.msra.mxu0 %v814
    %816 = vmatprep.subr.mxu0 0.0
    %v817 = vand.u32 %v203, 4294901760
    %818 = vmatpush1.msra.mxu0 %v817
    %819 = vmatprep.subr.mxu0 0.0
    %v820 = vand.u32 %v204, 4294901760
    %821 = vmatpush1.msra.mxu0 %v820
    %822 = vmatprep.subr.mxu0 0.0
    %v823 = vand.u32 %v205, 4294901760
    %824 = vmatpush1.msra.mxu0 %v823
    %825 = vmatprep.subr.mxu0 0.0
    %v826 = vand.u32 %v206, 4294901760
    %827 = vmatpush1.msra.mxu0 %v826
    %828 = vmatprep.subr.mxu0 0.0
    %v829 = vand.u32 %v207, 4294901760
    %830 = vmatpush1.msra.mxu0 %v829
    %831 = vmatprep.subr.mxu0 0.0
    %v832 = vand.u32 %v208, 4294901760
    %833 = vmatpush1.msra.mxu0 %v832
    %834 = vmatprep.subr.mxu0 0.0
    %v835 = vand.u32 %v209, 4294901760
    %836 = vmatpush1.msra.mxu0 %v835
    %837 = vmatprep.subr.mxu0 0.0
    %v838 = vand.u32 %v210, 4294901760
    %839 = vmatpush1.msra.mxu0 %v838
    %840 = vmatprep.subr.mxu0 0.0
    %v841 = vand.u32 %v211, 4294901760
    %842 = vmatpush1.msra.mxu0 %v841
    %843 = vmatprep.subr.mxu0 0.0
    %v844 = vand.u32 %v212, 4294901760
    %845 = vmatpush1.msra.mxu0 %v844
    %846 = vmatprep.subr.mxu0 0.0
    %v847 = vand.u32 %v213, 4294901760
    %848 = vmatpush1.msra.mxu0 %v847
    %849 = vmatprep.subr.mxu0 0.0
    %v850 = vand.u32 %v214, 4294901760
    %851 = vmatpush1.msra.mxu0 %v850
    %852 = vmatprep.subr.mxu0 0.0
    %v853 = vand.u32 %v215, 4294901760
    %854 = vmatpush1.msra.mxu0 %v853
    %855 = vmatprep.subr.mxu0 0.0
    %856 = vmatpush1.msra.mxu0 0.0
    %857 = vmatprep.subr.mxu0 0.0
    %858 = vmatpush1.msra.mxu0 0.0
    %859 = vmatprep.subr.mxu0 0.0
    %860 = vmatpush1.msra.mxu0 0.0
    %861 = vmatprep.subr.mxu0 0.0
    %862 = vmatpush1.msra.mxu0 0.0
    %863 = vmatprep.subr.mxu0 0.0
    %864 = vmatpush1.msra.mxu0 0.0
    %865 = vmatprep.subr.mxu0 0.0
    %866 = vmatpush1.msra.mxu0 0.0
    %867 = vmatprep.subr.mxu0 0.0
    %868 = vmatpush1.msra.mxu0 0.0
    %869 = vmatprep.subr.mxu0 0.0
    %870 = vmatpush1.msra.mxu0 0.0
    %871 = vmatprep.subr.mxu0 0.0
    %872 = vmatpush1.msra.mxu0 0.0
    %873 = vmatprep.subr.mxu0 0.0
    %874 = vmatpush1.msra.mxu0 0.0
    %875 = vmatprep.subr.mxu0 0.0
    %876 = vmatpush1.msra.mxu0 0.0
    %877 = vmatprep.subr.mxu0 0.0
    %878 = vmatpush1.msra.mxu0 0.0
    %879 = vmatprep.subr.mxu0 0.0
    %880 = vmatpush1.msra.mxu0 0.0
    %881 = vmatprep.subr.mxu0 0.0
    %882 = vmatpush1.msra.mxu0 0.0
    %883 = vmatprep.subr.mxu0 0.0
    %884 = vmatpush1.msra.mxu0 0.0
    %885 = vmatprep.subr.mxu0 0.0
    %886 = vmatpush1.msra.mxu0 0.0
    %887 = vmatprep.mubr.f32.mxu0 0.0
    %v888 = vand.u32 %v178, 4294901760
    %889 = vmatmul.mubr.f32.gmra.mrb[0].mxu0 %v888
    %v890 = vpop.f32.mrb[0].mxu0
    %v891 = vadd.f32 %v798, %v890
    %v892 = vpop.f32.mrb[0].mxu0
    %893 = vmatprep.mubr.f32.mxu0 0.0
    %v894 = vand.u32 %v179, 4294901760
    %895 = vmatmul.mubr.f32.gmra.mrb[0].mxu0 %v894
    %v896 = vpop.f32.mrb[0].mxu0
    %v897 = vadd.f32 %v804, %v896
    %v898 = vpop.f32.mrb[0].mxu0
    %899 = vdwg.mxu0
    %900 = vmatprep.subr.mxu0 0.0
    %v901 = vand.u32 %v200, 4294901760
    %902 = vmatpush1.msra.mxu0 %v901
    %903 = vmatprep.subr.mxu0 0.0
    %v904 = vand.u32 %v201, 4294901760
    %905 = vmatpush1.msra.mxu0 %v904
    %906 = vmatprep.subr.mxu0 0.0
    %v907 = vand.u32 %v202, 4294901760
    %908 = vmatpush1.msra.mxu0 %v907
    %909 = vmatprep.subr.mxu0 0.0
    %v910 = vand.u32 %v203, 4294901760
    %911 = vmatpush1.msra.mxu0 %v910
    %912 = vmatprep.subr.mxu0 0.0
    %v913 = vand.u32 %v204, 4294901760
    %914 = vmatpush1.msra.mxu0 %v913
    %915 = vmatprep.subr.mxu0 0.0
    %v916 = vand.u32 %v205, 4294901760
    %917 = vmatpush1.msra.mxu0 %v916
    %918 = vmatprep.subr.mxu0 0.0
    %v919 = vand.u32 %v206, 4294901760
    %920 = vmatpush1.msra.mxu0 %v919
    %921 = vmatprep.subr.mxu0 0.0
    %v922 = vand.u32 %v207, 4294901760
    %923 = vmatpush1.msra.mxu0 %v922
    %924 = vmatprep.subr.mxu0 0.0
    %v925 = vand.u32 %v208, 4294901760
    %926 = vmatpush1.msra.mxu0 %v925
    %927 = vmatprep.subr.mxu0 0.0
    %v928 = vand.u32 %v209, 4294901760
    %929 = vmatpush1.msra.mxu0 %v928
    %930 = vmatprep.subr.mxu0 0.0
    %v931 = vand.u32 %v210, 4294901760
    %932 = vmatpush1.msra.mxu0 %v931
    %933 = vmatprep.subr.mxu0 0.0
    %v934 = vand.u32 %v211, 4294901760
    %935 = vmatpush1.msra.mxu0 %v934
    %936 = vmatprep.subr.mxu0 0.0
    %v937 = vand.u32 %v212, 4294901760
    %938 = vmatpush1.msra.mxu0 %v937
    %939 = vmatprep.subr.mxu0 0.0
    %v940 = vand.u32 %v213, 4294901760
    %941 = vmatpush1.msra.mxu0 %v940
    %942 = vmatprep.subr.mxu0 0.0
    %v943 = vand.u32 %v214, 4294901760
    %944 = vmatpush1.msra.mxu0 %v943
    %945 = vmatprep.subr.mxu0 0.0
    %v946 = vand.u32 %v215, 4294901760
    %947 = vmatpush1.msra.mxu0 %v946
    %948 = vmatprep.subr.mxu0 0.0
    %949 = vmatpush1.msra.mxu0 0.0
    %950 = vmatprep.subr.mxu0 0.0
    %951 = vmatpush1.msra.mxu0 0.0
    %952 = vmatprep.subr.mxu0 0.0
    %953 = vmatpush1.msra.mxu0 0.0
    %954 = vmatprep.subr.mxu0 0.0
    %955 = vmatpush1.msra.mxu0 0.0
    %956 = vmatprep.subr.mxu0 0.0
    %957 = vmatpush1.msra.mxu0 0.0
    %958 = vmatprep.subr.mxu0 0.0
    %959 = vmatpush1.msra.mxu0 0.0
    %960 = vmatprep.subr.mxu0 0.0
    %961 = vmatpush1.msra.mxu0 0.0
    %962 = vmatprep.subr.mxu0 0.0
    %963 = vmatpush1.msra.mxu0 0.0
    %964 = vmatprep.subr.mxu0 0.0
    %965 = vmatpush1.msra.mxu0 0.0
    %966 = vmatprep.subr.mxu0 0.0
    %967 = vmatpush1.msra.mxu0 0.0
    %968 = vmatprep.subr.mxu0 0.0
    %969 = vmatpush1.msra.mxu0 0.0
    %970 = vmatprep.subr.mxu0 0.0
    %971 = vmatpush1.msra.mxu0 0.0
    %972 = vmatprep.subr.mxu0 0.0
    %973 = vmatpush1.msra.mxu0 0.0
    %974 = vmatprep.subr.mxu0 0.0
    %975 = vmatpush1.msra.mxu0 0.0
    %976 = vmatprep.subr.mxu0 0.0
    %977 = vmatpush1.msra.mxu0 0.0
    %978 = vmatprep.subr.mxu0 0.0
    %979 = vmatpush1.msra.mxu0 0.0
    %980 = vmatprep.mubr.f32.mxu0 0.0
    %v981 = vand.u32 %v198, 4294901760
    %v982 = vsub.f32 %v198, %v981
    %v983 = vand.u32 %v982, 4294901760
    %v984 = vsub.f32 %v982, %v983
    %v985 = vand.u32 %v984, 4294901760
    %986 = vmatmul.mubr.f32.gmra.mrb[0].mxu0 %v985
    %v987 = vpop.f32.mrb[0].mxu0
    %v988 = vadd.f32 0.0, %v987
    %v989 = vpop.f32.mrb[0].mxu0
    %990 = vmatprep.mubr.f32.mxu0 0.0
    %v991 = vand.u32 %v199, 4294901760
    %v992 = vsub.f32 %v199, %v991
    %v993 = vand.u32 %v992, 4294901760
    %v994 = vsub.f32 %v992, %v993
    %v995 = vand.u32 %v994, 4294901760
    %996 = vmatmul.mubr.f32.gmra.mrb[0].mxu0 %v995
    %v997 = vpop.f32.mrb[0].mxu0
    %v998 = vadd.f32 0.0, %v997
    %v999 = vpop.f32.mrb[0].mxu0
    %1000 = vdwg.mxu0
    %1001 = vmatprep.subr.mxu0 0.0
    %v1002 = vand.u32 %v200, 4294901760
    %v1003 = vsub.f32 %v200, %v1002
    %v1004 = vand.u32 %v1003, 4294901760
    %v1005 = vsub.f32 %v1003, %v1004
    %v1006 = vand.u32 %v1005, 4294901760
    %1007 = vmatpush1.msra.mxu0 %v1006
    %1008 = vmatprep.subr.mxu0 0.0
    %v1009 = vand.u32 %v201, 4294901760
    %v1010 = vsub.f32 %v201, %v1009
    %v1011 = vand.u32 %v1010, 4294901760
    %v1012 = vsub.f32 %v1010, %v1011
    %v1013 = vand.u32 %v1012, 4294901760
    %1014 = vmatpush1.msra.mxu0 %v1013
    %1015 = vmatprep.subr.mxu0 0.0
    %v1016 = vand.u32 %v202, 4294901760
    %v1017 = vsub.f32 %v202, %v1016
    %v1018 = vand.u32 %v1017, 4294901760
    %v1019 = vsub.f32 %v1017, %v1018
    %v1020 = vand.u32 %v1019, 4294901760
    %1021 = vmatpush1.msra.mxu0 %v1020
    %1022 = vmatprep.subr.mxu0 0.0
    %v1023 = vand.u32 %v203, 4294901760
    %v1024 = vsub.f32 %v203, %v1023
    %v1025 = vand.u32 %v1024, 4294901760
    %v1026 = vsub.f32 %v1024, %v1025
    %v1027 = vand.u32 %v1026, 4294901760
    %1028 = vmatpush1.msra.mxu0 %v1027
    %1029 = vmatprep.subr.mxu0 0.0
    %v1030 = vand.u32 %v204, 4294901760
    %v1031 = vsub.f32 %v204, %v1030
    %v1032 = vand.u32 %v1031, 4294901760
    %v1033 = vsub.f32 %v1031, %v1032
    %v1034 = vand.u32 %v1033, 4294901760
    %1035 = vmatpush1.msra.mxu0 %v1034
    %1036 = vmatprep.subr.mxu0 0.0
    %v1037 = vand.u32 %v205, 4294901760
    %v1038 = vsub.f32 %v205, %v1037
    %v1039 = vand.u32 %v1038, 4294901760
    %v1040 = vsub.f32 %v1038, %v1039
    %v1041 = vand.u32 %v1040, 4294901760
    %1042 = vmatpush1.msra.mxu0 %v1041
    %1043 = vmatprep.subr.mxu0 0.0
    %v1044 = vand.u32 %v206, 4294901760
    %v1045 = vsub.f32 %v206, %v1044
    %v1046 = vand.u32 %v1045, 4294901760
    %v1047 = vsub.f32 %v1045, %v1046
    %v1048 = vand.u32 %v1047, 4294901760
    %1049 = vmatpush1.msra.mxu0 %v1048
    %1050 = vmatprep.subr.mxu0 0.0
    %v1051 = vand.u32 %v207, 4294901760
    %v1052 = vsub.f32 %v207, %v1051
    %v1053 = vand.u32 %v1052, 4294901760
    %v1054 = vsub.f32 %v1052, %v1053
    %v1055 = vand.u32 %v1054, 4294901760
    %1056 = vmatpush1.msra.mxu0 %v1055
    %1057 = vmatprep.subr.mxu0 0.0
    %v1058 = vand.u32 %v208, 4294901760
    %v1059 = vsub.f32 %v208, %v1058
    %v1060 = vand.u32 %v1059, 4294901760
    %v1061 = vsub.f32 %v1059, %v1060
    %v1062 = vand.u32 %v1061, 4294901760
    %1063 = vmatpush1.msra.mxu0 %v1062
    %1064 = vmatprep.subr.mxu0 0.0
    %v1065 = vand.u32 %v209, 4294901760
    %v1066 = vsub.f32 %v209, %v1065
    %v1067 = vand.u32 %v1066, 4294901760
    %v1068 = vsub.f32 %v1066, %v1067
    %v1069 = vand.u32 %v1068, 4294901760
    %1070 = vmatpush1.msra.mxu0 %v1069
    %1071 = vmatprep.subr.mxu0 0.0
    %v1072 = vand.u32 %v210, 4294901760
    %v1073 = vsub.f32 %v210, %v1072
    %v1074 = vand.u32 %v1073, 4294901760
    %v1075 = vsub.f32 %v1073, %v1074
    %v1076 = vand.u32 %v1075, 4294901760
    %1077 = vmatpush1.msra.mxu0 %v1076
    %1078 = vmatprep.subr.mxu0 0.0
    %v1079 = vand.u32 %v211, 4294901760
    %v1080 = vsub.f32 %v211, %v1079
    %v1081 = vand.u32 %v1080, 4294901760
    %v1082 = vsub.f32 %v1080, %v1081
    %v1083 = vand.u32 %v1082, 4294901760
    %1084 = vmatpush1.msra.mxu0 %v1083
    %1085 = vmatprep.subr.mxu0 0.0
    %v1086 = vand.u32 %v212, 4294901760
    %v1087 = vsub.f32 %v212, %v1086
    %v1088 = vand.u32 %v1087, 4294901760
    %v1089 = vsub.f32 %v1087, %v1088
    %v1090 = vand.u32 %v1089, 4294901760
    %1091 = vmatpush1.msra.mxu0 %v1090
    %1092 = vmatprep.subr.mxu0 0.0
    %v1093 = vand.u32 %v213, 4294901760
    %v1094 = vsub.f32 %v213, %v1093
    %v1095 = vand.u32 %v1094, 4294901760
    %v1096 = vsub.f32 %v1094, %v1095
    %v1097 = vand.u32 %v1096, 4294901760
    %1098 = vmatpush1.msra.mxu0 %v1097
    %1099 = vmatprep.subr.mxu0 0.0
    %v1100 = vand.u32 %v214, 4294901760
    %v1101 = vsub.f32 %v214, %v1100
    %v1102 = vand.u32 %v1101, 4294901760
    %v1103 = vsub.f32 %v1101, %v1102
    %v1104 = vand.u32 %v1103, 4294901760
    %1105 = vmatpush1.msra.mxu0 %v1104
    %1106 = vmatprep.subr.mxu0 0.0
    %v1107 = vand.u32 %v215, 4294901760
    %v1108 = vsub.f32 %v215, %v1107
    %v1109 = vand.u32 %v1108, 4294901760
    %v1110 = vsub.f32 %v1108, %v1109
    %v1111 = vand.u32 %v1110, 4294901760
    %1112 = vmatpush1.msra.mxu0 %v1111
    %1113 = vmatprep.subr.mxu0 0.0
    %1114 = vmatpush1.msra.mxu0 0.0
    %1115 = vmatprep.subr.mxu0 0.0
    %1116 = vmatpush1.msra.mxu0 0.0
    %1117 = vmatprep.subr.mxu0 0.0
    %1118 = vmatpush1.msra.mxu0 0.0
    %1119 = vmatprep.subr.mxu0 0.0
    %1120 = vmatpush1.msra.mxu0 0.0
    %1121 = vmatprep.subr.mxu0 0.0
    %1122 = vmatpush1.msra.mxu0 0.0
    %1123 = vmatprep.subr.mxu0 0.0
    %1124 = vmatpush1.msra.mxu0 0.0
    %1125 = vmatprep.subr.mxu0 0.0
    %1126 = vmatpush1.msra.mxu0 0.0
    %1127 = vmatprep.subr.mxu0 0.0
    %1128 = vmatpush1.msra.mxu0 0.0
    %1129 = vmatprep.subr.mxu0 0.0
    %1130 = vmatpush1.msra.mxu0 0.0
    %1131 = vmatprep.subr.mxu0 0.0
    %1132 = vmatpush1.msra.mxu0 0.0
    %1133 = vmatprep.subr.mxu0 0.0
    %1134 = vmatpush1.msra.mxu0 0.0
    %1135 = vmatprep.subr.mxu0 0.0
    %1136 = vmatpush1.msra.mxu0 0.0
    %1137 = vmatprep.subr.mxu0 0.0
    %1138 = vmatpush1.msra.mxu0 0.0
    %1139 = vmatprep.subr.mxu0 0.0
    %1140 = vmatpush1.msra.mxu0 0.0
    %1141 = vmatprep.subr.mxu0 0.0
    %1142 = vmatpush1.msra.mxu0 0.0
    %1143 = vmatprep.subr.mxu0 0.0
    %1144 = vmatpush1.msra.mxu0 0.0
    %1145 = vmatprep.mubr.f32.mxu0 0.0
    %v1146 = vand.u32 %v198, 4294901760
    %1147 = vmatmul.mubr.f32.gmra.mrb[0].mxu0 %v1146
    %v1148 = vpop.f32.mrb[0].mxu0
    %v1149 = vadd.f32 %v988, %v1148
    %v1150 = vpop.f32.mrb[0].mxu0
    %1151 = vmatprep.mubr.f32.mxu0 0.0
    %v1152 = vand.u32 %v199, 4294901760
    %1153 = vmatmul.mubr.f32.gmra.mrb[0].mxu0 %v1152
    %v1154 = vpop.f32.mrb[0].mxu0
    %v1155 = vadd.f32 %v998, %v1154
    %v1156 = vpop.f32.mrb[0].mxu0
    %1157 = vdwg.mxu0
    %1158 = vmatprep.subr.mxu0 0.0
    %v1159 = vand.u32 %v200, 4294901760
    %v1160 = vsub.f32 %v200, %v1159
    %1161 = vmatpush1.msra.mxu0 %v1160
    %1162 = vmatprep.subr.mxu0 0.0
    %v1163 = vand.u32 %v201, 4294901760
    %v1164 = vsub.f32 %v201, %v1163
    %1165 = vmatpush1.msra.mxu0 %v1164
    %1166 = vmatprep.subr.mxu0 0.0
    %v1167 = vand.u32 %v202, 4294901760
    %v1168 = vsub.f32 %v202, %v1167
    %1169 = vmatpush1.msra.mxu0 %v1168
    %1170 = vmatprep.subr.mxu0 0.0
    %v1171 = vand.u32 %v203, 4294901760
    %v1172 = vsub.f32 %v203, %v1171
    %1173 = vmatpush1.msra.mxu0 %v1172
    %1174 = vmatprep.subr.mxu0 0.0
    %v1175 = vand.u32 %v204, 4294901760
    %v1176 = vsub.f32 %v204, %v1175
    %1177 = vmatpush1.msra.mxu0 %v1176
    %1178 = vmatprep.subr.mxu0 0.0
    %v1179 = vand.u32 %v205, 4294901760
    %v1180 = vsub.f32 %v205, %v1179
    %1181 = vmatpush1.msra.mxu0 %v1180
    %1182 = vmatprep.subr.mxu0 0.0
    %v1183 = vand.u32 %v206, 4294901760
    %v1184 = vsub.f32 %v206, %v1183
    %1185 = vmatpush1.msra.mxu0 %v1184
    %1186 = vmatprep.subr.mxu0 0.0
    %v1187 = vand.u32 %v207, 4294901760
    %v1188 = vsub.f32 %v207, %v1187
    %1189 = vmatpush1.msra.mxu0 %v1188
    %1190 = vmatprep.subr.mxu0 0.0
    %v1191 = vand.u32 %v208, 4294901760
    %v1192 = vsub.f32 %v208, %v1191
    %1193 = vmatpush1.msra.mxu0 %v1192
    %1194 = vmatprep.subr.mxu0 0.0
    %v1195 = vand.u32 %v209, 4294901760
    %v1196 = vsub.f32 %v209, %v1195
    %1197 = vmatpush1.msra.mxu0 %v1196
    %1198 = vmatprep.subr.mxu0 0.0
    %v1199 = vand.u32 %v210, 4294901760
    %v1200 = vsub.f32 %v210, %v1199
    %1201 = vmatpush1.msra.mxu0 %v1200
    %1202 = vmatprep.subr.mxu0 0.0
    %v1203 = vand.u32 %v211, 4294901760
    %v1204 = vsub.f32 %v211, %v1203
    %1205 = vmatpush1.msra.mxu0 %v1204
    %1206 = vmatprep.subr.mxu0 0.0
    %v1207 = vand.u32 %v212, 4294901760
    %v1208 = vsub.f32 %v212, %v1207
    %1209 = vmatpush1.msra.mxu0 %v1208
    %1210 = vmatprep.subr.mxu0 0.0
    %v1211 = vand.u32 %v213, 4294901760
    %v1212 = vsub.f32 %v213, %v1211
    %1213 = vmatpush1.msra.mxu0 %v1212
    %1214 = vmatprep.subr.mxu0 0.0
    %v1215 = vand.u32 %v214, 4294901760
    %v1216 = vsub.f32 %v214, %v1215
    %1217 = vmatpush1.msra.mxu0 %v1216
    %1218 = vmatprep.subr.mxu0 0.0
    %v1219 = vand.u32 %v215, 4294901760
    %v1220 = vsub.f32 %v215, %v1219
    %1221 = vmatpush1.msra.mxu0 %v1220
    %1222 = vmatprep.subr.mxu0 0.0
    %1223 = vmatpush1.msra.mxu0 0.0
    %1224 = vmatprep.subr.mxu0 0.0
    %1225 = vmatpush1.msra.mxu0 0.0
    %1226 = vmatprep.subr.mxu0 0.0
    %1227 = vmatpush1.msra.mxu0 0.0
    %1228 = vmatprep.subr.mxu0 0.0
    %1229 = vmatpush1.msra.mxu0 0.0
    %1230 = vmatprep.subr.mxu0 0.0
    %1231 = vmatpush1.msra.mxu0 0.0
    %1232 = vmatprep.subr.mxu0 0.0
    %1233 = vmatpush1.msra.mxu0 0.0
    %1234 = vmatprep.subr.mxu0 0.0
    %1235 = vmatpush1.msra.mxu0 0.0
    %1236 = vmatprep.subr.mxu0 0.0
    %1237 = vmatpush1.msra.mxu0 0.0
    %1238 = vmatprep.subr.mxu0 0.0
    %1239 = vmatpush1.msra.mxu0 0.0
    %1240 = vmatprep.subr.mxu0 0.0
    %1241 = vmatpush1.msra.mxu0 0.0
    %1242 = vmatprep.subr.mxu0 0.0
    %1243 = vmatpush1.msra.mxu0 0.0
    %1244 = vmatprep.subr.mxu0 0.0
    %1245 = vmatpush1.msra.mxu0 0.0
    %1246 = vmatprep.subr.mxu0 0.0
    %1247 = vmatpush1.msra.mxu0 0.0
    %1248 = vmatprep.subr.mxu0 0.0
    %1249 = vmatpush1.msra.mxu0 0.0
    %1250 = vmatprep.subr.mxu0 0.0
    %1251 = vmatpush1.msra.mxu0 0.0
    %1252 = vmatprep.subr.mxu0 0.0
    %1253 = vmatpush1.msra.mxu0 0.0
    %1254 = vmatprep.mubr.f32.mxu0 0.0
    %v1255 = vand.u32 %v198, 4294901760
    %v1256 = vsub.f32 %v198, %v1255
    %1257 = vmatmul.mubr.f32.gmra.mrb[0].mxu0 %v1256
    %v1258 = vpop.f32.mrb[0].mxu0
    %v1259 = vadd.f32 %v1149, %v1258
    %v1260 = vpop.f32.mrb[0].mxu0
    %1261 = vmatprep.mubr.f32.mxu0 0.0
    %v1262 = vand.u32 %v199, 4294901760
    %v1263 = vsub.f32 %v199, %v1262
    %1264 = vmatmul.mubr.f32.gmra.mrb[0].mxu0 %v1263
    %v1265 = vpop.f32.mrb[0].mxu0
    %v1266 = vadd.f32 %v1155, %v1265
    %v1267 = vpop.f32.mrb[0].mxu0
    %1268 = vdwg.mxu0
    %1269 = vmatprep.subr.mxu0 0.0
    %v1270 = vand.u32 %v200, 4294901760
    %1271 = vmatpush1.msra.mxu0 %v1270
    %1272 = vmatprep.subr.mxu0 0.0
    %v1273 = vand.u32 %v201, 4294901760
    %1274 = vmatpush1.msra.mxu0 %v1273
    %1275 = vmatprep.subr.mxu0 0.0
    %v1276 = vand.u32 %v202, 4294901760
    %1277 = vmatpush1.msra.mxu0 %v1276
    %1278 = vmatprep.subr.mxu0 0.0
    %v1279 = vand.u32 %v203, 4294901760
    %1280 = vmatpush1.msra.mxu0 %v1279
    %1281 = vmatprep.subr.mxu0 0.0
    %v1282 = vand.u32 %v204, 4294901760
    %1283 = vmatpush1.msra.mxu0 %v1282
    %1284 = vmatprep.subr.mxu0 0.0
    %v1285 = vand.u32 %v205, 4294901760
    %1286 = vmatpush1.msra.mxu0 %v1285
    %1287 = vmatprep.subr.mxu0 0.0
    %v1288 = vand.u32 %v206, 4294901760
    %1289 = vmatpush1.msra.mxu0 %v1288
    %1290 = vmatprep.subr.mxu0 0.0
    %v1291 = vand.u32 %v207, 4294901760
    %1292 = vmatpush1.msra.mxu0 %v1291
    %1293 = vmatprep.subr.mxu0 0.0
    %v1294 = vand.u32 %v208, 4294901760
    %1295 = vmatpush1.msra.mxu0 %v1294
    %1296 = vmatprep.subr.mxu0 0.0
    %v1297 = vand.u32 %v209, 4294901760
    %1298 = vmatpush1.msra.mxu0 %v1297
    %1299 = vmatprep.subr.mxu0 0.0
    %v1300 = vand.u32 %v210, 4294901760
    %1301 = vmatpush1.msra.mxu0 %v1300
    %1302 = vmatprep.subr.mxu0 0.0
    %v1303 = vand.u32 %v211, 4294901760
    %1304 = vmatpush1.msra.mxu0 %v1303
    %1305 = vmatprep.subr.mxu0 0.0
    %v1306 = vand.u32 %v212, 4294901760
    %1307 = vmatpush1.msra.mxu0 %v1306
    %1308 = vmatprep.subr.mxu0 0.0
    %v1309 = vand.u32 %v213, 4294901760
    %1310 = vmatpush1.msra.mxu0 %v1309
    %1311 = vmatprep.subr.mxu0 0.0
    %v1312 = vand.u32 %v214, 4294901760
    %1313 = vmatpush1.msra.mxu0 %v1312
    %1314 = vmatprep.subr.mxu0 0.0
    %v1315 = vand.u32 %v215, 4294901760
    %1316 = vmatpush1.msra.mxu0 %v1315
    %1317 = vmatprep.subr.mxu0 0.0
    %1318 = vmatpush1.msra.mxu0 0.0
    %1319 = vmatprep.subr.mxu0 0.0
    %1320 = vmatpush1.msra.mxu0 0.0
    %1321 = vmatprep.subr.mxu0 0.0
    %1322 = vmatpush1.msra.mxu0 0.0
    %1323 = vmatprep.subr.mxu0 0.0
    %1324 = vmatpush1.msra.mxu0 0.0
    %1325 = vmatprep.subr.mxu0 0.0
    %1326 = vmatpush1.msra.mxu0 0.0
    %1327 = vmatprep.subr.mxu0 0.0
    %1328 = vmatpush1.msra.mxu0 0.0
    %1329 = vmatprep.subr.mxu0 0.0
    %1330 = vmatpush1.msra.mxu0 0.0
    %1331 = vmatprep.subr.mxu0 0.0
    %1332 = vmatpush1.msra.mxu0 0.0
    %1333 = vmatprep.subr.mxu0 0.0
    %1334 = vmatpush1.msra.mxu0 0.0
    %1335 = vmatprep.subr.mxu0 0.0
    %1336 = vmatpush1.msra.mxu0 0.0
    %1337 = vmatprep.subr.mxu0 0.0
    %1338 = vmatpush1.msra.mxu0 0.0
    %1339 = vmatprep.subr.mxu0 0.0
    %1340 = vmatpush1.msra.mxu0 0.0
    %1341 = vmatprep.subr.mxu0 0.0
    %1342 = vmatpush1.msra.mxu0 0.0
    %1343 = vmatprep.subr.mxu0 0.0
    %1344 = vmatpush1.msra.mxu0 0.0
    %1345 = vmatprep.subr.mxu0 0.0
    %1346 = vmatpush1.msra.mxu0 0.0
    %1347 = vmatprep.subr.mxu0 0.0
    %1348 = vmatpush1.msra.mxu0 0.0
    %1349 = vmatprep.mubr.f32.mxu0 0.0
    %v1350 = vand.u32 %v198, 4294901760
    %v1351 = vsub.f32 %v198, %v1350
    %v1352 = vand.u32 %v1351, 4294901760
    %1353 = vmatmul.mubr.f32.gmra.mrb[0].mxu0 %v1352
    %v1354 = vpop.f32.mrb[0].mxu0
    %v1355 = vadd.f32 %v1259, %v1354
    %v1356 = vpop.f32.mrb[0].mxu0
    %1357 = vmatprep.mubr.f32.mxu0 0.0
    %v1358 = vand.u32 %v199, 4294901760
    %v1359 = vsub.f32 %v199, %v1358
    %v1360 = vand.u32 %v1359, 4294901760
    %1361 = vmatmul.mubr.f32.gmra.mrb[0].mxu0 %v1360
    %v1362 = vpop.f32.mrb[0].mxu0
    %v1363 = vadd.f32 %v1266, %v1362
    %v1364 = vpop.f32.mrb[0].mxu0
    %1365 = vdwg.mxu0
    %1366 = vmatprep.subr.mxu0 0.0
    %v1367 = vand.u32 %v200, 4294901760
    %v1368 = vsub.f32 %v200, %v1367
    %v1369 = vand.u32 %v1368, 4294901760
    %1370 = vmatpush1.msra.mxu0 %v1369
    %1371 = vmatprep.subr.mxu0 0.0
    %v1372 = vand.u32 %v201, 4294901760
    %v1373 = vsub.f32 %v201, %v1372
    %v1374 = vand.u32 %v1373, 4294901760
    %1375 = vmatpush1.msra.mxu0 %v1374
    %1376 = vmatprep.subr.mxu0 0.0
    %v1377 = vand.u32 %v202, 4294901760
    %v1378 = vsub.f32 %v202, %v1377
    %v1379 = vand.u32 %v1378, 4294901760
    %1380 = vmatpush1.msra.mxu0 %v1379
    %1381 = vmatprep.subr.mxu0 0.0
    %v1382 = vand.u32 %v203, 4294901760
    %v1383 = vsub.f32 %v203, %v1382
    %v1384 = vand.u32 %v1383, 4294901760
    %1385 = vmatpush1.msra.mxu0 %v1384
    %1386 = vmatprep.subr.mxu0 0.0
    %v1387 = vand.u32 %v204, 4294901760
    %v1388 = vsub.f32 %v204, %v1387
    %v1389 = vand.u32 %v1388, 4294901760
    %1390 = vmatpush1.msra.mxu0 %v1389
    %1391 = vmatprep.subr.mxu0 0.0
    %v1392 = vand.u32 %v205, 4294901760
    %v1393 = vsub.f32 %v205, %v1392
    %v1394 = vand.u32 %v1393, 4294901760
    %1395 = vmatpush1.msra.mxu0 %v1394
    %1396 = vmatprep.subr.mxu0 0.0
    %v1397 = vand.u32 %v206, 4294901760
    %v1398 = vsub.f32 %v206, %v1397
    %v1399 = vand.u32 %v1398, 4294901760
    %1400 = vmatpush1.msra.mxu0 %v1399
    %1401 = vmatprep.subr.mxu0 0.0
    %v1402 = vand.u32 %v207, 4294901760
    %v1403 = vsub.f32 %v207, %v1402
    %v1404 = vand.u32 %v1403, 4294901760
    %1405 = vmatpush1.msra.mxu0 %v1404
    %1406 = vmatprep.subr.mxu0 0.0
    %v1407 = vand.u32 %v208, 4294901760
    %v1408 = vsub.f32 %v208, %v1407
    %v1409 = vand.u32 %v1408, 4294901760
    %1410 = vmatpush1.msra.mxu0 %v1409
    %1411 = vmatprep.subr.mxu0 0.0
    %v1412 = vand.u32 %v209, 4294901760
    %v1413 = vsub.f32 %v209, %v1412
    %v1414 = vand.u32 %v1413, 4294901760
    %1415 = vmatpush1.msra.mxu0 %v1414
    %1416 = vmatprep.subr.mxu0 0.0
    %v1417 = vand.u32 %v210, 4294901760
    %v1418 = vsub.f32 %v210, %v1417
    %v1419 = vand.u32 %v1418, 4294901760
    %1420 = vmatpush1.msra.mxu0 %v1419
    %1421 = vmatprep.subr.mxu0 0.0
    %v1422 = vand.u32 %v211, 4294901760
    %v1423 = vsub.f32 %v211, %v1422
    %v1424 = vand.u32 %v1423, 4294901760
    %1425 = vmatpush1.msra.mxu0 %v1424
    %1426 = vmatprep.subr.mxu0 0.0
    %v1427 = vand.u32 %v212, 4294901760
    %v1428 = vsub.f32 %v212, %v1427
    %v1429 = vand.u32 %v1428, 4294901760
    %1430 = vmatpush1.msra.mxu0 %v1429
    %1431 = vmatprep.subr.mxu0 0.0
    %v1432 = vand.u32 %v213, 4294901760
    %v1433 = vsub.f32 %v213, %v1432
    %v1434 = vand.u32 %v1433, 4294901760
    %1435 = vmatpush1.msra.mxu0 %v1434
    %1436 = vmatprep.subr.mxu0 0.0
    %v1437 = vand.u32 %v214, 4294901760
    %v1438 = vsub.f32 %v214, %v1437
    %v1439 = vand.u32 %v1438, 4294901760
    %1440 = vmatpush1.msra.mxu0 %v1439
    %1441 = vmatprep.subr.mxu0 0.0
    %v1442 = vand.u32 %v215, 4294901760
    %v1443 = vsub.f32 %v215, %v1442
    %v1444 = vand.u32 %v1443, 4294901760
    %1445 = vmatpush1.msra.mxu0 %v1444
    %1446 = vmatprep.subr.mxu0 0.0
    %1447 = vmatpush1.msra.mxu0 0.0
    %1448 = vmatprep.subr.mxu0 0.0
    %1449 = vmatpush1.msra.mxu0 0.0
    %1450 = vmatprep.subr.mxu0 0.0
    %1451 = vmatpush1.msra.mxu0 0.0
    %1452 = vmatprep.subr.mxu0 0.0
    %1453 = vmatpush1.msra.mxu0 0.0
    %1454 = vmatprep.subr.mxu0 0.0
    %1455 = vmatpush1.msra.mxu0 0.0
    %1456 = vmatprep.subr.mxu0 0.0
    %1457 = vmatpush1.msra.mxu0 0.0
    %1458 = vmatprep.subr.mxu0 0.0
    %1459 = vmatpush1.msra.mxu0 0.0
    %1460 = vmatprep.subr.mxu0 0.0
    %1461 = vmatpush1.msra.mxu0 0.0
    %1462 = vmatprep.subr.mxu0 0.0
    %1463 = vmatpush1.msra.mxu0 0.0
    %1464 = vmatprep.subr.mxu0 0.0
    %1465 = vmatpush1.msra.mxu0 0.0
    %1466 = vmatprep.subr.mxu0 0.0
    %1467 = vmatpush1.msra.mxu0 0.0
    %1468 = vmatprep.subr.mxu0 0.0
    %1469 = vmatpush1.msra.mxu0 0.0
    %1470 = vmatprep.subr.mxu0 0.0
    %1471 = vmatpush1.msra.mxu0 0.0
    %1472 = vmatprep.subr.mxu0 0.0
    %1473 = vmatpush1.msra.mxu0 0.0
    %1474 = vmatprep.subr.mxu0 0.0
    %1475 = vmatpush1.msra.mxu0 0.0
    %1476 = vmatprep.subr.mxu0 0.0
    %1477 = vmatpush1.msra.mxu0 0.0
    %1478 = vmatprep.mubr.f32.mxu0 0.0
    %v1479 = vand.u32 %v198, 4294901760
    %1480 = vmatmul.mubr.f32.gmra.mrb[0].mxu0 %v1479
    %v1481 = vpop.f32.mrb[0].mxu0
    %v1482 = vadd.f32 %v1355, %v1481
    %v1483 = vpop.f32.mrb[0].mxu0
    %1484 = vmatprep.mubr.f32.mxu0 0.0
    %v1485 = vand.u32 %v199, 4294901760
    %1486 = vmatmul.mubr.f32.gmra.mrb[0].mxu0 %v1485
    %v1487 = vpop.f32.mrb[0].mxu0
    %v1488 = vadd.f32 %v1363, %v1487
    %v1489 = vpop.f32.mrb[0].mxu0
    %1490 = vdwg.mxu0
    %1491 = vmatprep.subr.mxu0 0.0
    %v1492 = vand.u32 %v200, 4294901760
    %1493 = vmatpush1.msra.mxu0 %v1492
    %1494 = vmatprep.subr.mxu0 0.0
    %v1495 = vand.u32 %v201, 4294901760
    %1496 = vmatpush1.msra.mxu0 %v1495
    %1497 = vmatprep.subr.mxu0 0.0
    %v1498 = vand.u32 %v202, 4294901760
    %1499 = vmatpush1.msra.mxu0 %v1498
    %1500 = vmatprep.subr.mxu0 0.0
    %v1501 = vand.u32 %v203, 4294901760
    %1502 = vmatpush1.msra.mxu0 %v1501
    %1503 = vmatprep.subr.mxu0 0.0
    %v1504 = vand.u32 %v204, 4294901760
    %1505 = vmatpush1.msra.mxu0 %v1504
    %1506 = vmatprep.subr.mxu0 0.0
    %v1507 = vand.u32 %v205, 4294901760
    %1508 = vmatpush1.msra.mxu0 %v1507
    %1509 = vmatprep.subr.mxu0 0.0
    %v1510 = vand.u32 %v206, 4294901760
    %1511 = vmatpush1.msra.mxu0 %v1510
    %1512 = vmatprep.subr.mxu0 0.0
    %v1513 = vand.u32 %v207, 4294901760
    %1514 = vmatpush1.msra.mxu0 %v1513
    %1515 = vmatprep.subr.mxu0 0.0
    %v1516 = vand.u32 %v208, 4294901760
    %1517 = vmatpush1.msra.mxu0 %v1516
    %1518 = vmatprep.subr.mxu0 0.0
    %v1519 = vand.u32 %v209, 4294901760
    %1520 = vmatpush1.msra.mxu0 %v1519
    %1521 = vmatprep.subr.mxu0 0.0
    %v1522 = vand.u32 %v210, 4294901760
    %1523 = vmatpush1.msra.mxu0 %v1522
    %1524 = vmatprep.subr.mxu0 0.0
    %v1525 = vand.u32 %v211, 4294901760
    %1526 = vmatpush1.msra.mxu0 %v1525
    %1527 = vmatprep.subr.mxu0 0.0
    %v1528 = vand.u32 %v212, 4294901760
    %1529 = vmatpush1.msra.mxu0 %v1528
    %1530 = vmatprep.subr.mxu0 0.0
    %v1531 = vand.u32 %v213, 4294901760
    %1532 = vmatpush1.msra.mxu0 %v1531
    %1533 = vmatprep.subr.mxu0 0.0
    %v1534 = vand.u32 %v214, 4294901760
    %1535 = vmatpush1.msra.mxu0 %v1534
    %1536 = vmatprep.subr.mxu0 0.0
    %v1537 = vand.u32 %v215, 4294901760
    %1538 = vmatpush1.msra.mxu0 %v1537
    %1539 = vmatprep.subr.mxu0 0.0
    %1540 = vmatpush1.msra.mxu0 0.0
    %1541 = vmatprep.subr.mxu0 0.0
    %1542 = vmatpush1.msra.mxu0 0.0
    %1543 = vmatprep.subr.mxu0 0.0
    %1544 = vmatpush1.msra.mxu0 0.0
    %1545 = vmatprep.subr.mxu0 0.0
    %1546 = vmatpush1.msra.mxu0 0.0
    %1547 = vmatprep.subr.mxu0 0.0
    %1548 = vmatpush1.msra.mxu0 0.0
    %1549 = vmatprep.subr.mxu0 0.0
    %1550 = vmatpush1.msra.mxu0 0.0
    %1551 = vmatprep.subr.mxu0 0.0
    %1552 = vmatpush1.msra.mxu0 0.0
    %1553 = vmatprep.subr.mxu0 0.0
    %1554 = vmatpush1.msra.mxu0 0.0
    %1555 = vmatprep.subr.mxu0 0.0
    %1556 = vmatpush1.msra.mxu0 0.0
    %1557 = vmatprep.subr.mxu0 0.0
    %1558 = vmatpush1.msra.mxu0 0.0
    %1559 = vmatprep.subr.mxu0 0.0
    %1560 = vmatpush1.msra.mxu0 0.0
    %1561 = vmatprep.subr.mxu0 0.0
    %1562 = vmatpush1.msra.mxu0 0.0
    %1563 = vmatprep.subr.mxu0 0.0
    %1564 = vmatpush1.msra.mxu0 0.0
    %1565 = vmatprep.subr.mxu0 0.0
    %1566 = vmatpush1.msra.mxu0 0.0
    %1567 = vmatprep.subr.mxu0 0.0
    %1568 = vmatpush1.msra.mxu0 0.0
    %1569 = vmatprep.subr.mxu0 0.0
    %1570 = vmatpush1.msra.mxu0 0.0
    %1571 = vmatprep.mubr.f32.mxu0 0.0
    %v1572 = vand.u32 %v198, 4294901760
    %1573 = vmatmul.mubr.f32.gmra.mrb[0].mxu0 %v1572
    %v1574 = vpop.f32.mrb[0].mxu0
    %v1575 = vadd.f32 %v1482, %v1574
    %v1576 = vpop.f32.mrb[0].mxu0
    %1577 = vmatprep.mubr.f32.mxu0 0.0
    %v1578 = vand.u32 %v199, 4294901760
    %1579 = vmatmul.mubr.f32.gmra.mrb[0].mxu0 %v1578
    %v1580 = vpop.f32.mrb[0].mxu0
    %v1581 = vadd.f32 %v1488, %v1580
    %v1582 = vpop.f32.mrb[0].mxu0
    %1583 = vdwg.mxu0
    %v1584 = vmax.f32 %v891, %v1575
    %v1585 = vmax.f32 %v897, %v1581
    %v1586 = vld [vmem:[%s3] sm:$0x1]
    %v1588 = vlaneseq
    %v1589 = vshrl.u32 %v1588, 7
    %v1590 = vsub.s32 0, %v1589
    %v1591 = vrot.slane %v1586, %v1590
    %v1593 = vadd.f32 %v1584, %v1591
    %v1594 = vadd.f32 %v1585, %v1591
    %v1595 = vmax.f32 %v1593, 0.0
    %v1596 = vmax.f32 %v1594, 0.0
    %vm1597 = vcmp.lt.s32.totalorder %v127, 4
    %vm1598 = vcmp.lt.s32.totalorder %v128, 4
    %v1599 = vsel %vm1597, 1, 0
    %v1600 = vsel %vm1598, 1, 0
    %vm1601 = vcmp.eq.s32.totalorder %v1599, 1
    %vm1602 = vcmp.eq.s32.totalorder %v1600, 1
    %v1603 = vsel %vm1601, %v1595, 0.0
    %v1604 = vsel %vm1602, %v1596, 0.0
    %v1605 = vrot.slane %v1603, 7
    %v1606 = vrot.slane %v1604, 7
    %v1607 = vsel %vm135, %v1605, %v1606
    %v1608 = vsel %vm135, %v1606, %v1605
    %v1609 = vsel %vm140, 0.0, %v1608
    %v1610 = vsel %vm141, 0.0, %v1607
    %v1611 = vrot.slane %v1603, 1
    %v1612 = vrot.slane %v1604, 1
    %v1613 = vsel %vm146, %v1611, %v1612
    %v1614 = vsel %vm146, %v1612, %v1611
    %v1615 = vsel %vm151, 0.0, %v1613
    %v1616 = vsel %vm152, 0.0, %v1614
    %v1617 = vld [vmem:[#allocation8] sm:$0xff]
    %v1618 = vld [vmem:[#allocation8 + $0x8] sm:$0xff]
    %v1619 = vld [vmem:[#allocation8 + $0x10] sm:$0xff]
    %v1620 = vld [vmem:[#allocation8 + $0x18] sm:$0xff]
    %v1621 = vld [vmem:[#allocation8 + $0x20] sm:$0xff]
    %v1622 = vld [vmem:[#allocation8 + $0x28] sm:$0xff]
    %v1623 = vld [vmem:[#allocation8 + $0x30] sm:$0xff]
    %v1624 = vld [vmem:[#allocation8 + $0x38] sm:$0xff]
    %v1625 = vld [vmem:[#allocation8 + $0x40] sm:$0xff]
    %v1626 = vld [vmem:[#allocation8 + $0x48] sm:$0xff]
    %v1627 = vld [vmem:[#allocation8 + $0x50] sm:$0xff]
    %v1628 = vld [vmem:[#allocation8 + $0x58] sm:$0xff]
    %v1629 = vld [vmem:[#allocation8 + $0x60] sm:$0xff]
    %v1630 = vld [vmem:[#allocation8 + $0x68] sm:$0xff]
    %v1631 = vld [vmem:[#allocation8 + $0x70] sm:$0xff]
    %v1632 = vld [vmem:[#allocation8 + $0x78] sm:$0xff]
    %v1633 = vld [vmem:[#allocation8 + $0x80] sm:$0xff]
    %v1634 = vld [vmem:[#allocation8 + $0x88] sm:$0xff]
    %v1635 = vld [vmem:[#allocation8 + $0x90] sm:$0xff]
    %v1636 = vld [vmem:[#allocation8 + $0x98] sm:$0xff]
    %v1637 = vld [vmem:[#allocation8 + $0xa0] sm:$0xff]
    %v1638 = vld [vmem:[#allocation8 + $0xa8] sm:$0xff]
    %v1639 = vld [vmem:[#allocation8 + $0xb0] sm:$0xff]
    %v1640 = vld [vmem:[#allocation8 + $0xb8] sm:$0xff]
    %v1641 = vld [vmem:[#allocation8 + $0xc0] sm:$0xff]
    %v1642 = vld [vmem:[#allocation8 + $0xc8] sm:$0xff]
    %v1643 = vld [vmem:[#allocation8 + $0xd0] sm:$0xff]
    %v1644 = vld [vmem:[#allocation8 + $0xd8] sm:$0xff]
    %v1645 = vld [vmem:[#allocation8 + $0xe0] sm:$0xff]
    %v1646 = vld [vmem:[#allocation8 + $0xe8] sm:$0xff]
    %v1647 = vld [vmem:[#allocation8 + $0xf0] sm:$0xff]
    %v1648 = vld [vmem:[#allocation8 + $0xf8] sm:$0xff]
    %v1649 = vld [vmem:[#allocation8 + $0x100] sm:$0xff]
    %v1650 = vld [vmem:[#allocation8 + $0x108] sm:$0xff]
    %v1651 = vld [vmem:[#allocation8 + $0x110] sm:$0xff]
    %v1652 = vld [vmem:[#allocation8 + $0x118] sm:$0xff]
    %v1653 = vld [vmem:[#allocation8 + $0x120] sm:$0xff]
    %v1654 = vld [vmem:[#allocation8 + $0x128] sm:$0xff]
    %v1655 = vld [vmem:[#allocation8 + $0x130] sm:$0xff]
    %v1656 = vld [vmem:[#allocation8 + $0x138] sm:$0xff]
    %v1657 = vld [vmem:[#allocation8 + $0x140] sm:$0xff]
    %v1658 = vld [vmem:[#allocation8 + $0x148] sm:$0xff]
    %v1659 = vld [vmem:[#allocation8 + $0x150] sm:$0xff]
    %v1660 = vld [vmem:[#allocation8 + $0x158] sm:$0xff]
    %v1661 = vld [vmem:[#allocation8 + $0x160] sm:$0xff]
    %v1662 = vld [vmem:[#allocation8 + $0x168] sm:$0xff]
    %v1663 = vld [vmem:[#allocation8 + $0x170] sm:$0xff]
    %v1664 = vld [vmem:[#allocation8 + $0x178] sm:$0xff]
    %v1665 = vld [vmem:[%s5] sm:$0x1]
    %v1667 = vlaneseq
    %v1668 = vshrl.u32 %v1667, 7
    %v1669 = vsub.s32 0, %v1668
    %v1670 = vrot.slane %v1665, %v1669
    %1672 = vmatprep.subr.mxu0 0.0
    %v1673 = vand.u32 %v1617, 4294901760
    %1674 = vmatpush1.msra.mxu0 %v1673
    %1675 = vmatprep.subr.mxu0 0.0
    %v1676 = vand.u32 %v1618, 4294901760
    %1677 = vmatpush1.msra.mxu0 %v1676
    %1678 = vmatprep.subr.mxu0 0.0
    %v1679 = vand.u32 %v1619, 4294901760
    %1680 = vmatpush1.msra.mxu0 %v1679
    %1681 = vmatprep.subr.mxu0 0.0
    %v1682 = vand.u32 %v1620, 4294901760
    %1683 = vmatpush1.msra.mxu0 %v1682
    %1684 = vmatprep.subr.mxu0 0.0
    %v1685 = vand.u32 %v1621, 4294901760
    %1686 = vmatpush1.msra.mxu0 %v1685
    %1687 = vmatprep.subr.mxu0 0.0
    %v1688 = vand.u32 %v1622, 4294901760
    %1689 = vmatpush1.msra.mxu0 %v1688
    %1690 = vmatprep.subr.mxu0 0.0
    %v1691 = vand.u32 %v1623, 4294901760
    %1692 = vmatpush1.msra.mxu0 %v1691
    %1693 = vmatprep.subr.mxu0 0.0
    %v1694 = vand.u32 %v1624, 4294901760
    %1695 = vmatpush1.msra.mxu0 %v1694
    %1696 = vmatprep.subr.mxu0 0.0
    %v1697 = vand.u32 %v1625, 4294901760
    %1698 = vmatpush1.msra.mxu0 %v1697
    %1699 = vmatprep.subr.mxu0 0.0
    %v1700 = vand.u32 %v1626, 4294901760
    %1701 = vmatpush1.msra.mxu0 %v1700
    %1702 = vmatprep.subr.mxu0 0.0
    %v1703 = vand.u32 %v1627, 4294901760
    %1704 = vmatpush1.msra.mxu0 %v1703
    %1705 = vmatprep.subr.mxu0 0.0
    %v1706 = vand.u32 %v1628, 4294901760
    %1707 = vmatpush1.msra.mxu0 %v1706
    %1708 = vmatprep.subr.mxu0 0.0
    %v1709 = vand.u32 %v1629, 4294901760
    %1710 = vmatpush1.msra.mxu0 %v1709
    %1711 = vmatprep.subr.mxu0 0.0
    %v1712 = vand.u32 %v1630, 4294901760
    %1713 = vmatpush1.msra.mxu0 %v1712
    %1714 = vmatprep.subr.mxu0 0.0
    %v1715 = vand.u32 %v1631, 4294901760
    %1716 = vmatpush1.msra.mxu0 %v1715
    %1717 = vmatprep.subr.mxu0 0.0
    %v1718 = vand.u32 %v1632, 4294901760
    %1719 = vmatpush1.msra.mxu0 %v1718
    %1720 = vmatprep.subr.mxu0 0.0
    %v1721 = vand.u32 %v1633, 4294901760
    %1722 = vmatpush1.msra.mxu0 %v1721
    %1723 = vmatprep.subr.mxu0 0.0
    %v1724 = vand.u32 %v1634, 4294901760
    %1725 = vmatpush1.msra.mxu0 %v1724
    %1726 = vmatprep.subr.mxu0 0.0
    %v1727 = vand.u32 %v1635, 4294901760
    %1728 = vmatpush1.msra.mxu0 %v1727
    %1729 = vmatprep.subr.mxu0 0.0
    %v1730 = vand.u32 %v1636, 4294901760
    %1731 = vmatpush1.msra.mxu0 %v1730
    %1732 = vmatprep.subr.mxu0 0.0
    %v1733 = vand.u32 %v1637, 4294901760
    %1734 = vmatpush1.msra.mxu0 %v1733
    %1735 = vmatprep.subr.mxu0 0.0
    %v1736 = vand.u32 %v1638, 4294901760
    %1737 = vmatpush1.msra.mxu0 %v1736
    %1738 = vmatprep.subr.mxu0 0.0
    %v1739 = vand.u32 %v1639, 4294901760
    %1740 = vmatpush1.msra.mxu0 %v1739
    %1741 = vmatprep.subr.mxu0 0.0
    %v1742 = vand.u32 %v1640, 4294901760
    %1743 = vmatpush1.msra.mxu0 %v1742
    %1744 = vmatprep.subr.mxu0 0.0
    %v1745 = vand.u32 %v1641, 4294901760
    %1746 = vmatpush1.msra.mxu0 %v1745
    %1747 = vmatprep.subr.mxu0 0.0
    %v1748 = vand.u32 %v1642, 4294901760
    %1749 = vmatpush1.msra.mxu0 %v1748
    %1750 = vmatprep.subr.mxu0 0.0
    %v1751 = vand.u32 %v1643, 4294901760
    %1752 = vmatpush1.msra.mxu0 %v1751
    %1753 = vmatprep.subr.mxu0 0.0
    %v1754 = vand.u32 %v1644, 4294901760
    %1755 = vmatpush1.msra.mxu0 %v1754
    %1756 = vmatprep.subr.mxu0 0.0
    %v1757 = vand.u32 %v1645, 4294901760
    %1758 = vmatpush1.msra.mxu0 %v1757
    %1759 = vmatprep.subr.mxu0 0.0
    %v1760 = vand.u32 %v1646, 4294901760
    %1761 = vmatpush1.msra.mxu0 %v1760
    %1762 = vmatprep.subr.mxu0 0.0
    %v1763 = vand.u32 %v1647, 4294901760
    %1764 = vmatpush1.msra.mxu0 %v1763
    %1765 = vmatprep.subr.mxu0 0.0
    %v1766 = vand.u32 %v1648, 4294901760
    %1767 = vmatpush1.msra.mxu0 %v1766
    %v1768 = vand.u32 %v1603, 4294901760
    %v1769 = vsub.f32 %v1603, %v1768
    %v1770 = vand.u32 %v1769, 4294901760
    %v1771 = vsub.f32 %v1769, %v1770
    %v1772 = vand.u32 %v1771, 4294901760
    %1773 = vmatprep.mubr.f32.mxu0 %v1772
    %v1774 = vand.u32 %v1609, 4294901760
    %v1775 = vsub.f32 %v1609, %v1774
    %v1776 = vand.u32 %v1775, 4294901760
    %v1777 = vsub.f32 %v1775, %v1776
    %v1778 = vand.u32 %v1777, 4294901760
    %1779 = vmatmul.mubr.f32.gmra.mrb[0].mxu0 %v1778
    %v1780 = vpop.f32.mrb[0].mxu0
    %v1781 = vadd.f32 %v1670, %v1780
    %v1782 = vpop.f32.mrb[0].mxu0
    %v1783 = vand.u32 %v1604, 4294901760
    %v1784 = vsub.f32 %v1604, %v1783
    %v1785 = vand.u32 %v1784, 4294901760
    %v1786 = vsub.f32 %v1784, %v1785
    %v1787 = vand.u32 %v1786, 4294901760
    %1788 = vmatprep.mubr.f32.mxu0 %v1787
    %v1789 = vand.u32 %v1610, 4294901760
    %v1790 = vsub.f32 %v1610, %v1789
    %v1791 = vand.u32 %v1790, 4294901760
    %v1792 = vsub.f32 %v1790, %v1791
    %v1793 = vand.u32 %v1792, 4294901760
    %1794 = vmatmul.mubr.f32.gmra.mrb[0].mxu0 %v1793
    %v1795 = vpop.f32.mrb[0].mxu0
    %v1796 = vadd.f32 %v1670, %v1795
    %v1797 = vpop.f32.mrb[0].mxu0
    %1798 = vdwg.mxu0
    %1799 = vmatprep.subr.mxu0 0.0
    %v1800 = vand.u32 %v1617, 4294901760
    %v1801 = vsub.f32 %v1617, %v1800
    %v1802 = vand.u32 %v1801, 4294901760
    %v1803 = vsub.f32 %v1801, %v1802
    %v1804 = vand.u32 %v1803, 4294901760
    %1805 = vmatpush1.msra.mxu0 %v1804
    %1806 = vmatprep.subr.mxu0 0.0
    %v1807 = vand.u32 %v1618, 4294901760
    %v1808 = vsub.f32 %v1618, %v1807
    %v1809 = vand.u32 %v1808, 4294901760
    %v1810 = vsub.f32 %v1808, %v1809
    %v1811 = vand.u32 %v1810, 4294901760
    %1812 = vmatpush1.msra.mxu0 %v1811
    %1813 = vmatprep.subr.mxu0 0.0
    %v1814 = vand.u32 %v1619, 4294901760
    %v1815 = vsub.f32 %v1619, %v1814
    %v1816 = vand.u32 %v1815, 4294901760
    %v1817 = vsub.f32 %v1815, %v1816
    %v1818 = vand.u32 %v1817, 4294901760
    %1819 = vmatpush1.msra.mxu0 %v1818
    %1820 = vmatprep.subr.mxu0 0.0
    %v1821 = vand.u32 %v1620, 4294901760
    %v1822 = vsub.f32 %v1620, %v1821
    %v1823 = vand.u32 %v1822, 4294901760
    %v1824 = vsub.f32 %v1822, %v1823
    %v1825 = vand.u32 %v1824, 4294901760
    %1826 = vmatpush1.msra.mxu0 %v1825
    %1827 = vmatprep.subr.mxu0 0.0
    %v1828 = vand.u32 %v1621, 4294901760
    %v1829 = vsub.f32 %v1621, %v1828
    %v1830 = vand.u32 %v1829, 4294901760
    %v1831 = vsub.f32 %v1829, %v1830
    %v1832 = vand.u32 %v1831, 4294901760
    %1833 = vmatpush1.msra.mxu0 %v1832
    %1834 = vmatprep.subr.mxu0 0.0
    %v1835 = vand.u32 %v1622, 4294901760
    %v1836 = vsub.f32 %v1622, %v1835
    %v1837 = vand.u32 %v1836, 4294901760
    %v1838 = vsub.f32 %v1836, %v1837
    %v1839 = vand.u32 %v1838, 4294901760
    %1840 = vmatpush1.msra.mxu0 %v1839
    %1841 = vmatprep.subr.mxu0 0.0
    %v1842 = vand.u32 %v1623, 4294901760
    %v1843 = vsub.f32 %v1623, %v1842
    %v1844 = vand.u32 %v1843, 4294901760
    %v1845 = vsub.f32 %v1843, %v1844
    %v1846 = vand.u32 %v1845, 4294901760
    %1847 = vmatpush1.msra.mxu0 %v1846
    %1848 = vmatprep.subr.mxu0 0.0
    %v1849 = vand.u32 %v1624, 4294901760
    %v1850 = vsub.f32 %v1624, %v1849
    %v1851 = vand.u32 %v1850, 4294901760
    %v1852 = vsub.f32 %v1850, %v1851
    %v1853 = vand.u32 %v1852, 4294901760
    %1854 = vmatpush1.msra.mxu0 %v1853
    %1855 = vmatprep.subr.mxu0 0.0
    %v1856 = vand.u32 %v1625, 4294901760
    %v1857 = vsub.f32 %v1625, %v1856
    %v1858 = vand.u32 %v1857, 4294901760
    %v1859 = vsub.f32 %v1857, %v1858
    %v1860 = vand.u32 %v1859, 4294901760
    %1861 = vmatpush1.msra.mxu0 %v1860
    %1862 = vmatprep.subr.mxu0 0.0
    %v1863 = vand.u32 %v1626, 4294901760
    %v1864 = vsub.f32 %v1626, %v1863
    %v1865 = vand.u32 %v1864, 4294901760
    %v1866 = vsub.f32 %v1864, %v1865
    %v1867 = vand.u32 %v1866, 4294901760
    %1868 = vmatpush1.msra.mxu0 %v1867
    %1869 = vmatprep.subr.mxu0 0.0
    %v1870 = vand.u32 %v1627, 4294901760
    %v1871 = vsub.f32 %v1627, %v1870
    %v1872 = vand.u32 %v1871, 4294901760
    %v1873 = vsub.f32 %v1871, %v1872
    %v1874 = vand.u32 %v1873, 4294901760
    %1875 = vmatpush1.msra.mxu0 %v1874
    %1876 = vmatprep.subr.mxu0 0.0
    %v1877 = vand.u32 %v1628, 4294901760
    %v1878 = vsub.f32 %v1628, %v1877
    %v1879 = vand.u32 %v1878, 4294901760
    %v1880 = vsub.f32 %v1878, %v1879
    %v1881 = vand.u32 %v1880, 4294901760
    %1882 = vmatpush1.msra.mxu0 %v1881
    %1883 = vmatprep.subr.mxu0 0.0
    %v1884 = vand.u32 %v1629, 4294901760
    %v1885 = vsub.f32 %v1629, %v1884
    %v1886 = vand.u32 %v1885, 4294901760
    %v1887 = vsub.f32 %v1885, %v1886
    %v1888 = vand.u32 %v1887, 4294901760
    %1889 = vmatpush1.msra.mxu0 %v1888
    %1890 = vmatprep.subr.mxu0 0.0
    %v1891 = vand.u32 %v1630, 4294901760
    %v1892 = vsub.f32 %v1630, %v1891
    %v1893 = vand.u32 %v1892, 4294901760
    %v1894 = vsub.f32 %v1892, %v1893
    %v1895 = vand.u32 %v1894, 4294901760
    %1896 = vmatpush1.msra.mxu0 %v1895
    %1897 = vmatprep.subr.mxu0 0.0
    %v1898 = vand.u32 %v1631, 4294901760
    %v1899 = vsub.f32 %v1631, %v1898
    %v1900 = vand.u32 %v1899, 4294901760
    %v1901 = vsub.f32 %v1899, %v1900
    %v1902 = vand.u32 %v1901, 4294901760
    %1903 = vmatpush1.msra.mxu0 %v1902
    %1904 = vmatprep.subr.mxu0 0.0
    %v1905 = vand.u32 %v1632, 4294901760
    %v1906 = vsub.f32 %v1632, %v1905
    %v1907 = vand.u32 %v1906, 4294901760
    %v1908 = vsub.f32 %v1906, %v1907
    %v1909 = vand.u32 %v1908, 4294901760
    %1910 = vmatpush1.msra.mxu0 %v1909
    %1911 = vmatprep.subr.mxu0 0.0
    %v1912 = vand.u32 %v1633, 4294901760
    %v1913 = vsub.f32 %v1633, %v1912
    %v1914 = vand.u32 %v1913, 4294901760
    %v1915 = vsub.f32 %v1913, %v1914
    %v1916 = vand.u32 %v1915, 4294901760
    %1917 = vmatpush1.msra.mxu0 %v1916
    %1918 = vmatprep.subr.mxu0 0.0
    %v1919 = vand.u32 %v1634, 4294901760
    %v1920 = vsub.f32 %v1634, %v1919
    %v1921 = vand.u32 %v1920, 4294901760
    %v1922 = vsub.f32 %v1920, %v1921
    %v1923 = vand.u32 %v1922, 4294901760
    %1924 = vmatpush1.msra.mxu0 %v1923
    %1925 = vmatprep.subr.mxu0 0.0
    %v1926 = vand.u32 %v1635, 4294901760
    %v1927 = vsub.f32 %v1635, %v1926
    %v1928 = vand.u32 %v1927, 4294901760
    %v1929 = vsub.f32 %v1927, %v1928
    %v1930 = vand.u32 %v1929, 4294901760
    %1931 = vmatpush1.msra.mxu0 %v1930
    %1932 = vmatprep.subr.mxu0 0.0
    %v1933 = vand.u32 %v1636, 4294901760
    %v1934 = vsub.f32 %v1636, %v1933
    %v1935 = vand.u32 %v1934, 4294901760
    %v1936 = vsub.f32 %v1934, %v1935
    %v1937 = vand.u32 %v1936, 4294901760
    %1938 = vmatpush1.msra.mxu0 %v1937
    %1939 = vmatprep.subr.mxu0 0.0
    %v1940 = vand.u32 %v1637, 4294901760
    %v1941 = vsub.f32 %v1637, %v1940
    %v1942 = vand.u32 %v1941, 4294901760
    %v1943 = vsub.f32 %v1941, %v1942
    %v1944 = vand.u32 %v1943, 4294901760
    %1945 = vmatpush1.msra.mxu0 %v1944
    %1946 = vmatprep.subr.mxu0 0.0
    %v1947 = vand.u32 %v1638, 4294901760
    %v1948 = vsub.f32 %v1638, %v1947
    %v1949 = vand.u32 %v1948, 4294901760
    %v1950 = vsub.f32 %v1948, %v1949
    %v1951 = vand.u32 %v1950, 4294901760
    %1952 = vmatpush1.msra.mxu0 %v1951
    %1953 = vmatprep.subr.mxu0 0.0
    %v1954 = vand.u32 %v1639, 4294901760
    %v1955 = vsub.f32 %v1639, %v1954
    %v1956 = vand.u32 %v1955, 4294901760
    %v1957 = vsub.f32 %v1955, %v1956
    %v1958 = vand.u32 %v1957, 4294901760
    %1959 = vmatpush1.msra.mxu0 %v1958
    %1960 = vmatprep.subr.mxu0 0.0
    %v1961 = vand.u32 %v1640, 4294901760
    %v1962 = vsub.f32 %v1640, %v1961
    %v1963 = vand.u32 %v1962, 4294901760
    %v1964 = vsub.f32 %v1962, %v1963
    %v1965 = vand.u32 %v1964, 4294901760
    %1966 = vmatpush1.msra.mxu0 %v1965
    %1967 = vmatprep.subr.mxu0 0.0
    %v1968 = vand.u32 %v1641, 4294901760
    %v1969 = vsub.f32 %v1641, %v1968
    %v1970 = vand.u32 %v1969, 4294901760
    %v1971 = vsub.f32 %v1969, %v1970
    %v1972 = vand.u32 %v1971, 4294901760
    %1973 = vmatpush1.msra.mxu0 %v1972
    %1974 = vmatprep.subr.mxu0 0.0
    %v1975 = vand.u32 %v1642, 4294901760
    %v1976 = vsub.f32 %v1642, %v1975
    %v1977 = vand.u32 %v1976, 4294901760
    %v1978 = vsub.f32 %v1976, %v1977
    %v1979 = vand.u32 %v1978, 4294901760
    %1980 = vmatpush1.msra.mxu0 %v1979
    %1981 = vmatprep.subr.mxu0 0.0
    %v1982 = vand.u32 %v1643, 4294901760
    %v1983 = vsub.f32 %v1643, %v1982
    %v1984 = vand.u32 %v1983, 4294901760
    %v1985 = vsub.f32 %v1983, %v1984
    %v1986 = vand.u32 %v1985, 4294901760
    %1987 = vmatpush1.msra.mxu0 %v1986
    %1988 = vmatprep.subr.mxu0 0.0
    %v1989 = vand.u32 %v1644, 4294901760
    %v1990 = vsub.f32 %v1644, %v1989
    %v1991 = vand.u32 %v1990, 4294901760
    %v1992 = vsub.f32 %v1990, %v1991
    %v1993 = vand.u32 %v1992, 4294901760
    %1994 = vmatpush1.msra.mxu0 %v1993
    %1995 = vmatprep.subr.mxu0 0.0
    %v1996 = vand.u32 %v1645, 4294901760
    %v1997 = vsub.f32 %v1645, %v1996
    %v1998 = vand.u32 %v1997, 4294901760
    %v1999 = vsub.f32 %v1997, %v1998
    %v2000 = vand.u32 %v1999, 4294901760
    %2001 = vmatpush1.msra.mxu0 %v2000
    %2002 = vmatprep.subr.mxu0 0.0
    %v2003 = vand.u32 %v1646, 4294901760
    %v2004 = vsub.f32 %v1646, %v2003
    %v2005 = vand.u32 %v2004, 4294901760
    %v2006 = vsub.f32 %v2004, %v2005
    %v2007 = vand.u32 %v2006, 4294901760
    %2008 = vmatpush1.msra.mxu0 %v2007
    %2009 = vmatprep.subr.mxu0 0.0
    %v2010 = vand.u32 %v1647, 4294901760
    %v2011 = vsub.f32 %v1647, %v2010
    %v2012 = vand.u32 %v2011, 4294901760
    %v2013 = vsub.f32 %v2011, %v2012
    %v2014 = vand.u32 %v2013, 4294901760
    %2015 = vmatpush1.msra.mxu0 %v2014
    %2016 = vmatprep.subr.mxu0 0.0
    %v2017 = vand.u32 %v1648, 4294901760
    %v2018 = vsub.f32 %v1648, %v2017
    %v2019 = vand.u32 %v2018, 4294901760
    %v2020 = vsub.f32 %v2018, %v2019
    %v2021 = vand.u32 %v2020, 4294901760
    %2022 = vmatpush1.msra.mxu0 %v2021
    %v2023 = vand.u32 %v1603, 4294901760
    %2024 = vmatprep.mubr.f32.mxu0 %v2023
    %v2025 = vand.u32 %v1609, 4294901760
    %2026 = vmatmul.mubr.f32.gmra.mrb[0].mxu0 %v2025
    %v2027 = vpop.f32.mrb[0].mxu0
    %v2028 = vadd.f32 %v1781, %v2027
    %v2029 = vpop.f32.mrb[0].mxu0
    %v2030 = vand.u32 %v1604, 4294901760
    %2031 = vmatprep.mubr.f32.mxu0 %v2030
    %v2032 = vand.u32 %v1610, 4294901760
    %2033 = vmatmul.mubr.f32.gmra.mrb[0].mxu0 %v2032
    %v2034 = vpop.f32.mrb[0].mxu0
    %v2035 = vadd.f32 %v1796, %v2034
    %v2036 = vpop.f32.mrb[0].mxu0
    %2037 = vdwg.mxu0
    %2038 = vmatprep.subr.mxu0 0.0
    %v2039 = vand.u32 %v1617, 4294901760
    %v2040 = vsub.f32 %v1617, %v2039
    %2041 = vmatpush1.msra.mxu0 %v2040
    %2042 = vmatprep.subr.mxu0 0.0
    %v2043 = vand.u32 %v1618, 4294901760
    %v2044 = vsub.f32 %v1618, %v2043
    %2045 = vmatpush1.msra.mxu0 %v2044
    %2046 = vmatprep.subr.mxu0 0.0
    %v2047 = vand.u32 %v1619, 4294901760
    %v2048 = vsub.f32 %v1619, %v2047
    %2049 = vmatpush1.msra.mxu0 %v2048
    %2050 = vmatprep.subr.mxu0 0.0
    %v2051 = vand.u32 %v1620, 4294901760
    %v2052 = vsub.f32 %v1620, %v2051
    %2053 = vmatpush1.msra.mxu0 %v2052
    %2054 = vmatprep.subr.mxu0 0.0
    %v2055 = vand.u32 %v1621, 4294901760
    %v2056 = vsub.f32 %v1621, %v2055
    %2057 = vmatpush1.msra.mxu0 %v2056
    %2058 = vmatprep.subr.mxu0 0.0
    %v2059 = vand.u32 %v1622, 4294901760
    %v2060 = vsub.f32 %v1622, %v2059
    %2061 = vmatpush1.msra.mxu0 %v2060
    %2062 = vmatprep.subr.mxu0 0.0
    %v2063 = vand.u32 %v1623, 4294901760
    %v2064 = vsub.f32 %v1623, %v2063
    %2065 = vmatpush1.msra.mxu0 %v2064
    %2066 = vmatprep.subr.mxu0 0.0
    %v2067 = vand.u32 %v1624, 4294901760
    %v2068 = vsub.f32 %v1624, %v2067
    %2069 = vmatpush1.msra.mxu0 %v2068
    %2070 = vmatprep.subr.mxu0 0.0
    %v2071 = vand.u32 %v1625, 4294901760
    %v2072 = vsub.f32 %v1625, %v2071
    %2073 = vmatpush1.msra.mxu0 %v2072
    %2074 = vmatprep.subr.mxu0 0.0
    %v2075 = vand.u32 %v1626, 4294901760
    %v2076 = vsub.f32 %v1626, %v2075
    %2077 = vmatpush1.msra.mxu0 %v2076
    %2078 = vmatprep.subr.mxu0 0.0
    %v2079 = vand.u32 %v1627, 4294901760
    %v2080 = vsub.f32 %v1627, %v2079
    %2081 = vmatpush1.msra.mxu0 %v2080
    %2082 = vmatprep.subr.mxu0 0.0
    %v2083 = vand.u32 %v1628, 4294901760
    %v2084 = vsub.f32 %v1628, %v2083
    %2085 = vmatpush1.msra.mxu0 %v2084
    %2086 = vmatprep.subr.mxu0 0.0
    %v2087 = vand.u32 %v1629, 4294901760
    %v2088 = vsub.f32 %v1629, %v2087
    %2089 = vmatpush1.msra.mxu0 %v2088
    %2090 = vmatprep.subr.mxu0 0.0
    %v2091 = vand.u32 %v1630, 4294901760
    %v2092 = vsub.f32 %v1630, %v2091
    %2093 = vmatpush1.msra.mxu0 %v2092
    %2094 = vmatprep.subr.mxu0 0.0
    %v2095 = vand.u32 %v1631, 4294901760
    %v2096 = vsub.f32 %v1631, %v2095
    %2097 = vmatpush1.msra.mxu0 %v2096
    %2098 = vmatprep.subr.mxu0 0.0
    %v2099 = vand.u32 %v1632, 4294901760
    %v2100 = vsub.f32 %v1632, %v2099
    %2101 = vmatpush1.msra.mxu0 %v2100
    %2102 = vmatprep.subr.mxu0 0.0
    %v2103 = vand.u32 %v1633, 4294901760
    %v2104 = vsub.f32 %v1633, %v2103
    %2105 = vmatpush1.msra.mxu0 %v2104
    %2106 = vmatprep.subr.mxu0 0.0
    %v2107 = vand.u32 %v1634, 4294901760
    %v2108 = vsub.f32 %v1634, %v2107
    %2109 = vmatpush1.msra.mxu0 %v2108
    %2110 = vmatprep.subr.mxu0 0.0
    %v2111 = vand.u32 %v1635, 4294901760
    %v2112 = vsub.f32 %v1635, %v2111
    %2113 = vmatpush1.msra.mxu0 %v2112
    %2114 = vmatprep.subr.mxu0 0.0
    %v2115 = vand.u32 %v1636, 4294901760
    %v2116 = vsub.f32 %v1636, %v2115
    %2117 = vmatpush1.msra.mxu0 %v2116
    %2118 = vmatprep.subr.mxu0 0.0
    %v2119 = vand.u32 %v1637, 4294901760
    %v2120 = vsub.f32 %v1637, %v2119
    %2121 = vmatpush1.msra.mxu0 %v2120
    %2122 = vmatprep.subr.mxu0 0.0
    %v2123 = vand.u32 %v1638, 4294901760
    %v2124 = vsub.f32 %v1638, %v2123
    %2125 = vmatpush1.msra.mxu0 %v2124
    %2126 = vmatprep.subr.mxu0 0.0
    %v2127 = vand.u32 %v1639, 4294901760
    %v2128 = vsub.f32 %v1639, %v2127
    %2129 = vmatpush1.msra.mxu0 %v2128
    %2130 = vmatprep.subr.mxu0 0.0
    %v2131 = vand.u32 %v1640, 4294901760
    %v2132 = vsub.f32 %v1640, %v2131
    %2133 = vmatpush1.msra.mxu0 %v2132
    %2134 = vmatprep.subr.mxu0 0.0
    %v2135 = vand.u32 %v1641, 4294901760
    %v2136 = vsub.f32 %v1641, %v2135
    %2137 = vmatpush1.msra.mxu0 %v2136
    %2138 = vmatprep.subr.mxu0 0.0
    %v2139 = vand.u32 %v1642, 4294901760
    %v2140 = vsub.f32 %v1642, %v2139
    %2141 = vmatpush1.msra.mxu0 %v2140
    %2142 = vmatprep.subr.mxu0 0.0
    %v2143 = vand.u32 %v1643, 4294901760
    %v2144 = vsub.f32 %v1643, %v2143
    %2145 = vmatpush1.msra.mxu0 %v2144
    %2146 = vmatprep.subr.mxu0 0.0
    %v2147 = vand.u32 %v1644, 4294901760
    %v2148 = vsub.f32 %v1644, %v2147
    %2149 = vmatpush1.msra.mxu0 %v2148
    %2150 = vmatprep.subr.mxu0 0.0
    %v2151 = vand.u32 %v1645, 4294901760
    %v2152 = vsub.f32 %v1645, %v2151
    %2153 = vmatpush1.msra.mxu0 %v2152
    %2154 = vmatprep.subr.mxu0 0.0
    %v2155 = vand.u32 %v1646, 4294901760
    %v2156 = vsub.f32 %v1646, %v2155
    %2157 = vmatpush1.msra.mxu0 %v2156
    %2158 = vmatprep.subr.mxu0 0.0
    %v2159 = vand.u32 %v1647, 4294901760
    %v2160 = vsub.f32 %v1647, %v2159
    %2161 = vmatpush1.msra.mxu0 %v2160
    %2162 = vmatprep.subr.mxu0 0.0
    %v2163 = vand.u32 %v1648, 4294901760
    %v2164 = vsub.f32 %v1648, %v2163
    %2165 = vmatpush1.msra.mxu0 %v2164
    %v2166 = vand.u32 %v1603, 4294901760
    %v2167 = vsub.f32 %v1603, %v2166
    %2168 = vmatprep.mubr.f32.mxu0 %v2167
    %v2169 = vand.u32 %v1609, 4294901760
    %v2170 = vsub.f32 %v1609, %v2169
    %2171 = vmatmul.mubr.f32.gmra.mrb[0].mxu0 %v2170
    %v2172 = vpop.f32.mrb[0].mxu0
    %v2173 = vadd.f32 %v2028, %v2172
    %v2174 = vpop.f32.mrb[0].mxu0
    %v2175 = vand.u32 %v1604, 4294901760
    %v2176 = vsub.f32 %v1604, %v2175
    %2177 = vmatprep.mubr.f32.mxu0 %v2176
    %v2178 = vand.u32 %v1610, 4294901760
    %v2179 = vsub.f32 %v1610, %v2178
    %2180 = vmatmul.mubr.f32.gmra.mrb[0].mxu0 %v2179
    %v2181 = vpop.f32.mrb[0].mxu0
    %v2182 = vadd.f32 %v2035, %v2181
    %v2183 = vpop.f32.mrb[0].mxu0
    %2184 = vdwg.mxu0
    %2185 = vmatprep.subr.mxu0 0.0
    %v2186 = vand.u32 %v1617, 4294901760
    %2187 = vmatpush1.msra.mxu0 %v2186
    %2188 = vmatprep.subr.mxu0 0.0
    %v2189 = vand.u32 %v1618, 4294901760
    %2190 = vmatpush1.msra.mxu0 %v2189
    %2191 = vmatprep.subr.mxu0 0.0
    %v2192 = vand.u32 %v1619, 4294901760
    %2193 = vmatpush1.msra.mxu0 %v2192
    %2194 = vmatprep.subr.mxu0 0.0
    %v2195 = vand.u32 %v1620, 4294901760
    %2196 = vmatpush1.msra.mxu0 %v2195
    %2197 = vmatprep.subr.mxu0 0.0
    %v2198 = vand.u32 %v1621, 4294901760
    %2199 = vmatpush1.msra.mxu0 %v2198
    %2200 = vmatprep.subr.mxu0 0.0
    %v2201 = vand.u32 %v1622, 4294901760
    %2202 = vmatpush1.msra.mxu0 %v2201
    %2203 = vmatprep.subr.mxu0 0.0
    %v2204 = vand.u32 %v1623, 4294901760
    %2205 = vmatpush1.msra.mxu0 %v2204
    %2206 = vmatprep.subr.mxu0 0.0
    %v2207 = vand.u32 %v1624, 4294901760
    %2208 = vmatpush1.msra.mxu0 %v2207
    %2209 = vmatprep.subr.mxu0 0.0
    %v2210 = vand.u32 %v1625, 4294901760
    %2211 = vmatpush1.msra.mxu0 %v2210
    %2212 = vmatprep.subr.mxu0 0.0
    %v2213 = vand.u32 %v1626, 4294901760
    %2214 = vmatpush1.msra.mxu0 %v2213
    %2215 = vmatprep.subr.mxu0 0.0
    %v2216 = vand.u32 %v1627, 4294901760
    %2217 = vmatpush1.msra.mxu0 %v2216
    %2218 = vmatprep.subr.mxu0 0.0
    %v2219 = vand.u32 %v1628, 4294901760
    %2220 = vmatpush1.msra.mxu0 %v2219
    %2221 = vmatprep.subr.mxu0 0.0
    %v2222 = vand.u32 %v1629, 4294901760
    %2223 = vmatpush1.msra.mxu0 %v2222
    %2224 = vmatprep.subr.mxu0 0.0
    %v2225 = vand.u32 %v1630, 4294901760
    %2226 = vmatpush1.msra.mxu0 %v2225
    %2227 = vmatprep.subr.mxu0 0.0
    %v2228 = vand.u32 %v1631, 4294901760
    %2229 = vmatpush1.msra.mxu0 %v2228
    %2230 = vmatprep.subr.mxu0 0.0
    %v2231 = vand.u32 %v1632, 4294901760
    %2232 = vmatpush1.msra.mxu0 %v2231
    %2233 = vmatprep.subr.mxu0 0.0
    %v2234 = vand.u32 %v1633, 4294901760
    %2235 = vmatpush1.msra.mxu0 %v2234
    %2236 = vmatprep.subr.mxu0 0.0
    %v2237 = vand.u32 %v1634, 4294901760
    %2238 = vmatpush1.msra.mxu0 %v2237
    %2239 = vmatprep.subr.mxu0 0.0
    %v2240 = vand.u32 %v1635, 4294901760
    %2241 = vmatpush1.msra.mxu0 %v2240
    %2242 = vmatprep.subr.mxu0 0.0
    %v2243 = vand.u32 %v1636, 4294901760
    %2244 = vmatpush1.msra.mxu0 %v2243
    %2245 = vmatprep.subr.mxu0 0.0
    %v2246 = vand.u32 %v1637, 4294901760
    %2247 = vmatpush1.msra.mxu0 %v2246
    %2248 = vmatprep.subr.mxu0 0.0
    %v2249 = vand.u32 %v1638, 4294901760
    %2250 = vmatpush1.msra.mxu0 %v2249
    %2251 = vmatprep.subr.mxu0 0.0
    %v2252 = vand.u32 %v1639, 4294901760
    %2253 = vmatpush1.msra.mxu0 %v2252
    %2254 = vmatprep.subr.mxu0 0.0
    %v2255 = vand.u32 %v1640, 4294901760
    %2256 = vmatpush1.msra.mxu0 %v2255
    %2257 = vmatprep.subr.mxu0 0.0
    %v2258 = vand.u32 %v1641, 4294901760
    %2259 = vmatpush1.msra.mxu0 %v2258
    %2260 = vmatprep.subr.mxu0 0.0
    %v2261 = vand.u32 %v1642, 4294901760
    %2262 = vmatpush1.msra.mxu0 %v2261
    %2263 = vmatprep.subr.mxu0 0.0
    %v2264 = vand.u32 %v1643, 4294901760
    %2265 = vmatpush1.msra.mxu0 %v2264
    %2266 = vmatprep.subr.mxu0 0.0
    %v2267 = vand.u32 %v1644, 4294901760
    %2268 = vmatpush1.msra.mxu0 %v2267
    %2269 = vmatprep.subr.mxu0 0.0
    %v2270 = vand.u32 %v1645, 4294901760
    %2271 = vmatpush1.msra.mxu0 %v2270
    %2272 = vmatprep.subr.mxu0 0.0
    %v2273 = vand.u32 %v1646, 4294901760
    %2274 = vmatpush1.msra.mxu0 %v2273
    %2275 = vmatprep.subr.mxu0 0.0
    %v2276 = vand.u32 %v1647, 4294901760
    %2277 = vmatpush1.msra.mxu0 %v2276
    %2278 = vmatprep.subr.mxu0 0.0
    %v2279 = vand.u32 %v1648, 4294901760
    %2280 = vmatpush1.msra.mxu0 %v2279
    %v2281 = vand.u32 %v1603, 4294901760
    %v2282 = vsub.f32 %v1603, %v2281
    %v2283 = vand.u32 %v2282, 4294901760
    %2284 = vmatprep.mubr.f32.mxu0 %v2283
    %v2285 = vand.u32 %v1609, 4294901760
    %v2286 = vsub.f32 %v1609, %v2285
    %v2287 = vand.u32 %v2286, 4294901760
    %2288 = vmatmul.mubr.f32.gmra.mrb[0].mxu0 %v2287
    %v2289 = vpop.f32.mrb[0].mxu0
    %v2290 = vadd.f32 %v2173, %v2289
    %v2291 = vpop.f32.mrb[0].mxu0
    %v2292 = vand.u32 %v1604, 4294901760
    %v2293 = vsub.f32 %v1604, %v2292
    %v2294 = vand.u32 %v2293, 4294901760
    %2295 = vmatprep.mubr.f32.mxu0 %v2294
    %v2296 = vand.u32 %v1610, 4294901760
    %v2297 = vsub.f32 %v1610, %v2296
    %v2298 = vand.u32 %v2297, 4294901760
    %2299 = vmatmul.mubr.f32.gmra.mrb[0].mxu0 %v2298
    %v2300 = vpop.f32.mrb[0].mxu0
    %v2301 = vadd.f32 %v2182, %v2300
    %v2302 = vpop.f32.mrb[0].mxu0
    %2303 = vdwg.mxu0
    %2304 = vmatprep.subr.mxu0 0.0
    %v2305 = vand.u32 %v1617, 4294901760
    %v2306 = vsub.f32 %v1617, %v2305
    %v2307 = vand.u32 %v2306, 4294901760
    %2308 = vmatpush1.msra.mxu0 %v2307
    %2309 = vmatprep.subr.mxu0 0.0
    %v2310 = vand.u32 %v1618, 4294901760
    %v2311 = vsub.f32 %v1618, %v2310
    %v2312 = vand.u32 %v2311, 4294901760
    %2313 = vmatpush1.msra.mxu0 %v2312
    %2314 = vmatprep.subr.mxu0 0.0
    %v2315 = vand.u32 %v1619, 4294901760
    %v2316 = vsub.f32 %v1619, %v2315
    %v2317 = vand.u32 %v2316, 4294901760
    %2318 = vmatpush1.msra.mxu0 %v2317
    %2319 = vmatprep.subr.mxu0 0.0
    %v2320 = vand.u32 %v1620, 4294901760
    %v2321 = vsub.f32 %v1620, %v2320
    %v2322 = vand.u32 %v2321, 4294901760
    %2323 = vmatpush1.msra.mxu0 %v2322
    %2324 = vmatprep.subr.mxu0 0.0
    %v2325 = vand.u32 %v1621, 4294901760
    %v2326 = vsub.f32 %v1621, %v2325
    %v2327 = vand.u32 %v2326, 4294901760
    %2328 = vmatpush1.msra.mxu0 %v2327
    %2329 = vmatprep.subr.mxu0 0.0
    %v2330 = vand.u32 %v1622, 4294901760
    %v2331 = vsub.f32 %v1622, %v2330
    %v2332 = vand.u32 %v2331, 4294901760
    %2333 = vmatpush1.msra.mxu0 %v2332
    %2334 = vmatprep.subr.mxu0 0.0
    %v2335 = vand.u32 %v1623, 4294901760
    %v2336 = vsub.f32 %v1623, %v2335
    %v2337 = vand.u32 %v2336, 4294901760
    %2338 = vmatpush1.msra.mxu0 %v2337
    %2339 = vmatprep.subr.mxu0 0.0
    %v2340 = vand.u32 %v1624, 4294901760
    %v2341 = vsub.f32 %v1624, %v2340
    %v2342 = vand.u32 %v2341, 4294901760
    %2343 = vmatpush1.msra.mxu0 %v2342
    %2344 = vmatprep.subr.mxu0 0.0
    %v2345 = vand.u32 %v1625, 4294901760
    %v2346 = vsub.f32 %v1625, %v2345
    %v2347 = vand.u32 %v2346, 4294901760
    %2348 = vmatpush1.msra.mxu0 %v2347
    %2349 = vmatprep.subr.mxu0 0.0
    %v2350 = vand.u32 %v1626, 4294901760
    %v2351 = vsub.f32 %v1626, %v2350
    %v2352 = vand.u32 %v2351, 4294901760
    %2353 = vmatpush1.msra.mxu0 %v2352
    %2354 = vmatprep.subr.mxu0 0.0
    %v2355 = vand.u32 %v1627, 4294901760
    %v2356 = vsub.f32 %v1627, %v2355
    %v2357 = vand.u32 %v2356, 4294901760
    %2358 = vmatpush1.msra.mxu0 %v2357
    %2359 = vmatprep.subr.mxu0 0.0
    %v2360 = vand.u32 %v1628, 4294901760
    %v2361 = vsub.f32 %v1628, %v2360
    %v2362 = vand.u32 %v2361, 4294901760
    %2363 = vmatpush1.msra.mxu0 %v2362
    %2364 = vmatprep.subr.mxu0 0.0
    %v2365 = vand.u32 %v1629, 4294901760
    %v2366 = vsub.f32 %v1629, %v2365
    %v2367 = vand.u32 %v2366, 4294901760
    %2368 = vmatpush1.msra.mxu0 %v2367
    %2369 = vmatprep.subr.mxu0 0.0
    %v2370 = vand.u32 %v1630, 4294901760
    %v2371 = vsub.f32 %v1630, %v2370
    %v2372 = vand.u32 %v2371, 4294901760
    %2373 = vmatpush1.msra.mxu0 %v2372
    %2374 = vmatprep.subr.mxu0 0.0
    %v2375 = vand.u32 %v1631, 4294901760
    %v2376 = vsub.f32 %v1631, %v2375
    %v2377 = vand.u32 %v2376, 4294901760
    %2378 = vmatpush1.msra.mxu0 %v2377
    %2379 = vmatprep.subr.mxu0 0.0
    %v2380 = vand.u32 %v1632, 4294901760
    %v2381 = vsub.f32 %v1632, %v2380
    %v2382 = vand.u32 %v2381, 4294901760
    %2383 = vmatpush1.msra.mxu0 %v2382
    %2384 = vmatprep.subr.mxu0 0.0
    %v2385 = vand.u32 %v1633, 4294901760
    %v2386 = vsub.f32 %v1633, %v2385
    %v2387 = vand.u32 %v2386, 4294901760
    %2388 = vmatpush1.msra.mxu0 %v2387
    %2389 = vmatprep.subr.mxu0 0.0
    %v2390 = vand.u32 %v1634, 4294901760
    %v2391 = vsub.f32 %v1634, %v2390
    %v2392 = vand.u32 %v2391, 4294901760
    %2393 = vmatpush1.msra.mxu0 %v2392
    %2394 = vmatprep.subr.mxu0 0.0
    %v2395 = vand.u32 %v1635, 4294901760
    %v2396 = vsub.f32 %v1635, %v2395
    %v2397 = vand.u32 %v2396, 4294901760
    %2398 = vmatpush1.msra.mxu0 %v2397
    %2399 = vmatprep.subr.mxu0 0.0
    %v2400 = vand.u32 %v1636, 4294901760
    %v2401 = vsub.f32 %v1636, %v2400
    %v2402 = vand.u32 %v2401, 4294901760
    %2403 = vmatpush1.msra.mxu0 %v2402
    %2404 = vmatprep.subr.mxu0 0.0
    %v2405 = vand.u32 %v1637, 4294901760
    %v2406 = vsub.f32 %v1637, %v2405
    %v2407 = vand.u32 %v2406, 4294901760
    %2408 = vmatpush1.msra.mxu0 %v2407
    %2409 = vmatprep.subr.mxu0 0.0
    %v2410 = vand.u32 %v1638, 4294901760
    %v2411 = vsub.f32 %v1638, %v2410
    %v2412 = vand.u32 %v2411, 4294901760
    %2413 = vmatpush1.msra.mxu0 %v2412
    %2414 = vmatprep.subr.mxu0 0.0
    %v2415 = vand.u32 %v1639, 4294901760
    %v2416 = vsub.f32 %v1639, %v2415
    %v2417 = vand.u32 %v2416, 4294901760
    %2418 = vmatpush1.msra.mxu0 %v2417
    %2419 = vmatprep.subr.mxu0 0.0
    %v2420 = vand.u32 %v1640, 4294901760
    %v2421 = vsub.f32 %v1640, %v2420
    %v2422 = vand.u32 %v2421, 4294901760
    %2423 = vmatpush1.msra.mxu0 %v2422
    %2424 = vmatprep.subr.mxu0 0.0
    %v2425 = vand.u32 %v1641, 4294901760
    %v2426 = vsub.f32 %v1641, %v2425
    %v2427 = vand.u32 %v2426, 4294901760
    %2428 = vmatpush1.msra.mxu0 %v2427
    %2429 = vmatprep.subr.mxu0 0.0
    %v2430 = vand.u32 %v1642, 4294901760
    %v2431 = vsub.f32 %v1642, %v2430
    %v2432 = vand.u32 %v2431, 4294901760
    %2433 = vmatpush1.msra.mxu0 %v2432
    %2434 = vmatprep.subr.mxu0 0.0
    %v2435 = vand.u32 %v1643, 4294901760
    %v2436 = vsub.f32 %v1643, %v2435
    %v2437 = vand.u32 %v2436, 4294901760
    %2438 = vmatpush1.msra.mxu0 %v2437
    %2439 = vmatprep.subr.mxu0 0.0
    %v2440 = vand.u32 %v1644, 4294901760
    %v2441 = vsub.f32 %v1644, %v2440
    %v2442 = vand.u32 %v2441, 4294901760
    %2443 = vmatpush1.msra.mxu0 %v2442
    %2444 = vmatprep.subr.mxu0 0.0
    %v2445 = vand.u32 %v1645, 4294901760
    %v2446 = vsub.f32 %v1645, %v2445
    %v2447 = vand.u32 %v2446, 4294901760
    %2448 = vmatpush1.msra.mxu0 %v2447
    %2449 = vmatprep.subr.mxu0 0.0
    %v2450 = vand.u32 %v1646, 4294901760
    %v2451 = vsub.f32 %v1646, %v2450
    %v2452 = vand.u32 %v2451, 4294901760
    %2453 = vmatpush1.msra.mxu0 %v2452
    %2454 = vmatprep.subr.mxu0 0.0
    %v2455 = vand.u32 %v1647, 4294901760
    %v2456 = vsub.f32 %v1647, %v2455
    %v2457 = vand.u32 %v2456, 4294901760
    %2458 = vmatpush1.msra.mxu0 %v2457
    %2459 = vmatprep.subr.mxu0 0.0
    %v2460 = vand.u32 %v1648, 4294901760
    %v2461 = vsub.f32 %v1648, %v2460
    %v2462 = vand.u32 %v2461, 4294901760
    %2463 = vmatpush1.msra.mxu0 %v2462
    %v2464 = vand.u32 %v1603, 4294901760
    %2465 = vmatprep.mubr.f32.mxu0 %v2464
    %v2466 = vand.u32 %v1609, 4294901760
    %2467 = vmatmul.mubr.f32.gmra.mrb[0].mxu0 %v2466
    %v2468 = vpop.f32.mrb[0].mxu0
    %v2469 = vadd.f32 %v2290, %v2468
    %v2470 = vpop.f32.mrb[0].mxu0
    %v2471 = vand.u32 %v1604, 4294901760
    %2472 = vmatprep.mubr.f32.mxu0 %v2471
    %v2473 = vand.u32 %v1610, 4294901760
    %2474 = vmatmul.mubr.f32.gmra.mrb[0].mxu0 %v2473
    %v2475 = vpop.f32.mrb[0].mxu0
    %v2476 = vadd.f32 %v2301, %v2475
    %v2477 = vpop.f32.mrb[0].mxu0
    %2478 = vdwg.mxu0
    %2479 = vmatprep.subr.mxu0 0.0
    %v2480 = vand.u32 %v1617, 4294901760
    %2481 = vmatpush1.msra.mxu0 %v2480
    %2482 = vmatprep.subr.mxu0 0.0
    %v2483 = vand.u32 %v1618, 4294901760
    %2484 = vmatpush1.msra.mxu0 %v2483
    %2485 = vmatprep.subr.mxu0 0.0
    %v2486 = vand.u32 %v1619, 4294901760
    %2487 = vmatpush1.msra.mxu0 %v2486
    %2488 = vmatprep.subr.mxu0 0.0
    %v2489 = vand.u32 %v1620, 4294901760
    %2490 = vmatpush1.msra.mxu0 %v2489
    %2491 = vmatprep.subr.mxu0 0.0
    %v2492 = vand.u32 %v1621, 4294901760
    %2493 = vmatpush1.msra.mxu0 %v2492
    %2494 = vmatprep.subr.mxu0 0.0
    %v2495 = vand.u32 %v1622, 4294901760
    %2496 = vmatpush1.msra.mxu0 %v2495
    %2497 = vmatprep.subr.mxu0 0.0
    %v2498 = vand.u32 %v1623, 4294901760
    %2499 = vmatpush1.msra.mxu0 %v2498
    %2500 = vmatprep.subr.mxu0 0.0
    %v2501 = vand.u32 %v1624, 4294901760
    %2502 = vmatpush1.msra.mxu0 %v2501
    %2503 = vmatprep.subr.mxu0 0.0
    %v2504 = vand.u32 %v1625, 4294901760
    %2505 = vmatpush1.msra.mxu0 %v2504
    %2506 = vmatprep.subr.mxu0 0.0
    %v2507 = vand.u32 %v1626, 4294901760
    %2508 = vmatpush1.msra.mxu0 %v2507
    %2509 = vmatprep.subr.mxu0 0.0
    %v2510 = vand.u32 %v1627, 4294901760
    %2511 = vmatpush1.msra.mxu0 %v2510
    %2512 = vmatprep.subr.mxu0 0.0
    %v2513 = vand.u32 %v1628, 4294901760
    %2514 = vmatpush1.msra.mxu0 %v2513
    %2515 = vmatprep.subr.mxu0 0.0
    %v2516 = vand.u32 %v1629, 4294901760
    %2517 = vmatpush1.msra.mxu0 %v2516
    %2518 = vmatprep.subr.mxu0 0.0
    %v2519 = vand.u32 %v1630, 4294901760
    %2520 = vmatpush1.msra.mxu0 %v2519
    %2521 = vmatprep.subr.mxu0 0.0
    %v2522 = vand.u32 %v1631, 4294901760
    %2523 = vmatpush1.msra.mxu0 %v2522
    %2524 = vmatprep.subr.mxu0 0.0
    %v2525 = vand.u32 %v1632, 4294901760
    %2526 = vmatpush1.msra.mxu0 %v2525
    %2527 = vmatprep.subr.mxu0 0.0
    %v2528 = vand.u32 %v1633, 4294901760
    %2529 = vmatpush1.msra.mxu0 %v2528
    %2530 = vmatprep.subr.mxu0 0.0
    %v2531 = vand.u32 %v1634, 4294901760
    %2532 = vmatpush1.msra.mxu0 %v2531
    %2533 = vmatprep.subr.mxu0 0.0
    %v2534 = vand.u32 %v1635, 4294901760
    %2535 = vmatpush1.msra.mxu0 %v2534
    %2536 = vmatprep.subr.mxu0 0.0
    %v2537 = vand.u32 %v1636, 4294901760
    %2538 = vmatpush1.msra.mxu0 %v2537
    %2539 = vmatprep.subr.mxu0 0.0
    %v2540 = vand.u32 %v1637, 4294901760
    %2541 = vmatpush1.msra.mxu0 %v2540
    %2542 = vmatprep.subr.mxu0 0.0
    %v2543 = vand.u32 %v1638, 4294901760
    %2544 = vmatpush1.msra.mxu0 %v2543
    %2545 = vmatprep.subr.mxu0 0.0
    %v2546 = vand.u32 %v1639, 4294901760
    %2547 = vmatpush1.msra.mxu0 %v2546
    %2548 = vmatprep.subr.mxu0 0.0
    %v2549 = vand.u32 %v1640, 4294901760
    %2550 = vmatpush1.msra.mxu0 %v2549
    %2551 = vmatprep.subr.mxu0 0.0
    %v2552 = vand.u32 %v1641, 4294901760
    %2553 = vmatpush1.msra.mxu0 %v2552
    %2554 = vmatprep.subr.mxu0 0.0
    %v2555 = vand.u32 %v1642, 4294901760
    %2556 = vmatpush1.msra.mxu0 %v2555
    %2557 = vmatprep.subr.mxu0 0.0
    %v2558 = vand.u32 %v1643, 4294901760
    %2559 = vmatpush1.msra.mxu0 %v2558
    %2560 = vmatprep.subr.mxu0 0.0
    %v2561 = vand.u32 %v1644, 4294901760
    %2562 = vmatpush1.msra.mxu0 %v2561
    %2563 = vmatprep.subr.mxu0 0.0
    %v2564 = vand.u32 %v1645, 4294901760
    %2565 = vmatpush1.msra.mxu0 %v2564
    %2566 = vmatprep.subr.mxu0 0.0
    %v2567 = vand.u32 %v1646, 4294901760
    %2568 = vmatpush1.msra.mxu0 %v2567
    %2569 = vmatprep.subr.mxu0 0.0
    %v2570 = vand.u32 %v1647, 4294901760
    %2571 = vmatpush1.msra.mxu0 %v2570
    %2572 = vmatprep.subr.mxu0 0.0
    %v2573 = vand.u32 %v1648, 4294901760
    %2574 = vmatpush1.msra.mxu0 %v2573
    %v2575 = vand.u32 %v1603, 4294901760
    %2576 = vmatprep.mubr.f32.mxu0 %v2575
    %v2577 = vand.u32 %v1609, 4294901760
    %2578 = vmatmul.mubr.f32.gmra.mrb[0].mxu0 %v2577
    %v2579 = vpop.f32.mrb[0].mxu0
    %v2580 = vadd.f32 %v2469, %v2579
    %v2581 = vpop.f32.mrb[0].mxu0
    %v2582 = vand.u32 %v1604, 4294901760
    %2583 = vmatprep.mubr.f32.mxu0 %v2582
    %v2584 = vand.u32 %v1610, 4294901760
    %2585 = vmatmul.mubr.f32.gmra.mrb[0].mxu0 %v2584
    %v2586 = vpop.f32.mrb[0].mxu0
    %v2587 = vadd.f32 %v2476, %v2586
    %v2588 = vpop.f32.mrb[0].mxu0
    %2589 = vdwg.mxu0
    %2590 = vmatprep.subr.mxu0 0.0
    %v2591 = vand.u32 %v1649, 4294901760
    %2592 = vmatpush1.msra.mxu0 %v2591
    %2593 = vmatprep.subr.mxu0 0.0
    %v2594 = vand.u32 %v1650, 4294901760
    %2595 = vmatpush1.msra.mxu0 %v2594
    %2596 = vmatprep.subr.mxu0 0.0
    %v2597 = vand.u32 %v1651, 4294901760
    %2598 = vmatpush1.msra.mxu0 %v2597
    %2599 = vmatprep.subr.mxu0 0.0
    %v2600 = vand.u32 %v1652, 4294901760
    %2601 = vmatpush1.msra.mxu0 %v2600
    %2602 = vmatprep.subr.mxu0 0.0
    %v2603 = vand.u32 %v1653, 4294901760
    %2604 = vmatpush1.msra.mxu0 %v2603
    %2605 = vmatprep.subr.mxu0 0.0
    %v2606 = vand.u32 %v1654, 4294901760
    %2607 = vmatpush1.msra.mxu0 %v2606
    %2608 = vmatprep.subr.mxu0 0.0
    %v2609 = vand.u32 %v1655, 4294901760
    %2610 = vmatpush1.msra.mxu0 %v2609
    %2611 = vmatprep.subr.mxu0 0.0
    %v2612 = vand.u32 %v1656, 4294901760
    %2613 = vmatpush1.msra.mxu0 %v2612
    %2614 = vmatprep.subr.mxu0 0.0
    %v2615 = vand.u32 %v1657, 4294901760
    %2616 = vmatpush1.msra.mxu0 %v2615
    %2617 = vmatprep.subr.mxu0 0.0
    %v2618 = vand.u32 %v1658, 4294901760
    %2619 = vmatpush1.msra.mxu0 %v2618
    %2620 = vmatprep.subr.mxu0 0.0
    %v2621 = vand.u32 %v1659, 4294901760
    %2622 = vmatpush1.msra.mxu0 %v2621
    %2623 = vmatprep.subr.mxu0 0.0
    %v2624 = vand.u32 %v1660, 4294901760
    %2625 = vmatpush1.msra.mxu0 %v2624
    %2626 = vmatprep.subr.mxu0 0.0
    %v2627 = vand.u32 %v1661, 4294901760
    %2628 = vmatpush1.msra.mxu0 %v2627
    %2629 = vmatprep.subr.mxu0 0.0
    %v2630 = vand.u32 %v1662, 4294901760
    %2631 = vmatpush1.msra.mxu0 %v2630
    %2632 = vmatprep.subr.mxu0 0.0
    %v2633 = vand.u32 %v1663, 4294901760
    %2634 = vmatpush1.msra.mxu0 %v2633
    %2635 = vmatprep.subr.mxu0 0.0
    %v2636 = vand.u32 %v1664, 4294901760
    %2637 = vmatpush1.msra.mxu0 %v2636
    %2638 = vmatprep.subr.mxu0 0.0
    %2639 = vmatpush1.msra.mxu0 0.0
    %2640 = vmatprep.subr.mxu0 0.0
    %2641 = vmatpush1.msra.mxu0 0.0
    %2642 = vmatprep.subr.mxu0 0.0
    %2643 = vmatpush1.msra.mxu0 0.0
    %2644 = vmatprep.subr.mxu0 0.0
    %2645 = vmatpush1.msra.mxu0 0.0
    %2646 = vmatprep.subr.mxu0 0.0
    %2647 = vmatpush1.msra.mxu0 0.0
    %2648 = vmatprep.subr.mxu0 0.0
    %2649 = vmatpush1.msra.mxu0 0.0
    %2650 = vmatprep.subr.mxu0 0.0
    %2651 = vmatpush1.msra.mxu0 0.0
    %2652 = vmatprep.subr.mxu0 0.0
    %2653 = vmatpush1.msra.mxu0 0.0
    %2654 = vmatprep.subr.mxu0 0.0
    %2655 = vmatpush1.msra.mxu0 0.0
    %2656 = vmatprep.subr.mxu0 0.0
    %2657 = vmatpush1.msra.mxu0 0.0
    %2658 = vmatprep.subr.mxu0 0.0
    %2659 = vmatpush1.msra.mxu0 0.0
    %2660 = vmatprep.subr.mxu0 0.0
    %2661 = vmatpush1.msra.mxu0 0.0
    %2662 = vmatprep.subr.mxu0 0.0
    %2663 = vmatpush1.msra.mxu0 0.0
    %2664 = vmatprep.subr.mxu0 0.0
    %2665 = vmatpush1.msra.mxu0 0.0
    %2666 = vmatprep.subr.mxu0 0.0
    %2667 = vmatpush1.msra.mxu0 0.0
    %2668 = vmatprep.subr.mxu0 0.0
    %2669 = vmatpush1.msra.mxu0 0.0
    %2670 = vmatprep.mubr.f32.mxu0 0.0
    %v2671 = vand.u32 %v1615, 4294901760
    %v2672 = vsub.f32 %v1615, %v2671
    %v2673 = vand.u32 %v2672, 4294901760
    %v2674 = vsub.f32 %v2672, %v2673
    %v2675 = vand.u32 %v2674, 4294901760
    %2676 = vmatmul.mubr.f32.gmra.mrb[0].mxu0 %v2675
    %v2677 = vpop.f32.mrb[0].mxu0
    %v2678 = vadd.f32 %v2580, %v2677
    %v2679 = vpop.f32.mrb[0].mxu0
    %2680 = vmatprep.mubr.f32.mxu0 0.0
    %v2681 = vand.u32 %v1616, 4294901760
    %v2682 = vsub.f32 %v1616, %v2681
    %v2683 = vand.u32 %v2682, 4294901760
    %v2684 = vsub.f32 %v2682, %v2683
    %v2685 = vand.u32 %v2684, 4294901760
    %2686 = vmatmul.mubr.f32.gmra.mrb[0].mxu0 %v2685
    %v2687 = vpop.f32.mrb[0].mxu0
    %v2688 = vadd.f32 %v2587, %v2687
    %v2689 = vpop.f32.mrb[0].mxu0
    %2690 = vdwg.mxu0
    %2691 = vmatprep.subr.mxu0 0.0
    %v2692 = vand.u32 %v1649, 4294901760
    %v2693 = vsub.f32 %v1649, %v2692
    %v2694 = vand.u32 %v2693, 4294901760
    %v2695 = vsub.f32 %v2693, %v2694
    %v2696 = vand.u32 %v2695, 4294901760
    %2697 = vmatpush1.msra.mxu0 %v2696
    %2698 = vmatprep.subr.mxu0 0.0
    %v2699 = vand.u32 %v1650, 4294901760
    %v2700 = vsub.f32 %v1650, %v2699
    %v2701 = vand.u32 %v2700, 4294901760
    %v2702 = vsub.f32 %v2700, %v2701
    %v2703 = vand.u32 %v2702, 4294901760
    %2704 = vmatpush1.msra.mxu0 %v2703
    %2705 = vmatprep.subr.mxu0 0.0
    %v2706 = vand.u32 %v1651, 4294901760
    %v2707 = vsub.f32 %v1651, %v2706
    %v2708 = vand.u32 %v2707, 4294901760
    %v2709 = vsub.f32 %v2707, %v2708
    %v2710 = vand.u32 %v2709, 4294901760
    %2711 = vmatpush1.msra.mxu0 %v2710
    %2712 = vmatprep.subr.mxu0 0.0
    %v2713 = vand.u32 %v1652, 4294901760
    %v2714 = vsub.f32 %v1652, %v2713
    %v2715 = vand.u32 %v2714, 4294901760
    %v2716 = vsub.f32 %v2714, %v2715
    %v2717 = vand.u32 %v2716, 4294901760
    %2718 = vmatpush1.msra.mxu0 %v2717
    %2719 = vmatprep.subr.mxu0 0.0
    %v2720 = vand.u32 %v1653, 4294901760
    %v2721 = vsub.f32 %v1653, %v2720
    %v2722 = vand.u32 %v2721, 4294901760
    %v2723 = vsub.f32 %v2721, %v2722
    %v2724 = vand.u32 %v2723, 4294901760
    %2725 = vmatpush1.msra.mxu0 %v2724
    %2726 = vmatprep.subr.mxu0 0.0
    %v2727 = vand.u32 %v1654, 4294901760
    %v2728 = vsub.f32 %v1654, %v2727
    %v2729 = vand.u32 %v2728, 4294901760
    %v2730 = vsub.f32 %v2728, %v2729
    %v2731 = vand.u32 %v2730, 4294901760
    %2732 = vmatpush1.msra.mxu0 %v2731
    %2733 = vmatprep.subr.mxu0 0.0
    %v2734 = vand.u32 %v1655, 4294901760
    %v2735 = vsub.f32 %v1655, %v2734
    %v2736 = vand.u32 %v2735, 4294901760
    %v2737 = vsub.f32 %v2735, %v2736
    %v2738 = vand.u32 %v2737, 4294901760
    %2739 = vmatpush1.msra.mxu0 %v2738
    %2740 = vmatprep.subr.mxu0 0.0
    %v2741 = vand.u32 %v1656, 4294901760
    %v2742 = vsub.f32 %v1656, %v2741
    %v2743 = vand.u32 %v2742, 4294901760
    %v2744 = vsub.f32 %v2742, %v2743
    %v2745 = vand.u32 %v2744, 4294901760
    %2746 = vmatpush1.msra.mxu0 %v2745
    %2747 = vmatprep.subr.mxu0 0.0
    %v2748 = vand.u32 %v1657, 4294901760
    %v2749 = vsub.f32 %v1657, %v2748
    %v2750 = vand.u32 %v2749, 4294901760
    %v2751 = vsub.f32 %v2749, %v2750
    %v2752 = vand.u32 %v2751, 4294901760
    %2753 = vmatpush1.msra.mxu0 %v2752
    %2754 = vmatprep.subr.mxu0 0.0
    %v2755 = vand.u32 %v1658, 4294901760
    %v2756 = vsub.f32 %v1658, %v2755
    %v2757 = vand.u32 %v2756, 4294901760
    %v2758 = vsub.f32 %v2756, %v2757
    %v2759 = vand.u32 %v2758, 4294901760
    %2760 = vmatpush1.msra.mxu0 %v2759
    %2761 = vmatprep.subr.mxu0 0.0
    %v2762 = vand.u32 %v1659, 4294901760
    %v2763 = vsub.f32 %v1659, %v2762
    %v2764 = vand.u32 %v2763, 4294901760
    %v2765 = vsub.f32 %v2763, %v2764
    %v2766 = vand.u32 %v2765, 4294901760
    %2767 = vmatpush1.msra.mxu0 %v2766
    %2768 = vmatprep.subr.mxu0 0.0
    %v2769 = vand.u32 %v1660, 4294901760
    %v2770 = vsub.f32 %v1660, %v2769
    %v2771 = vand.u32 %v2770, 4294901760
    %v2772 = vsub.f32 %v2770, %v2771
    %v2773 = vand.u32 %v2772, 4294901760
    %2774 = vmatpush1.msra.mxu0 %v2773
    %2775 = vmatprep.subr.mxu0 0.0
    %v2776 = vand.u32 %v1661, 4294901760
    %v2777 = vsub.f32 %v1661, %v2776
    %v2778 = vand.u32 %v2777, 4294901760
    %v2779 = vsub.f32 %v2777, %v2778
    %v2780 = vand.u32 %v2779, 4294901760
    %2781 = vmatpush1.msra.mxu0 %v2780
    %2782 = vmatprep.subr.mxu0 0.0
    %v2783 = vand.u32 %v1662, 4294901760
    %v2784 = vsub.f32 %v1662, %v2783
    %v2785 = vand.u32 %v2784, 4294901760
    %v2786 = vsub.f32 %v2784, %v2785
    %v2787 = vand.u32 %v2786, 4294901760
    %2788 = vmatpush1.msra.mxu0 %v2787
    %2789 = vmatprep.subr.mxu0 0.0
    %v2790 = vand.u32 %v1663, 4294901760
    %v2791 = vsub.f32 %v1663, %v2790
    %v2792 = vand.u32 %v2791, 4294901760
    %v2793 = vsub.f32 %v2791, %v2792
    %v2794 = vand.u32 %v2793, 4294901760
    %2795 = vmatpush1.msra.mxu0 %v2794
    %2796 = vmatprep.subr.mxu0 0.0
    %v2797 = vand.u32 %v1664, 4294901760
    %v2798 = vsub.f32 %v1664, %v2797
    %v2799 = vand.u32 %v2798, 4294901760
    %v2800 = vsub.f32 %v2798, %v2799
    %v2801 = vand.u32 %v2800, 4294901760
    %2802 = vmatpush1.msra.mxu0 %v2801
    %2803 = vmatprep.subr.mxu0 0.0
    %2804 = vmatpush1.msra.mxu0 0.0
    %2805 = vmatprep.subr.mxu0 0.0
    %2806 = vmatpush1.msra.mxu0 0.0
    %2807 = vmatprep.subr.mxu0 0.0
    %2808 = vmatpush1.msra.mxu0 0.0
    %2809 = vmatprep.subr.mxu0 0.0
    %2810 = vmatpush1.msra.mxu0 0.0
    %2811 = vmatprep.subr.mxu0 0.0
    %2812 = vmatpush1.msra.mxu0 0.0
    %2813 = vmatprep.subr.mxu0 0.0
    %2814 = vmatpush1.msra.mxu0 0.0
    %2815 = vmatprep.subr.mxu0 0.0
    %2816 = vmatpush1.msra.mxu0 0.0
    %2817 = vmatprep.subr.mxu0 0.0
    %2818 = vmatpush1.msra.mxu0 0.0
    %2819 = vmatprep.subr.mxu0 0.0
    %2820 = vmatpush1.msra.mxu0 0.0
    %2821 = vmatprep.subr.mxu0 0.0
    %2822 = vmatpush1.msra.mxu0 0.0
    %2823 = vmatprep.subr.mxu0 0.0
    %2824 = vmatpush1.msra.mxu0 0.0
    %2825 = vmatprep.subr.mxu0 0.0
    %2826 = vmatpush1.msra.mxu0 0.0
    %2827 = vmatprep.subr.mxu0 0.0
    %2828 = vmatpush1.msra.mxu0 0.0
    %2829 = vmatprep.subr.mxu0 0.0
    %2830 = vmatpush1.msra.mxu0 0.0
    %2831 = vmatprep.subr.mxu0 0.0
    %2832 = vmatpush1.msra.mxu0 0.0
    %2833 = vmatprep.subr.mxu0 0.0
    %2834 = vmatpush1.msra.mxu0 0.0
    %2835 = vmatprep.mubr.f32.mxu0 0.0
    %v2836 = vand.u32 %v1615, 4294901760
    %2837 = vmatmul.mubr.f32.gmra.mrb[0].mxu0 %v2836
    %v2838 = vpop.f32.mrb[0].mxu0
    %v2839 = vadd.f32 %v2678, %v2838
    %v2840 = vpop.f32.mrb[0].mxu0
    %2841 = vmatprep.mubr.f32.mxu0 0.0
    %v2842 = vand.u32 %v1616, 4294901760
    %2843 = vmatmul.mubr.f32.gmra.mrb[0].mxu0 %v2842
    %v2844 = vpop.f32.mrb[0].mxu0
    %v2845 = vadd.f32 %v2688, %v2844
    %v2846 = vpop.f32.mrb[0].mxu0
    %2847 = vdwg.mxu0
    %2848 = vmatprep.subr.mxu0 0.0
    %v2849 = vand.u32 %v1649, 4294901760
    %v2850 = vsub.f32 %v1649, %v2849
    %2851 = vmatpush1.msra.mxu0 %v2850
    %2852 = vmatprep.subr.mxu0 0.0
    %v2853 = vand.u32 %v1650, 4294901760
    %v2854 = vsub.f32 %v1650, %v2853
    %2855 = vmatpush1.msra.mxu0 %v2854
    %2856 = vmatprep.subr.mxu0 0.0
    %v2857 = vand.u32 %v1651, 4294901760
    %v2858 = vsub.f32 %v1651, %v2857
    %2859 = vmatpush1.msra.mxu0 %v2858
    %2860 = vmatprep.subr.mxu0 0.0
    %v2861 = vand.u32 %v1652, 4294901760
    %v2862 = vsub.f32 %v1652, %v2861
    %2863 = vmatpush1.msra.mxu0 %v2862
    %2864 = vmatprep.subr.mxu0 0.0
    %v2865 = vand.u32 %v1653, 4294901760
    %v2866 = vsub.f32 %v1653, %v2865
    %2867 = vmatpush1.msra.mxu0 %v2866
    %2868 = vmatprep.subr.mxu0 0.0
    %v2869 = vand.u32 %v1654, 4294901760
    %v2870 = vsub.f32 %v1654, %v2869
    %2871 = vmatpush1.msra.mxu0 %v2870
    %2872 = vmatprep.subr.mxu0 0.0
    %v2873 = vand.u32 %v1655, 4294901760
    %v2874 = vsub.f32 %v1655, %v2873
    %2875 = vmatpush1.msra.mxu0 %v2874
    %2876 = vmatprep.subr.mxu0 0.0
    %v2877 = vand.u32 %v1656, 4294901760
    %v2878 = vsub.f32 %v1656, %v2877
    %2879 = vmatpush1.msra.mxu0 %v2878
    %2880 = vmatprep.subr.mxu0 0.0
    %v2881 = vand.u32 %v1657, 4294901760
    %v2882 = vsub.f32 %v1657, %v2881
    %2883 = vmatpush1.msra.mxu0 %v2882
    %2884 = vmatprep.subr.mxu0 0.0
    %v2885 = vand.u32 %v1658, 4294901760
    %v2886 = vsub.f32 %v1658, %v2885
    %2887 = vmatpush1.msra.mxu0 %v2886
    %2888 = vmatprep.subr.mxu0 0.0
    %v2889 = vand.u32 %v1659, 4294901760
    %v2890 = vsub.f32 %v1659, %v2889
    %2891 = vmatpush1.msra.mxu0 %v2890
    %2892 = vmatprep.subr.mxu0 0.0
    %v2893 = vand.u32 %v1660, 4294901760
    %v2894 = vsub.f32 %v1660, %v2893
    %2895 = vmatpush1.msra.mxu0 %v2894
    %2896 = vmatprep.subr.mxu0 0.0
    %v2897 = vand.u32 %v1661, 4294901760
    %v2898 = vsub.f32 %v1661, %v2897
    %2899 = vmatpush1.msra.mxu0 %v2898
    %2900 = vmatprep.subr.mxu0 0.0
    %v2901 = vand.u32 %v1662, 4294901760
    %v2902 = vsub.f32 %v1662, %v2901
    %2903 = vmatpush1.msra.mxu0 %v2902
    %2904 = vmatprep.subr.mxu0 0.0
    %v2905 = vand.u32 %v1663, 4294901760
    %v2906 = vsub.f32 %v1663, %v2905
    %2907 = vmatpush1.msra.mxu0 %v2906
    %2908 = vmatprep.subr.mxu0 0.0
    %v2909 = vand.u32 %v1664, 4294901760
    %v2910 = vsub.f32 %v1664, %v2909
    %2911 = vmatpush1.msra.mxu0 %v2910
    %2912 = vmatprep.subr.mxu0 0.0
    %2913 = vmatpush1.msra.mxu0 0.0
    %2914 = vmatprep.subr.mxu0 0.0
    %2915 = vmatpush1.msra.mxu0 0.0
    %2916 = vmatprep.subr.mxu0 0.0
    %2917 = vmatpush1.msra.mxu0 0.0
    %2918 = vmatprep.subr.mxu0 0.0
    %2919 = vmatpush1.msra.mxu0 0.0
    %2920 = vmatprep.subr.mxu0 0.0
    %2921 = vmatpush1.msra.mxu0 0.0
    %2922 = vmatprep.subr.mxu0 0.0
    %2923 = vmatpush1.msra.mxu0 0.0
    %2924 = vmatprep.subr.mxu0 0.0
    %2925 = vmatpush1.msra.mxu0 0.0
    %2926 = vmatprep.subr.mxu0 0.0
    %2927 = vmatpush1.msra.mxu0 0.0
    %2928 = vmatprep.subr.mxu0 0.0
    %2929 = vmatpush1.msra.mxu0 0.0
    %2930 = vmatprep.subr.mxu0 0.0
    %2931 = vmatpush1.msra.mxu0 0.0
    %2932 = vmatprep.subr.mxu0 0.0
    %2933 = vmatpush1.msra.mxu0 0.0
    %2934 = vmatprep.subr.mxu0 0.0
    %2935 = vmatpush1.msra.mxu0 0.0
    %2936 = vmatprep.subr.mxu0 0.0
    %2937 = vmatpush1.msra.mxu0 0.0
    %2938 = vmatprep.subr.mxu0 0.0
    %2939 = vmatpush1.msra.mxu0 0.0
    %2940 = vmatprep.subr.mxu0 0.0
    %2941 = vmatpush1.msra.mxu0 0.0
    %2942 = vmatprep.subr.mxu0 0.0
    %2943 = vmatpush1.msra.mxu0 0.0
    %2944 = vmatprep.mubr.f32.mxu0 0.0
    %v2945 = vand.u32 %v1615, 4294901760
    %v2946 = vsub.f32 %v1615, %v2945
    %2947 = vmatmul.mubr.f32.gmra.mrb[0].mxu0 %v2946
    %v2948 = vpop.f32.mrb[0].mxu0
    %v2949 = vadd.f32 %v2839, %v2948
    %v2950 = vpop.f32.mrb[0].mxu0
    %2951 = vmatprep.mubr.f32.mxu0 0.0
    %v2952 = vand.u32 %v1616, 4294901760
    %v2953 = vsub.f32 %v1616, %v2952
    %2954 = vmatmul.mubr.f32.gmra.mrb[0].mxu0 %v2953
    %v2955 = vpop.f32.mrb[0].mxu0
    %v2956 = vadd.f32 %v2845, %v2955
    %v2957 = vpop.f32.mrb[0].mxu0
    %2958 = vdwg.mxu0
    %2959 = vmatprep.subr.mxu0 0.0
    %v2960 = vand.u32 %v1649, 4294901760
    %2961 = vmatpush1.msra.mxu0 %v2960
    %2962 = vmatprep.subr.mxu0 0.0
    %v2963 = vand.u32 %v1650, 4294901760
    %2964 = vmatpush1.msra.mxu0 %v2963
    %2965 = vmatprep.subr.mxu0 0.0
    %v2966 = vand.u32 %v1651, 4294901760
    %2967 = vmatpush1.msra.mxu0 %v2966
    %2968 = vmatprep.subr.mxu0 0.0
    %v2969 = vand.u32 %v1652, 4294901760
    %2970 = vmatpush1.msra.mxu0 %v2969
    %2971 = vmatprep.subr.mxu0 0.0
    %v2972 = vand.u32 %v1653, 4294901760
    %2973 = vmatpush1.msra.mxu0 %v2972
    %2974 = vmatprep.subr.mxu0 0.0
    %v2975 = vand.u32 %v1654, 4294901760
    %2976 = vmatpush1.msra.mxu0 %v2975
    %2977 = vmatprep.subr.mxu0 0.0
    %v2978 = vand.u32 %v1655, 4294901760
    %2979 = vmatpush1.msra.mxu0 %v2978
    %2980 = vmatprep.subr.mxu0 0.0
    %v2981 = vand.u32 %v1656, 4294901760
    %2982 = vmatpush1.msra.mxu0 %v2981
    %2983 = vmatprep.subr.mxu0 0.0
    %v2984 = vand.u32 %v1657, 4294901760
    %2985 = vmatpush1.msra.mxu0 %v2984
    %2986 = vmatprep.subr.mxu0 0.0
    %v2987 = vand.u32 %v1658, 4294901760
    %2988 = vmatpush1.msra.mxu0 %v2987
    %2989 = vmatprep.subr.mxu0 0.0
    %v2990 = vand.u32 %v1659, 4294901760
    %2991 = vmatpush1.msra.mxu0 %v2990
    %2992 = vmatprep.subr.mxu0 0.0
    %v2993 = vand.u32 %v1660, 4294901760
    %2994 = vmatpush1.msra.mxu0 %v2993
    %2995 = vmatprep.subr.mxu0 0.0
    %v2996 = vand.u32 %v1661, 4294901760
    %2997 = vmatpush1.msra.mxu0 %v2996
    %2998 = vmatprep.subr.mxu0 0.0
    %v2999 = vand.u32 %v1662, 4294901760
    %3000 = vmatpush1.msra.mxu0 %v2999
    %3001 = vmatprep.subr.mxu0 0.0
    %v3002 = vand.u32 %v1663, 4294901760
    %3003 = vmatpush1.msra.mxu0 %v3002
    %3004 = vmatprep.subr.mxu0 0.0
    %v3005 = vand.u32 %v1664, 4294901760
    %3006 = vmatpush1.msra.mxu0 %v3005
    %3007 = vmatprep.subr.mxu0 0.0
    %3008 = vmatpush1.msra.mxu0 0.0
    %3009 = vmatprep.subr.mxu0 0.0
    %3010 = vmatpush1.msra.mxu0 0.0
    %3011 = vmatprep.subr.mxu0 0.0
    %3012 = vmatpush1.msra.mxu0 0.0
    %3013 = vmatprep.subr.mxu0 0.0
    %3014 = vmatpush1.msra.mxu0 0.0
    %3015 = vmatprep.subr.mxu0 0.0
    %3016 = vmatpush1.msra.mxu0 0.0
    %3017 = vmatprep.subr.mxu0 0.0
    %3018 = vmatpush1.msra.mxu0 0.0
    %3019 = vmatprep.subr.mxu0 0.0
    %3020 = vmatpush1.msra.mxu0 0.0
    %3021 = vmatprep.subr.mxu0 0.0
    %3022 = vmatpush1.msra.mxu0 0.0
    %3023 = vmatprep.subr.mxu0 0.0
    %3024 = vmatpush1.msra.mxu0 0.0
    %3025 = vmatprep.subr.mxu0 0.0
    %3026 = vmatpush1.msra.mxu0 0.0
    %3027 = vmatprep.subr.mxu0 0.0
    %3028 = vmatpush1.msra.mxu0 0.0
    %3029 = vmatprep.subr.mxu0 0.0
    %3030 = vmatpush1.msra.mxu0 0.0
    %3031 = vmatprep.subr.mxu0 0.0
    %3032 = vmatpush1.msra.mxu0 0.0
    %3033 = vmatprep.subr.mxu0 0.0
    %3034 = vmatpush1.msra.mxu0 0.0
    %3035 = vmatprep.subr.mxu0 0.0
    %3036 = vmatpush1.msra.mxu0 0.0
    %3037 = vmatprep.subr.mxu0 0.0
    %3038 = vmatpush1.msra.mxu0 0.0
    %3039 = vmatprep.mubr.f32.mxu0 0.0
    %v3040 = vand.u32 %v1615, 4294901760
    %v3041 = vsub.f32 %v1615, %v3040
    %v3042 = vand.u32 %v3041, 4294901760
    %3043 = vmatmul.mubr.f32.gmra.mrb[0].mxu0 %v3042
    %v3044 = vpop.f32.mrb[0].mxu0
    %v3045 = vadd.f32 %v2949, %v3044
    %v3046 = vpop.f32.mrb[0].mxu0
    %3047 = vmatprep.mubr.f32.mxu0 0.0
    %v3048 = vand.u32 %v1616, 4294901760
    %v3049 = vsub.f32 %v1616, %v3048
    %v3050 = vand.u32 %v3049, 4294901760
    %3051 = vmatmul.mubr.f32.gmra.mrb[0].mxu0 %v3050
    %v3052 = vpop.f32.mrb[0].mxu0
    %v3053 = vadd.f32 %v2956, %v3052
    %v3054 = vpop.f32.mrb[0].mxu0
    %3055 = vdwg.mxu0
    %3056 = vmatprep.subr.mxu0 0.0
    %v3057 = vand.u32 %v1649, 4294901760
    %v3058 = vsub.f32 %v1649, %v3057
    %v3059 = vand.u32 %v3058, 4294901760
    %3060 = vmatpush1.msra.mxu0 %v3059
    %3061 = vmatprep.subr.mxu0 0.0
    %v3062 = vand.u32 %v1650, 4294901760
    %v3063 = vsub.f32 %v1650, %v3062
    %v3064 = vand.u32 %v3063, 4294901760
    %3065 = vmatpush1.msra.mxu0 %v3064
    %3066 = vmatprep.subr.mxu0 0.0
    %v3067 = vand.u32 %v1651, 4294901760
    %v3068 = vsub.f32 %v1651, %v3067
    %v3069 = vand.u32 %v3068, 4294901760
    %3070 = vmatpush1.msra.mxu0 %v3069
    %3071 = vmatprep.subr.mxu0 0.0
    %v3072 = vand.u32 %v1652, 4294901760
    %v3073 = vsub.f32 %v1652, %v3072
    %v3074 = vand.u32 %v3073, 4294901760
    %3075 = vmatpush1.msra.mxu0 %v3074
    %3076 = vmatprep.subr.mxu0 0.0
    %v3077 = vand.u32 %v1653, 4294901760
    %v3078 = vsub.f32 %v1653, %v3077
    %v3079 = vand.u32 %v3078, 4294901760
    %3080 = vmatpush1.msra.mxu0 %v3079
    %3081 = vmatprep.subr.mxu0 0.0
    %v3082 = vand.u32 %v1654, 4294901760
    %v3083 = vsub.f32 %v1654, %v3082
    %v3084 = vand.u32 %v3083, 4294901760
    %3085 = vmatpush1.msra.mxu0 %v3084
    %3086 = vmatprep.subr.mxu0 0.0
    %v3087 = vand.u32 %v1655, 4294901760
    %v3088 = vsub.f32 %v1655, %v3087
    %v3089 = vand.u32 %v3088, 4294901760
    %3090 = vmatpush1.msra.mxu0 %v3089
    %3091 = vmatprep.subr.mxu0 0.0
    %v3092 = vand.u32 %v1656, 4294901760
    %v3093 = vsub.f32 %v1656, %v3092
    %v3094 = vand.u32 %v3093, 4294901760
    %3095 = vmatpush1.msra.mxu0 %v3094
    %3096 = vmatprep.subr.mxu0 0.0
    %v3097 = vand.u32 %v1657, 4294901760
    %v3098 = vsub.f32 %v1657, %v3097
    %v3099 = vand.u32 %v3098, 4294901760
    %3100 = vmatpush1.msra.mxu0 %v3099
    %3101 = vmatprep.subr.mxu0 0.0
    %v3102 = vand.u32 %v1658, 4294901760
    %v3103 = vsub.f32 %v1658, %v3102
    %v3104 = vand.u32 %v3103, 4294901760
    %3105 = vmatpush1.msra.mxu0 %v3104
    %3106 = vmatprep.subr.mxu0 0.0
    %v3107 = vand.u32 %v1659, 4294901760
    %v3108 = vsub.f32 %v1659, %v3107
    %v3109 = vand.u32 %v3108, 4294901760
    %3110 = vmatpush1.msra.mxu0 %v3109
    %3111 = vmatprep.subr.mxu0 0.0
    %v3112 = vand.u32 %v1660, 4294901760
    %v3113 = vsub.f32 %v1660, %v3112
    %v3114 = vand.u32 %v3113, 4294901760
    %3115 = vmatpush1.msra.mxu0 %v3114
    %3116 = vmatprep.subr.mxu0 0.0
    %v3117 = vand.u32 %v1661, 4294901760
    %v3118 = vsub.f32 %v1661, %v3117
    %v3119 = vand.u32 %v3118, 4294901760
    %3120 = vmatpush1.msra.mxu0 %v3119
    %3121 = vmatprep.subr.mxu0 0.0
    %v3122 = vand.u32 %v1662, 4294901760
    %v3123 = vsub.f32 %v1662, %v3122
    %v3124 = vand.u32 %v3123, 4294901760
    %3125 = vmatpush1.msra.mxu0 %v3124
    %3126 = vmatprep.subr.mxu0 0.0
    %v3127 = vand.u32 %v1663, 4294901760
    %v3128 = vsub.f32 %v1663, %v3127
    %v3129 = vand.u32 %v3128, 4294901760
    %3130 = vmatpush1.msra.mxu0 %v3129
    %3131 = vmatprep.subr.mxu0 0.0
    %v3132 = vand.u32 %v1664, 4294901760
    %v3133 = vsub.f32 %v1664, %v3132
    %v3134 = vand.u32 %v3133, 4294901760
    %3135 = vmatpush1.msra.mxu0 %v3134
    %3136 = vmatprep.subr.mxu0 0.0
    %3137 = vmatpush1.msra.mxu0 0.0
    %3138 = vmatprep.subr.mxu0 0.0
    %3139 = vmatpush1.msra.mxu0 0.0
    %3140 = vmatprep.subr.mxu0 0.0
    %3141 = vmatpush1.msra.mxu0 0.0
    %3142 = vmatprep.subr.mxu0 0.0
    %3143 = vmatpush1.msra.mxu0 0.0
    %3144 = vmatprep.subr.mxu0 0.0
    %3145 = vmatpush1.msra.mxu0 0.0
    %3146 = vmatprep.subr.mxu0 0.0
    %3147 = vmatpush1.msra.mxu0 0.0
    %3148 = vmatprep.subr.mxu0 0.0
    %3149 = vmatpush1.msra.mxu0 0.0
    %3150 = vmatprep.subr.mxu0 0.0
    %3151 = vmatpush1.msra.mxu0 0.0
    %3152 = vmatprep.subr.mxu0 0.0
    %3153 = vmatpush1.msra.mxu0 0.0
    %3154 = vmatprep.subr.mxu0 0.0
    %3155 = vmatpush1.msra.mxu0 0.0
    %3156 = vmatprep.subr.mxu0 0.0
    %3157 = vmatpush1.msra.mxu0 0.0
    %3158 = vmatprep.subr.mxu0 0.0
    %3159 = vmatpush1.msra.mxu0 0.0
    %3160 = vmatprep.subr.mxu0 0.0
    %3161 = vmatpush1.msra.mxu0 0.0
    %3162 = vmatprep.subr.mxu0 0.0
    %3163 = vmatpush1.msra.mxu0 0.0
    %3164 = vmatprep.subr.mxu0 0.0
    %3165 = vmatpush1.msra.mxu0 0.0
    %3166 = vmatprep.subr.mxu0 0.0
    %3167 = vmatpush1.msra.mxu0 0.0
    %3168 = vmatprep.mubr.f32.mxu0 0.0
    %v3169 = vand.u32 %v1615, 4294901760
    %3170 = vmatmul.mubr.f32.gmra.mrb[0].mxu0 %v3169
    %v3171 = vpop.f32.mrb[0].mxu0
    %v3172 = vadd.f32 %v3045, %v3171
    %v3173 = vpop.f32.mrb[0].mxu0
    %3174 = vmatprep.mubr.f32.mxu0 0.0
    %v3175 = vand.u32 %v1616, 4294901760
    %3176 = vmatmul.mubr.f32.gmra.mrb[0].mxu0 %v3175
    %v3177 = vpop.f32.mrb[0].mxu0
    %v3178 = vadd.f32 %v3053, %v3177
    %v3179 = vpop.f32.mrb[0].mxu0
    %3180 = vdwg.mxu0
    %3181 = vmatprep.subr.mxu0 0.0
    %v3182 = vand.u32 %v1649, 4294901760
    %3183 = vmatpush1.msra.mxu0 %v3182
    %3184 = vmatprep.subr.mxu0 0.0
    %v3185 = vand.u32 %v1650, 4294901760
    %3186 = vmatpush1.msra.mxu0 %v3185
    %3187 = vmatprep.subr.mxu0 0.0
    %v3188 = vand.u32 %v1651, 4294901760
    %3189 = vmatpush1.msra.mxu0 %v3188
    %3190 = vmatprep.subr.mxu0 0.0
    %v3191 = vand.u32 %v1652, 4294901760
    %3192 = vmatpush1.msra.mxu0 %v3191
    %3193 = vmatprep.subr.mxu0 0.0
    %v3194 = vand.u32 %v1653, 4294901760
    %3195 = vmatpush1.msra.mxu0 %v3194
    %3196 = vmatprep.subr.mxu0 0.0
    %v3197 = vand.u32 %v1654, 4294901760
    %3198 = vmatpush1.msra.mxu0 %v3197
    %3199 = vmatprep.subr.mxu0 0.0
    %v3200 = vand.u32 %v1655, 4294901760
    %3201 = vmatpush1.msra.mxu0 %v3200
    %3202 = vmatprep.subr.mxu0 0.0
    %v3203 = vand.u32 %v1656, 4294901760
    %3204 = vmatpush1.msra.mxu0 %v3203
    %3205 = vmatprep.subr.mxu0 0.0
    %v3206 = vand.u32 %v1657, 4294901760
    %3207 = vmatpush1.msra.mxu0 %v3206
    %3208 = vmatprep.subr.mxu0 0.0
    %v3209 = vand.u32 %v1658, 4294901760
    %3210 = vmatpush1.msra.mxu0 %v3209
    %3211 = vmatprep.subr.mxu0 0.0
    %v3212 = vand.u32 %v1659, 4294901760
    %3213 = vmatpush1.msra.mxu0 %v3212
    %3214 = vmatprep.subr.mxu0 0.0
    %v3215 = vand.u32 %v1660, 4294901760
    %3216 = vmatpush1.msra.mxu0 %v3215
    %3217 = vmatprep.subr.mxu0 0.0
    %v3218 = vand.u32 %v1661, 4294901760
    %3219 = vmatpush1.msra.mxu0 %v3218
    %3220 = vmatprep.subr.mxu0 0.0
    %v3221 = vand.u32 %v1662, 4294901760
    %3222 = vmatpush1.msra.mxu0 %v3221
    %3223 = vmatprep.subr.mxu0 0.0
    %v3224 = vand.u32 %v1663, 4294901760
    %3225 = vmatpush1.msra.mxu0 %v3224
    %3226 = vmatprep.subr.mxu0 0.0
    %v3227 = vand.u32 %v1664, 4294901760
    %3228 = vmatpush1.msra.mxu0 %v3227
    %3229 = vmatprep.subr.mxu0 0.0
    %3230 = vmatpush1.msra.mxu0 0.0
    %3231 = vmatprep.subr.mxu0 0.0
    %3232 = vmatpush1.msra.mxu0 0.0
    %3233 = vmatprep.subr.mxu0 0.0
    %3234 = vmatpush1.msra.mxu0 0.0
    %3235 = vmatprep.subr.mxu0 0.0
    %3236 = vmatpush1.msra.mxu0 0.0
    %3237 = vmatprep.subr.mxu0 0.0
    %3238 = vmatpush1.msra.mxu0 0.0
    %3239 = vmatprep.subr.mxu0 0.0
    %3240 = vmatpush1.msra.mxu0 0.0
    %3241 = vmatprep.subr.mxu0 0.0
    %3242 = vmatpush1.msra.mxu0 0.0
    %3243 = vmatprep.subr.mxu0 0.0
    %3244 = vmatpush1.msra.mxu0 0.0
    %3245 = vmatprep.subr.mxu0 0.0
    %3246 = vmatpush1.msra.mxu0 0.0
    %3247 = vmatprep.subr.mxu0 0.0
    %3248 = vmatpush1.msra.mxu0 0.0
    %3249 = vmatprep.subr.mxu0 0.0
    %3250 = vmatpush1.msra.mxu0 0.0
    %3251 = vmatprep.subr.mxu0 0.0
    %3252 = vmatpush1.msra.mxu0 0.0
    %3253 = vmatprep.subr.mxu0 0.0
    %3254 = vmatpush1.msra.mxu0 0.0
    %3255 = vmatprep.subr.mxu0 0.0
    %3256 = vmatpush1.msra.mxu0 0.0
    %3257 = vmatprep.subr.mxu0 0.0
    %3258 = vmatpush1.msra.mxu0 0.0
    %3259 = vmatprep.subr.mxu0 0.0
    %3260 = vmatpush1.msra.mxu0 0.0
    %3261 = vmatprep.mubr.f32.mxu0 0.0
    %v3262 = vand.u32 %v1615, 4294901760
    %3263 = vmatmul.mubr.f32.gmra.mrb[0].mxu0 %v3262
    %v3264 = vpop.f32.mrb[0].mxu0
    %v3265 = vadd.f32 %v3172, %v3264
    %v3266 = vpop.f32.mrb[0].mxu0
    %3267 = vmatprep.mubr.f32.mxu0 0.0
    %v3268 = vand.u32 %v1616, 4294901760
    %3269 = vmatmul.mubr.f32.gmra.mrb[0].mxu0 %v3268
    %v3270 = vpop.f32.mrb[0].mxu0
    %v3271 = vadd.f32 %v3178, %v3270
    %v3272 = vpop.f32.mrb[0].mxu0
    %3273 = vdwg.mxu0
    %v3274 = vmax.f32 %v3265, 0.0
    %v3275 = vmax.f32 %v3271, 0.0
    %v3276 = vsel %vm1601, %v3274, 0.0
    %v3277 = vsel %vm1602, %v3275, 0.0
    %v3278 = vrot.slane %v3276, 4
    %v3279 = vmax.f32 %v3276, %v3278
    %v3280 = vrot.slane %v3279, 2
    %v3281 = vmax.f32 %v3279, %v3280
    %v3282 = vrot.slane %v3281, 1
    %v3283 = vmax.f32 %v3281, %v3282
    %v3284 = vrot.slane %v3277, 4
    %v3285 = vmax.f32 %v3277, %v3284
    %v3286 = vrot.slane %v3285, 2
    %v3287 = vmax.f32 %v3285, %v3286
    %v3288 = vrot.slane %v3287, 1
    %v3289 = vmax.f32 %v3287, %v3288
    %v3290 = vld [vmem:[#allocation10] sm:$0xff]
    %v3291 = vld [vmem:[#allocation10 + $0x8] sm:$0xff]
    %v3292 = vld [vmem:[#allocation10 + $0x10] sm:$0xff]
    %v3293 = vld [vmem:[#allocation10 + $0x18] sm:$0xff]
    %v3294 = vld [vmem:[#allocation10 + $0x20] sm:$0xff]
    %v3295 = vld [vmem:[#allocation10 + $0x28] sm:$0xff]
    %v3296 = vld [vmem:[#allocation10 + $0x30] sm:$0xff]
    %v3297 = vld [vmem:[#allocation10 + $0x38] sm:$0xff]
    %v3298 = vld [vmem:[#allocation10 + $0x40] sm:$0xff]
    %v3299 = vld [vmem:[#allocation10 + $0x48] sm:$0xff]
    %v3300 = vld [vmem:[#allocation10 + $0x50] sm:$0xff]
    %v3301 = vld [vmem:[#allocation10 + $0x58] sm:$0xff]
    %v3302 = vld [vmem:[#allocation10 + $0x60] sm:$0xff]
    %v3303 = vld [vmem:[#allocation10 + $0x68] sm:$0xff]
    %v3304 = vld [vmem:[#allocation10 + $0x70] sm:$0xff]
    %v3305 = vld [vmem:[#allocation10 + $0x78] sm:$0xff]
    %v3306 = vld [vmem:[%s7] sm:$0x1]
    %v3308 = vlaneseq
    %v3309 = vshrl.u32 %v3308, 7
    %v3310 = vsub.s32 0, %v3309
    %v3311 = vrot.slane %v3306, %v3310
    %vm3315 = vcmask 1041409
    %v3316 = vsel %vm3315, %v3289, %v3283
    %3318 = vmatprep.subr.mxu0 0.0
    %v3319 = vand.u32 %v3290, 4294901760
    %3320 = vmatpush1.msra.mxu0 %v3319
    %3321 = vmatprep.subr.mxu0 0.0
    %v3322 = vand.u32 %v3291, 4294901760
    %3323 = vmatpush1.msra.mxu0 %v3322
    %3324 = vmatprep.subr.mxu0 0.0
    %v3325 = vand.u32 %v3292, 4294901760
    %3326 = vmatpush1.msra.mxu0 %v3325
    %3327 = vmatprep.subr.mxu0 0.0
    %v3328 = vand.u32 %v3293, 4294901760
    %3329 = vmatpush1.msra.mxu0 %v3328
    %3330 = vmatprep.subr.mxu0 0.0
    %v3331 = vand.u32 %v3294, 4294901760
    %3332 = vmatpush1.msra.mxu0 %v3331
    %3333 = vmatprep.subr.mxu0 0.0
    %v3334 = vand.u32 %v3295, 4294901760
    %3335 = vmatpush1.msra.mxu0 %v3334
    %3336 = vmatprep.subr.mxu0 0.0
    %v3337 = vand.u32 %v3296, 4294901760
    %3338 = vmatpush1.msra.mxu0 %v3337
    %3339 = vmatprep.subr.mxu0 0.0
    %v3340 = vand.u32 %v3297, 4294901760
    %3341 = vmatpush1.msra.mxu0 %v3340
    %3342 = vmatprep.subr.mxu0 0.0
    %v3343 = vand.u32 %v3298, 4294901760
    %3344 = vmatpush1.msra.mxu0 %v3343
    %3345 = vmatprep.subr.mxu0 0.0
    %v3346 = vand.u32 %v3299, 4294901760
    %3347 = vmatpush1.msra.mxu0 %v3346
    %3348 = vmatprep.subr.mxu0 0.0
    %v3349 = vand.u32 %v3300, 4294901760
    %3350 = vmatpush1.msra.mxu0 %v3349
    %3351 = vmatprep.subr.mxu0 0.0
    %v3352 = vand.u32 %v3301, 4294901760
    %3353 = vmatpush1.msra.mxu0 %v3352
    %3354 = vmatprep.subr.mxu0 0.0
    %v3355 = vand.u32 %v3302, 4294901760
    %3356 = vmatpush1.msra.mxu0 %v3355
    %3357 = vmatprep.subr.mxu0 0.0
    %v3358 = vand.u32 %v3303, 4294901760
    %3359 = vmatpush1.msra.mxu0 %v3358
    %3360 = vmatprep.subr.mxu0 0.0
    %v3361 = vand.u32 %v3304, 4294901760
    %3362 = vmatpush1.msra.mxu0 %v3361
    %3363 = vmatprep.subr.mxu0 0.0
    %v3364 = vand.u32 %v3305, 4294901760
    %3365 = vmatpush1.msra.mxu0 %v3364
    %3366 = vmatprep.subr.mxu0 0.0
    %3367 = vmatpush1.msra.mxu0 0.0
    %3368 = vmatprep.subr.mxu0 0.0
    %3369 = vmatpush1.msra.mxu0 0.0
    %3370 = vmatprep.subr.mxu0 0.0
    %3371 = vmatpush1.msra.mxu0 0.0
    %3372 = vmatprep.subr.mxu0 0.0
    %3373 = vmatpush1.msra.mxu0 0.0
    %3374 = vmatprep.subr.mxu0 0.0
    %3375 = vmatpush1.msra.mxu0 0.0
    %3376 = vmatprep.subr.mxu0 0.0
    %3377 = vmatpush1.msra.mxu0 0.0
    %3378 = vmatprep.subr.mxu0 0.0
    %3379 = vmatpush1.msra.mxu0 0.0
    %3380 = vmatprep.subr.mxu0 0.0
    %3381 = vmatpush1.msra.mxu0 0.0
    %3382 = vmatprep.subr.mxu0 0.0
    %3383 = vmatpush1.msra.mxu0 0.0
    %3384 = vmatprep.subr.mxu0 0.0
    %3385 = vmatpush1.msra.mxu0 0.0
    %3386 = vmatprep.subr.mxu0 0.0
    %3387 = vmatpush1.msra.mxu0 0.0
    %3388 = vmatprep.subr.mxu0 0.0
    %3389 = vmatpush1.msra.mxu0 0.0
    %3390 = vmatprep.subr.mxu0 0.0
    %3391 = vmatpush1.msra.mxu0 0.0
    %3392 = vmatprep.subr.mxu0 0.0
    %3393 = vmatpush1.msra.mxu0 0.0
    %3394 = vmatprep.subr.mxu0 0.0
    %3395 = vmatpush1.msra.mxu0 0.0
    %3396 = vmatprep.subr.mxu0 0.0
    %3397 = vmatpush1.msra.mxu0 0.0
    %3398 = vmatprep.mubr.f32.mxu0 0.0
    %v3399 = vand.u32 %v3316, 4294901760
    %v3400 = vsub.f32 %v3316, %v3399
    %v3401 = vand.u32 %v3400, 4294901760
    %v3402 = vsub.f32 %v3400, %v3401
    %v3403 = vand.u32 %v3402, 4294901760
    %3404 = vmatmul.mubr.f32.gmra.mrb[0].mxu0 %v3403
    %v3405 = vpop.f32.mrb[0].mxu0
    %v3406 = vadd.f32 %v3311, %v3405
    %v3407 = vpop.f32.mrb[0].mxu0
    %3408 = vdwg.mxu0
    %3409 = vmatprep.subr.mxu0 0.0
    %v3410 = vand.u32 %v3290, 4294901760
    %v3411 = vsub.f32 %v3290, %v3410
    %v3412 = vand.u32 %v3411, 4294901760
    %v3413 = vsub.f32 %v3411, %v3412
    %v3414 = vand.u32 %v3413, 4294901760
    %3415 = vmatpush1.msra.mxu0 %v3414
    %3416 = vmatprep.subr.mxu0 0.0
    %v3417 = vand.u32 %v3291, 4294901760
    %v3418 = vsub.f32 %v3291, %v3417
    %v3419 = vand.u32 %v3418, 4294901760
    %v3420 = vsub.f32 %v3418, %v3419
    %v3421 = vand.u32 %v3420, 4294901760
    %3422 = vmatpush1.msra.mxu0 %v3421
    %3423 = vmatprep.subr.mxu0 0.0
    %v3424 = vand.u32 %v3292, 4294901760
    %v3425 = vsub.f32 %v3292, %v3424
    %v3426 = vand.u32 %v3425, 4294901760
    %v3427 = vsub.f32 %v3425, %v3426
    %v3428 = vand.u32 %v3427, 4294901760
    %3429 = vmatpush1.msra.mxu0 %v3428
    %3430 = vmatprep.subr.mxu0 0.0
    %v3431 = vand.u32 %v3293, 4294901760
    %v3432 = vsub.f32 %v3293, %v3431
    %v3433 = vand.u32 %v3432, 4294901760
    %v3434 = vsub.f32 %v3432, %v3433
    %v3435 = vand.u32 %v3434, 4294901760
    %3436 = vmatpush1.msra.mxu0 %v3435
    %3437 = vmatprep.subr.mxu0 0.0
    %v3438 = vand.u32 %v3294, 4294901760
    %v3439 = vsub.f32 %v3294, %v3438
    %v3440 = vand.u32 %v3439, 4294901760
    %v3441 = vsub.f32 %v3439, %v3440
    %v3442 = vand.u32 %v3441, 4294901760
    %3443 = vmatpush1.msra.mxu0 %v3442
    %3444 = vmatprep.subr.mxu0 0.0
    %v3445 = vand.u32 %v3295, 4294901760
    %v3446 = vsub.f32 %v3295, %v3445
    %v3447 = vand.u32 %v3446, 4294901760
    %v3448 = vsub.f32 %v3446, %v3447
    %v3449 = vand.u32 %v3448, 4294901760
    %3450 = vmatpush1.msra.mxu0 %v3449
    %3451 = vmatprep.subr.mxu0 0.0
    %v3452 = vand.u32 %v3296, 4294901760
    %v3453 = vsub.f32 %v3296, %v3452
    %v3454 = vand.u32 %v3453, 4294901760
    %v3455 = vsub.f32 %v3453, %v3454
    %v3456 = vand.u32 %v3455, 4294901760
    %3457 = vmatpush1.msra.mxu0 %v3456
    %3458 = vmatprep.subr.mxu0 0.0
    %v3459 = vand.u32 %v3297, 4294901760
    %v3460 = vsub.f32 %v3297, %v3459
    %v3461 = vand.u32 %v3460, 4294901760
    %v3462 = vsub.f32 %v3460, %v3461
    %v3463 = vand.u32 %v3462, 4294901760
    %3464 = vmatpush1.msra.mxu0 %v3463
    %3465 = vmatprep.subr.mxu0 0.0
    %v3466 = vand.u32 %v3298, 4294901760
    %v3467 = vsub.f32 %v3298, %v3466
    %v3468 = vand.u32 %v3467, 4294901760
    %v3469 = vsub.f32 %v3467, %v3468
    %v3470 = vand.u32 %v3469, 4294901760
    %3471 = vmatpush1.msra.mxu0 %v3470
    %3472 = vmatprep.subr.mxu0 0.0
    %v3473 = vand.u32 %v3299, 4294901760
    %v3474 = vsub.f32 %v3299, %v3473
    %v3475 = vand.u32 %v3474, 4294901760
    %v3476 = vsub.f32 %v3474, %v3475
    %v3477 = vand.u32 %v3476, 4294901760
    %3478 = vmatpush1.msra.mxu0 %v3477
    %3479 = vmatprep.subr.mxu0 0.0
    %v3480 = vand.u32 %v3300, 4294901760
    %v3481 = vsub.f32 %v3300, %v3480
    %v3482 = vand.u32 %v3481, 4294901760
    %v3483 = vsub.f32 %v3481, %v3482
    %v3484 = vand.u32 %v3483, 4294901760
    %3485 = vmatpush1.msra.mxu0 %v3484
    %3486 = vmatprep.subr.mxu0 0.0
    %v3487 = vand.u32 %v3301, 4294901760
    %v3488 = vsub.f32 %v3301, %v3487
    %v3489 = vand.u32 %v3488, 4294901760
    %v3490 = vsub.f32 %v3488, %v3489
    %v3491 = vand.u32 %v3490, 4294901760
    %3492 = vmatpush1.msra.mxu0 %v3491
    %3493 = vmatprep.subr.mxu0 0.0
    %v3494 = vand.u32 %v3302, 4294901760
    %v3495 = vsub.f32 %v3302, %v3494
    %v3496 = vand.u32 %v3495, 4294901760
    %v3497 = vsub.f32 %v3495, %v3496
    %v3498 = vand.u32 %v3497, 4294901760
    %3499 = vmatpush1.msra.mxu0 %v3498
    %3500 = vmatprep.subr.mxu0 0.0
    %v3501 = vand.u32 %v3303, 4294901760
    %v3502 = vsub.f32 %v3303, %v3501
    %v3503 = vand.u32 %v3502, 4294901760
    %v3504 = vsub.f32 %v3502, %v3503
    %v3505 = vand.u32 %v3504, 4294901760
    %3506 = vmatpush1.msra.mxu0 %v3505
    %3507 = vmatprep.subr.mxu0 0.0
    %v3508 = vand.u32 %v3304, 4294901760
    %v3509 = vsub.f32 %v3304, %v3508
    %v3510 = vand.u32 %v3509, 4294901760
    %v3511 = vsub.f32 %v3509, %v3510
    %v3512 = vand.u32 %v3511, 4294901760
    %3513 = vmatpush1.msra.mxu0 %v3512
    %3514 = vmatprep.subr.mxu0 0.0
    %v3515 = vand.u32 %v3305, 4294901760
    %v3516 = vsub.f32 %v3305, %v3515
    %v3517 = vand.u32 %v3516, 4294901760
    %v3518 = vsub.f32 %v3516, %v3517
    %v3519 = vand.u32 %v3518, 4294901760
    %3520 = vmatpush1.msra.mxu0 %v3519
    %3521 = vmatprep.subr.mxu0 0.0
    %3522 = vmatpush1.msra.mxu0 0.0
    %3523 = vmatprep.subr.mxu0 0.0
    %3524 = vmatpush1.msra.mxu0 0.0
    %3525 = vmatprep.subr.mxu0 0.0
    %3526 = vmatpush1.msra.mxu0 0.0
    %3527 = vmatprep.subr.mxu0 0.0
    %3528 = vmatpush1.msra.mxu0 0.0
    %3529 = vmatprep.subr.mxu0 0.0
    %3530 = vmatpush1.msra.mxu0 0.0
    %3531 = vmatprep.subr.mxu0 0.0
    %3532 = vmatpush1.msra.mxu0 0.0
    %3533 = vmatprep.subr.mxu0 0.0
    %3534 = vmatpush1.msra.mxu0 0.0
    %3535 = vmatprep.subr.mxu0 0.0
    %3536 = vmatpush1.msra.mxu0 0.0
    %3537 = vmatprep.subr.mxu0 0.0
    %3538 = vmatpush1.msra.mxu0 0.0
    %3539 = vmatprep.subr.mxu0 0.0
    %3540 = vmatpush1.msra.mxu0 0.0
    %3541 = vmatprep.subr.mxu0 0.0
    %3542 = vmatpush1.msra.mxu0 0.0
    %3543 = vmatprep.subr.mxu0 0.0
    %3544 = vmatpush1.msra.mxu0 0.0
    %3545 = vmatprep.subr.mxu0 0.0
    %3546 = vmatpush1.msra.mxu0 0.0
    %3547 = vmatprep.subr.mxu0 0.0
    %3548 = vmatpush1.msra.mxu0 0.0
    %3549 = vmatprep.subr.mxu0 0.0
    %3550 = vmatpush1.msra.mxu0 0.0
    %3551 = vmatprep.subr.mxu0 0.0
    %3552 = vmatpush1.msra.mxu0 0.0
    %3553 = vmatprep.mubr.f32.mxu0 0.0
    %v3554 = vand.u32 %v3316, 4294901760
    %3555 = vmatmul.mubr.f32.gmra.mrb[0].mxu0 %v3554
    %v3556 = vpop.f32.mrb[0].mxu0
    %v3557 = vadd.f32 %v3406, %v3556
    %v3558 = vpop.f32.mrb[0].mxu0
    %3559 = vdwg.mxu0
    %3560 = vmatprep.subr.mxu0 0.0
    %v3561 = vand.u32 %v3290, 4294901760
    %v3562 = vsub.f32 %v3290, %v3561
    %3563 = vmatpush1.msra.mxu0 %v3562
    %3564 = vmatprep.subr.mxu0 0.0
    %v3565 = vand.u32 %v3291, 4294901760
    %v3566 = vsub.f32 %v3291, %v3565
    %3567 = vmatpush1.msra.mxu0 %v3566
    %3568 = vmatprep.subr.mxu0 0.0
    %v3569 = vand.u32 %v3292, 4294901760
    %v3570 = vsub.f32 %v3292, %v3569
    %3571 = vmatpush1.msra.mxu0 %v3570
    %3572 = vmatprep.subr.mxu0 0.0
    %v3573 = vand.u32 %v3293, 4294901760
    %v3574 = vsub.f32 %v3293, %v3573
    %3575 = vmatpush1.msra.mxu0 %v3574
    %3576 = vmatprep.subr.mxu0 0.0
    %v3577 = vand.u32 %v3294, 4294901760
    %v3578 = vsub.f32 %v3294, %v3577
    %3579 = vmatpush1.msra.mxu0 %v3578
    %3580 = vmatprep.subr.mxu0 0.0
    %v3581 = vand.u32 %v3295, 4294901760
    %v3582 = vsub.f32 %v3295, %v3581
    %3583 = vmatpush1.msra.mxu0 %v3582
    %3584 = vmatprep.subr.mxu0 0.0
    %v3585 = vand.u32 %v3296, 4294901760
    %v3586 = vsub.f32 %v3296, %v3585
    %3587 = vmatpush1.msra.mxu0 %v3586
    %3588 = vmatprep.subr.mxu0 0.0
    %v3589 = vand.u32 %v3297, 4294901760
    %v3590 = vsub.f32 %v3297, %v3589
    %3591 = vmatpush1.msra.mxu0 %v3590
    %3592 = vmatprep.subr.mxu0 0.0
    %v3593 = vand.u32 %v3298, 4294901760
    %v3594 = vsub.f32 %v3298, %v3593
    %3595 = vmatpush1.msra.mxu0 %v3594
    %3596 = vmatprep.subr.mxu0 0.0
    %v3597 = vand.u32 %v3299, 4294901760
    %v3598 = vsub.f32 %v3299, %v3597
    %3599 = vmatpush1.msra.mxu0 %v3598
    %3600 = vmatprep.subr.mxu0 0.0
    %v3601 = vand.u32 %v3300, 4294901760
    %v3602 = vsub.f32 %v3300, %v3601
    %3603 = vmatpush1.msra.mxu0 %v3602
    %3604 = vmatprep.subr.mxu0 0.0
    %v3605 = vand.u32 %v3301, 4294901760
    %v3606 = vsub.f32 %v3301, %v3605
    %3607 = vmatpush1.msra.mxu0 %v3606
    %3608 = vmatprep.subr.mxu0 0.0
    %v3609 = vand.u32 %v3302, 4294901760
    %v3610 = vsub.f32 %v3302, %v3609
    %3611 = vmatpush1.msra.mxu0 %v3610
    %3612 = vmatprep.subr.mxu0 0.0
    %v3613 = vand.u32 %v3303, 4294901760
    %v3614 = vsub.f32 %v3303, %v3613
    %3615 = vmatpush1.msra.mxu0 %v3614
    %3616 = vmatprep.subr.mxu0 0.0
    %v3617 = vand.u32 %v3304, 4294901760
    %v3618 = vsub.f32 %v3304, %v3617
    %3619 = vmatpush1.msra.mxu0 %v3618
    %3620 = vmatprep.subr.mxu0 0.0
    %v3621 = vand.u32 %v3305, 4294901760
    %v3622 = vsub.f32 %v3305, %v3621
    %3623 = vmatpush1.msra.mxu0 %v3622
    %3624 = vmatprep.subr.mxu0 0.0
    %3625 = vmatpush1.msra.mxu0 0.0
    %3626 = vmatprep.subr.mxu0 0.0
    %3627 = vmatpush1.msra.mxu0 0.0
    %3628 = vmatprep.subr.mxu0 0.0
    %3629 = vmatpush1.msra.mxu0 0.0
    %3630 = vmatprep.subr.mxu0 0.0
    %3631 = vmatpush1.msra.mxu0 0.0
    %3632 = vmatprep.subr.mxu0 0.0
    %3633 = vmatpush1.msra.mxu0 0.0
    %3634 = vmatprep.subr.mxu0 0.0
    %3635 = vmatpush1.msra.mxu0 0.0
    %3636 = vmatprep.subr.mxu0 0.0
    %3637 = vmatpush1.msra.mxu0 0.0
    %3638 = vmatprep.subr.mxu0 0.0
    %3639 = vmatpush1.msra.mxu0 0.0
    %3640 = vmatprep.subr.mxu0 0.0
    %3641 = vmatpush1.msra.mxu0 0.0
    %3642 = vmatprep.subr.mxu0 0.0
    %3643 = vmatpush1.msra.mxu0 0.0
    %3644 = vmatprep.subr.mxu0 0.0
    %3645 = vmatpush1.msra.mxu0 0.0
    %3646 = vmatprep.subr.mxu0 0.0
    %3647 = vmatpush1.msra.mxu0 0.0
    %3648 = vmatprep.subr.mxu0 0.0
    %3649 = vmatpush1.msra.mxu0 0.0
    %3650 = vmatprep.subr.mxu0 0.0
    %3651 = vmatpush1.msra.mxu0 0.0
    %3652 = vmatprep.subr.mxu0 0.0
    %3653 = vmatpush1.msra.mxu0 0.0
    %3654 = vmatprep.subr.mxu0 0.0
    %3655 = vmatpush1.msra.mxu0 0.0
    %3656 = vmatprep.mubr.f32.mxu0 0.0
    %v3657 = vand.u32 %v3316, 4294901760
    %v3658 = vsub.f32 %v3316, %v3657
    %3659 = vmatmul.mubr.f32.gmra.mrb[0].mxu0 %v3658
    %v3660 = vpop.f32.mrb[0].mxu0
    %v3661 = vadd.f32 %v3557, %v3660
    %v3662 = vpop.f32.mrb[0].mxu0
    %3663 = vdwg.mxu0
    %3664 = vmatprep.subr.mxu0 0.0
    %v3665 = vand.u32 %v3290, 4294901760
    %3666 = vmatpush1.msra.mxu0 %v3665
    %3667 = vmatprep.subr.mxu0 0.0
    %v3668 = vand.u32 %v3291, 4294901760
    %3669 = vmatpush1.msra.mxu0 %v3668
    %3670 = vmatprep.subr.mxu0 0.0
    %v3671 = vand.u32 %v3292, 4294901760
    %3672 = vmatpush1.msra.mxu0 %v3671
    %3673 = vmatprep.subr.mxu0 0.0
    %v3674 = vand.u32 %v3293, 4294901760
    %3675 = vmatpush1.msra.mxu0 %v3674
    %3676 = vmatprep.subr.mxu0 0.0
    %v3677 = vand.u32 %v3294, 4294901760
    %3678 = vmatpush1.msra.mxu0 %v3677
    %3679 = vmatprep.subr.mxu0 0.0
    %v3680 = vand.u32 %v3295, 4294901760
    %3681 = vmatpush1.msra.mxu0 %v3680
    %3682 = vmatprep.subr.mxu0 0.0
    %v3683 = vand.u32 %v3296, 4294901760
    %3684 = vmatpush1.msra.mxu0 %v3683
    %3685 = vmatprep.subr.mxu0 0.0
    %v3686 = vand.u32 %v3297, 4294901760
    %3687 = vmatpush1.msra.mxu0 %v3686
    %3688 = vmatprep.subr.mxu0 0.0
    %v3689 = vand.u32 %v3298, 4294901760
    %3690 = vmatpush1.msra.mxu0 %v3689
    %3691 = vmatprep.subr.mxu0 0.0
    %v3692 = vand.u32 %v3299, 4294901760
    %3693 = vmatpush1.msra.mxu0 %v3692
    %3694 = vmatprep.subr.mxu0 0.0
    %v3695 = vand.u32 %v3300, 4294901760
    %3696 = vmatpush1.msra.mxu0 %v3695
    %3697 = vmatprep.subr.mxu0 0.0
    %v3698 = vand.u32 %v3301, 4294901760
    %3699 = vmatpush1.msra.mxu0 %v3698
    %3700 = vmatprep.subr.mxu0 0.0
    %v3701 = vand.u32 %v3302, 4294901760
    %3702 = vmatpush1.msra.mxu0 %v3701
    %3703 = vmatprep.subr.mxu0 0.0
    %v3704 = vand.u32 %v3303, 4294901760
    %3705 = vmatpush1.msra.mxu0 %v3704
    %3706 = vmatprep.subr.mxu0 0.0
    %v3707 = vand.u32 %v3304, 4294901760
    %3708 = vmatpush1.msra.mxu0 %v3707
    %3709 = vmatprep.subr.mxu0 0.0
    %v3710 = vand.u32 %v3305, 4294901760
    %3711 = vmatpush1.msra.mxu0 %v3710
    %3712 = vmatprep.subr.mxu0 0.0
    %3713 = vmatpush1.msra.mxu0 0.0
    %3714 = vmatprep.subr.mxu0 0.0
    %3715 = vmatpush1.msra.mxu0 0.0
    %3716 = vmatprep.subr.mxu0 0.0
    %3717 = vmatpush1.msra.mxu0 0.0
    %3718 = vmatprep.subr.mxu0 0.0
    %3719 = vmatpush1.msra.mxu0 0.0
    %3720 = vmatprep.subr.mxu0 0.0
    %3721 = vmatpush1.msra.mxu0 0.0
    %3722 = vmatprep.subr.mxu0 0.0
    %3723 = vmatpush1.msra.mxu0 0.0
    %3724 = vmatprep.subr.mxu0 0.0
    %3725 = vmatpush1.msra.mxu0 0.0
    %3726 = vmatprep.subr.mxu0 0.0
    %3727 = vmatpush1.msra.mxu0 0.0
    %3728 = vmatprep.subr.mxu0 0.0
    %3729 = vmatpush1.msra.mxu0 0.0
    %3730 = vmatprep.subr.mxu0 0.0
    %3731 = vmatpush1.msra.mxu0 0.0
    %3732 = vmatprep.subr.mxu0 0.0
    %3733 = vmatpush1.msra.mxu0 0.0
    %3734 = vmatprep.subr.mxu0 0.0
    %3735 = vmatpush1.msra.mxu0 0.0
    %3736 = vmatprep.subr.mxu0 0.0
    %3737 = vmatpush1.msra.mxu0 0.0
    %3738 = vmatprep.subr.mxu0 0.0
    %3739 = vmatpush1.msra.mxu0 0.0
    %3740 = vmatprep.subr.mxu0 0.0
    %3741 = vmatpush1.msra.mxu0 0.0
    %3742 = vmatprep.subr.mxu0 0.0
    %3743 = vmatpush1.msra.mxu0 0.0
    %3744 = vmatprep.mubr.f32.mxu0 0.0
    %v3745 = vand.u32 %v3316, 4294901760
    %v3746 = vsub.f32 %v3316, %v3745
    %v3747 = vand.u32 %v3746, 4294901760
    %3748 = vmatmul.mubr.f32.gmra.mrb[0].mxu0 %v3747
    %v3749 = vpop.f32.mrb[0].mxu0
    %v3750 = vadd.f32 %v3661, %v3749
    %v3751 = vpop.f32.mrb[0].mxu0
    %3752 = vdwg.mxu0
    %3753 = vmatprep.subr.mxu0 0.0
    %v3754 = vand.u32 %v3290, 4294901760
    %v3755 = vsub.f32 %v3290, %v3754
    %v3756 = vand.u32 %v3755, 4294901760
    %3757 = vmatpush1.msra.mxu0 %v3756
    %3758 = vmatprep.subr.mxu0 0.0
    %v3759 = vand.u32 %v3291, 4294901760
    %v3760 = vsub.f32 %v3291, %v3759
    %v3761 = vand.u32 %v3760, 4294901760
    %3762 = vmatpush1.msra.mxu0 %v3761
    %3763 = vmatprep.subr.mxu0 0.0
    %v3764 = vand.u32 %v3292, 4294901760
    %v3765 = vsub.f32 %v3292, %v3764
    %v3766 = vand.u32 %v3765, 4294901760
    %3767 = vmatpush1.msra.mxu0 %v3766
    %3768 = vmatprep.subr.mxu0 0.0
    %v3769 = vand.u32 %v3293, 4294901760
    %v3770 = vsub.f32 %v3293, %v3769
    %v3771 = vand.u32 %v3770, 4294901760
    %3772 = vmatpush1.msra.mxu0 %v3771
    %3773 = vmatprep.subr.mxu0 0.0
    %v3774 = vand.u32 %v3294, 4294901760
    %v3775 = vsub.f32 %v3294, %v3774
    %v3776 = vand.u32 %v3775, 4294901760
    %3777 = vmatpush1.msra.mxu0 %v3776
    %3778 = vmatprep.subr.mxu0 0.0
    %v3779 = vand.u32 %v3295, 4294901760
    %v3780 = vsub.f32 %v3295, %v3779
    %v3781 = vand.u32 %v3780, 4294901760
    %3782 = vmatpush1.msra.mxu0 %v3781
    %3783 = vmatprep.subr.mxu0 0.0
    %v3784 = vand.u32 %v3296, 4294901760
    %v3785 = vsub.f32 %v3296, %v3784
    %v3786 = vand.u32 %v3785, 4294901760
    %3787 = vmatpush1.msra.mxu0 %v3786
    %3788 = vmatprep.subr.mxu0 0.0
    %v3789 = vand.u32 %v3297, 4294901760
    %v3790 = vsub.f32 %v3297, %v3789
    %v3791 = vand.u32 %v3790, 4294901760
    %3792 = vmatpush1.msra.mxu0 %v3791
    %3793 = vmatprep.subr.mxu0 0.0
    %v3794 = vand.u32 %v3298, 4294901760
    %v3795 = vsub.f32 %v3298, %v3794
    %v3796 = vand.u32 %v3795, 4294901760
    %3797 = vmatpush1.msra.mxu0 %v3796
    %3798 = vmatprep.subr.mxu0 0.0
    %v3799 = vand.u32 %v3299, 4294901760
    %v3800 = vsub.f32 %v3299, %v3799
    %v3801 = vand.u32 %v3800, 4294901760
    %3802 = vmatpush1.msra.mxu0 %v3801
    %3803 = vmatprep.subr.mxu0 0.0
    %v3804 = vand.u32 %v3300, 4294901760
    %v3805 = vsub.f32 %v3300, %v3804
    %v3806 = vand.u32 %v3805, 4294901760
    %3807 = vmatpush1.msra.mxu0 %v3806
    %3808 = vmatprep.subr.mxu0 0.0
    %v3809 = vand.u32 %v3301, 4294901760
    %v3810 = vsub.f32 %v3301, %v3809
    %v3811 = vand.u32 %v3810, 4294901760
    %3812 = vmatpush1.msra.mxu0 %v3811
    %3813 = vmatprep.subr.mxu0 0.0
    %v3814 = vand.u32 %v3302, 4294901760
    %v3815 = vsub.f32 %v3302, %v3814
    %v3816 = vand.u32 %v3815, 4294901760
    %3817 = vmatpush1.msra.mxu0 %v3816
    %3818 = vmatprep.subr.mxu0 0.0
    %v3819 = vand.u32 %v3303, 4294901760
    %v3820 = vsub.f32 %v3303, %v3819
    %v3821 = vand.u32 %v3820, 4294901760
    %3822 = vmatpush1.msra.mxu0 %v3821
    %3823 = vmatprep.subr.mxu0 0.0
    %v3824 = vand.u32 %v3304, 4294901760
    %v3825 = vsub.f32 %v3304, %v3824
    %v3826 = vand.u32 %v3825, 4294901760
    %3827 = vmatpush1.msra.mxu0 %v3826
    %3828 = vmatprep.subr.mxu0 0.0
    %v3829 = vand.u32 %v3305, 4294901760
    %v3830 = vsub.f32 %v3305, %v3829
    %v3831 = vand.u32 %v3830, 4294901760
    %3832 = vmatpush1.msra.mxu0 %v3831
    %3833 = vmatprep.subr.mxu0 0.0
    %3834 = vmatpush1.msra.mxu0 0.0
    %3835 = vmatprep.subr.mxu0 0.0
    %3836 = vmatpush1.msra.mxu0 0.0
    %3837 = vmatprep.subr.mxu0 0.0
    %3838 = vmatpush1.msra.mxu0 0.0
    %3839 = vmatprep.subr.mxu0 0.0
    %3840 = vmatpush1.msra.mxu0 0.0
    %3841 = vmatprep.subr.mxu0 0.0
    %3842 = vmatpush1.msra.mxu0 0.0
    %3843 = vmatprep.subr.mxu0 0.0
    %3844 = vmatpush1.msra.mxu0 0.0
    %3845 = vmatprep.subr.mxu0 0.0
    %3846 = vmatpush1.msra.mxu0 0.0
    %3847 = vmatprep.subr.mxu0 0.0
    %3848 = vmatpush1.msra.mxu0 0.0
    %3849 = vmatprep.subr.mxu0 0.0
    %3850 = vmatpush1.msra.mxu0 0.0
    %3851 = vmatprep.subr.mxu0 0.0
    %3852 = vmatpush1.msra.mxu0 0.0
    %3853 = vmatprep.subr.mxu0 0.0
    %3854 = vmatpush1.msra.mxu0 0.0
    %3855 = vmatprep.subr.mxu0 0.0
    %3856 = vmatpush1.msra.mxu0 0.0
    %3857 = vmatprep.subr.mxu0 0.0
    %3858 = vmatpush1.msra.mxu0 0.0
    %3859 = vmatprep.subr.mxu0 0.0
    %3860 = vmatpush1.msra.mxu0 0.0
    %3861 = vmatprep.subr.mxu0 0.0
    %3862 = vmatpush1.msra.mxu0 0.0
    %3863 = vmatprep.subr.mxu0 0.0
    %3864 = vmatpush1.msra.mxu0 0.0
    %3865 = vmatprep.mubr.f32.mxu0 0.0
    %v3866 = vand.u32 %v3316, 4294901760
    %3867 = vmatmul.mubr.f32.gmra.mrb[0].mxu0 %v3866
    %v3868 = vpop.f32.mrb[0].mxu0
    %v3869 = vadd.f32 %v3750, %v3868
    %v3870 = vpop.f32.mrb[0].mxu0
    %3871 = vdwg.mxu0
    %3872 = vmatprep.subr.mxu0 0.0
    %v3873 = vand.u32 %v3290, 4294901760
    %3874 = vmatpush1.msra.mxu0 %v3873
    %3875 = vmatprep.subr.mxu0 0.0
    %v3876 = vand.u32 %v3291, 4294901760
    %3877 = vmatpush1.msra.mxu0 %v3876
    %3878 = vmatprep.subr.mxu0 0.0
    %v3879 = vand.u32 %v3292, 4294901760
    %3880 = vmatpush1.msra.mxu0 %v3879
    %3881 = vmatprep.subr.mxu0 0.0
    %v3882 = vand.u32 %v3293, 4294901760
    %3883 = vmatpush1.msra.mxu0 %v3882
    %3884 = vmatprep.subr.mxu0 0.0
    %v3885 = vand.u32 %v3294, 4294901760
    %3886 = vmatpush1.msra.mxu0 %v3885
    %3887 = vmatprep.subr.mxu0 0.0
    %v3888 = vand.u32 %v3295, 4294901760
    %3889 = vmatpush1.msra.mxu0 %v3888
    %3890 = vmatprep.subr.mxu0 0.0
    %v3891 = vand.u32 %v3296, 4294901760
    %3892 = vmatpush1.msra.mxu0 %v3891
    %3893 = vmatprep.subr.mxu0 0.0
    %v3894 = vand.u32 %v3297, 4294901760
    %3895 = vmatpush1.msra.mxu0 %v3894
    %3896 = vmatprep.subr.mxu0 0.0
    %v3897 = vand.u32 %v3298, 4294901760
    %3898 = vmatpush1.msra.mxu0 %v3897
    %3899 = vmatprep.subr.mxu0 0.0
    %v3900 = vand.u32 %v3299, 4294901760
    %3901 = vmatpush1.msra.mxu0 %v3900
    %3902 = vmatprep.subr.mxu0 0.0
    %v3903 = vand.u32 %v3300, 4294901760
    %3904 = vmatpush1.msra.mxu0 %v3903
    %3905 = vmatprep.subr.mxu0 0.0
    %v3906 = vand.u32 %v3301, 4294901760
    %3907 = vmatpush1.msra.mxu0 %v3906
    %3908 = vmatprep.subr.mxu0 0.0
    %v3909 = vand.u32 %v3302, 4294901760
    %3910 = vmatpush1.msra.mxu0 %v3909
    %3911 = vmatprep.subr.mxu0 0.0
    %v3912 = vand.u32 %v3303, 4294901760
    %3913 = vmatpush1.msra.mxu0 %v3912
    %3914 = vmatprep.subr.mxu0 0.0
    %v3915 = vand.u32 %v3304, 4294901760
    %3916 = vmatpush1.msra.mxu0 %v3915
    %3917 = vmatprep.subr.mxu0 0.0
    %v3918 = vand.u32 %v3305, 4294901760
    %3919 = vmatpush1.msra.mxu0 %v3918
    %3920 = vmatprep.subr.mxu0 0.0
    %3921 = vmatpush1.msra.mxu0 0.0
    %3922 = vmatprep.subr.mxu0 0.0
    %3923 = vmatpush1.msra.mxu0 0.0
    %3924 = vmatprep.subr.mxu0 0.0
    %3925 = vmatpush1.msra.mxu0 0.0
    %3926 = vmatprep.subr.mxu0 0.0
    %3927 = vmatpush1.msra.mxu0 0.0
    %3928 = vmatprep.subr.mxu0 0.0
    %3929 = vmatpush1.msra.mxu0 0.0
    %3930 = vmatprep.subr.mxu0 0.0
    %3931 = vmatpush1.msra.mxu0 0.0
    %3932 = vmatprep.subr.mxu0 0.0
    %3933 = vmatpush1.msra.mxu0 0.0
    %3934 = vmatprep.subr.mxu0 0.0
    %3935 = vmatpush1.msra.mxu0 0.0
    %3936 = vmatprep.subr.mxu0 0.0
    %3937 = vmatpush1.msra.mxu0 0.0
    %3938 = vmatprep.subr.mxu0 0.0
    %3939 = vmatpush1.msra.mxu0 0.0
    %3940 = vmatprep.subr.mxu0 0.0
    %3941 = vmatpush1.msra.mxu0 0.0
    %3942 = vmatprep.subr.mxu0 0.0
    %3943 = vmatpush1.msra.mxu0 0.0
    %3944 = vmatprep.subr.mxu0 0.0
    %3945 = vmatpush1.msra.mxu0 0.0
    %3946 = vmatprep.subr.mxu0 0.0
    %3947 = vmatpush1.msra.mxu0 0.0
    %3948 = vmatprep.subr.mxu0 0.0
    %3949 = vmatpush1.msra.mxu0 0.0
    %3950 = vmatprep.subr.mxu0 0.0
    %3951 = vmatpush1.msra.mxu0 0.0
    %3952 = vmatprep.mubr.f32.mxu0 0.0
    %v3953 = vand.u32 %v3316, 4294901760
    %3954 = vmatmul.mubr.f32.gmra.mrb[0].mxu0 %v3953
    %v3955 = vpop.f32.mrb[0].mxu0
    %v3956 = vadd.f32 %v3869, %v3955
    %v3957 = vpop.f32.mrb[0].mxu0
    %3958 = vdwg.mxu0
    %3959 = vst [vmem:[#allocation11] sm:$0x3] %v3956
    // Predicated region
    $region54: #{tpu_custom_call.1} parent=1 // pred_check
      _
    $region55: #{tpu_custom_call.1} parent=1 // pred_check_branch
      %3961 = sbr.rel (0) target = $region57
    $region56: #{tpu_custom_call.1} parent=1 // pred_region
      %s3963 = ssub.s32 32, 32
      %3964 = vsyncadd [#allocation4], %s3963
      %s3966 = sshll.u32 [#allocation11], 4
      %s3967 = int_to_ptr.vmem [resolvable:$true] %s3966
      %3969 = dma.vmem_to_hbm [thread:$0]  %s3967, 32, %s8, [#allocation4]
    $region57: #{tpu_custom_call.1} parent=1 // pred_fallthru
      _
    // Predicated region
    $region58: #{tpu_custom_call.1} parent=1 // pred_check
      _
    $region59: #{tpu_custom_call.1} parent=1 // pred_check_branch
      %3971 = sbr.rel (0) target = $region61
    $region60: #{tpu_custom_call.1} parent=1 // pred_region
      %3972 = dma.done [#allocation4], 32
    $region61: #{tpu_custom_call.1} parent=1 // pred_fallthru
      _
    %3973 = vsyncpa [#allocation3], 1
    %3974 = vsyncpa [#allocation6], 1
    %3975 = vsyncpa [#allocation9], 1
    %3976 = vsyncpa [#allocation4], 1

</llo_original>
